<compile_context>
chip_gen: v6e
topology: v6e:2x2x1
jax: 0.10.0
libtpu: 0.0.40
codegen_flags: <defaults>
</compile_context>

<pallas_src>
import jax
import jax.numpy as jnp
from jax.experimental import pallas as pl
from jax.experimental.pallas import tpu as pltpu

_HP = jax.lax.Precision.HIGHEST


def _round_up(v, m):
    return ((v + m - 1) // m) * m


def _fused_node_model_kernel(ea_ref, row_ref, col_ref,
                             xw1t_ref, w1et_ref, w2t_ref,
                             xw3b_ref, w3a_ref, w4_ref, b4_ref,
                             out_ref, acc_ref):
    """Per edge-tile: in-kernel gather + MLP1 (feature-major) + one-hot scatter of
    [sum | count]; last tile also runs scatter_mean finalize + node_mlp_2."""

    @pl.when(pl.program_id(0) == 0)
    def _():
        acc_ref[...] = jnp.zeros_like(acc_ref)
        # out block is revisited every step but only written in the epilogue; zero-init
        # here so the (single, deferred) writeback can never carry uninitialized data.
        out_ref[...] = jnp.zeros_like(out_ref)

    n = acc_ref.shape[0]
    te = row_ref.shape[1]

    # Shared sublane iota of node ids; both one-hots are [N, TE] (edge axis lane-dense).
    node_ids = jax.lax.broadcasted_iota(jnp.int32, (n, te), 0)
    rowoh = (row_ref[...] == node_ids).astype(jnp.float32)      # gather one-hot  [N, TE]
    coloh = (col_ref[...] == node_ids).astype(jnp.float32)      # scatter one-hot [N, TE]

    # node_mlp_1 in feature-major layout [feat, TE]; biases folded (ones row of xw1t),
    # only natural and rhs-transposed MXU orientations.
    #   h1[i, e] = relu( (x[row[e]] @ W1x + b1 + edge_attr[e] @ W1e)[i] ), h1[H1, e] = 1
    h1 = jnp.maximum(
        jnp.dot(xw1t_ref[...], rowoh, preferred_element_type=jnp.float32)
        + jax.lax.dot_general(w1et_ref[...], ea_ref[...],
                              dimension_numbers=(((1,), (1,)), ((), ())),
                              preferred_element_type=jnp.float32),
        0.0)                                                     # [H1+1, TE]
    #   h2[:H2, e] = relu(relu(h1) @ W2 + b2)^T ;  h2[H2, e] = 1 (per-edge count)
    h2 = jnp.maximum(
        jnp.dot(w2t_ref[...], h1, preferred_element_type=jnp.float32),
        0.0)                                                     # [H2+1, TE]

    # scatter-add on the MXU (A @ B^T): acc[n, :] += sum_e coloh[n, e] * h2[:, e]
    acc_ref[...] += jax.lax.dot_general(
        coloh, h2, dimension_numbers=(((1,), (1,)), ((), ())),
        preferred_element_type=jnp.float32)                      # [N, H2+1] = [sum | cnt]

    # Epilogue (fused node pass): scatter_mean + node_mlp_2, only on the last edge tile.
    @pl.when(pl.program_id(0) == pl.num_programs(0) - 1)
    def _():
        h2w = w3a_ref.shape[0]                                   # = H2
        acc = acc_ref[...]
        mean = acc[:, :h2w] / jnp.maximum(acc[:, h2w:h2w + 1], 1.0)   # scatter_mean
        # concat([x, mean]) @ W3 + b3 == (x@W3x + b3) + mean@W3a ; x-part folded once.
        h3 = jnp.maximum(
            xw3b_ref[...]
            + jnp.dot(mean, w3a_ref[...], preferred_element_type=jnp.float32),
            0.0)
        out_ref[...] = (jnp.dot(h3, w4_ref[...], preferred_element_type=jnp.float32)
                        + b4_ref[...])


def node_model_forward(x, edge_index, edge_attr, params, *, edge_tile=2048):
    N, Cx = x.shape
    E, Ce = edge_attr.shape
    w1x, w1e, b1, w2, b2, w3x, w3a, b3, w4, b4 = params
    H1, H2, H3, Co = w1x.shape[1], w2.shape[1], w3x.shape[1], w4.shape[1]
    f32 = jnp.float32

    # ---- once-per-call constant folding (tiny [N,*]/[H,*] XLA ops, not per-edge) ----
    # MLP1 feature-major with biases folded:  h1_t = relu(xw1t @ rowoh + w1et @ ea^T)
    xw1 = jnp.concatenate(
        [jnp.dot(x.astype(f32), w1x, precision=_HP) + b1,        # x@W1x + b1   [N, H1]
         jnp.ones((N, 1), f32)], axis=1)                          # ones col -> ones row
    xw1t = xw1.T                                                  # [H1+1, N]
    w1et = jnp.concatenate([w1e, jnp.zeros((Ce, 1), f32)], axis=1).T   # [H1+1, Ce]
    # W2 augmented: bias row (via the ones row of h1) + count column (exact 1.0 in f32).
    w2aug = jnp.zeros((H1 + 1, H2 + 1), f32)
    w2aug = w2aug.at[:H1, :H2].set(w2)
    w2aug = w2aug.at[H1, :H2].set(b2[0])
    w2aug = w2aug.at[H1, H2].set(1.0)
    w2t = w2aug.T                                                 # [H2+1, H1+1]
    # node_mlp_2: fold the x-part once (epilogue runs a single time).
    xw3b = jnp.dot(x.astype(f32), w3x, precision=_HP) + b3        # [N, H3]

    # ---- edge stream: pad to a multiple of the (128-aligned) tile; mask via id = -1 ----
    te = _round_up(min(edge_tile, _round_up(max(E, 1), 128)), 128)
    n_tiles = max(1, pl.cdiv(E, te))
    e_pad = n_tiles * te
    pad = e_pad - E
    ea = edge_attr.astype(f32)
    row = edge_index[0].astype(jnp.int32)
    col = edge_index[1].astype(jnp.int32)
    if pad:
        ea = jnp.pad(ea, ((0, pad), (0, 0)))
        row = jnp.pad(row, (0, pad), constant_values=-1)
        col = jnp.pad(col, (0, pad), constant_values=-1)
    row = row.reshape(1, e_pad)                                   # lane-major indices
    col = col.reshape(1, e_pad)

    stream_ea = pl.BlockSpec((te, Ce), lambda e: (e, 0))
    stream_idx = pl.BlockSpec((1, te), lambda e: (0, e))

    def resident(shape):
        return pl.BlockSpec(shape, lambda e: (0, 0))

    out = pl.pallas_call(
        _fused_node_model_kernel,
        out_shape=jax.ShapeDtypeStruct((N, Co), f32),
        grid_spec=pltpu.PrefetchScalarGridSpec(
            num_scalar_prefetch=0,
            grid=(n_tiles,),
            in_specs=[
                stream_ea,                    # edge_attr tile    [TE, Ce]  (streamed)
                stream_idx,                   # row ids           [1, TE]   (streamed)
                stream_idx,                   # col ids           [1, TE]   (streamed)
                resident((H1 + 1, N)),        # (x@W1x + b1 | 1)^T           (resident)
                resident((H1 + 1, Ce)),       # (W1e | 0)^T
                resident((H2 + 1, H1 + 1)),   # W2 augmented (bias row + count col)^T
                resident((N, H3)),            # x@W3x + b3        (epilogue)
                resident((H2, H3)),           # W3a
                resident((H3, Co)),           # W4
                resident((1, Co)),            # b4
            ],
            # Same output block every step; written only on the last tile (plus a zero
            # init on step 0) -> single deferred writeback.
            out_specs=pl.BlockSpec((N, Co), lambda e: (0, 0)),
            scratch_shapes=[pltpu.VMEM((N, H2 + 1), f32)],        # [sum | count]
        ),
        compiler_params=pltpu.CompilerParams(
            dimension_semantics=("arbitrary",),     # accumulate across edge tiles
            vmem_limit_bytes=32 * 1024 * 1024,      # headroom for 2048-4096 edge tiles
        ),
    )(ea, row, col, xw1t, w1et, w2t, xw3b, w3a, w4, b4)
    return out


def node_model_reference(x, edge_index, edge_attr, params):
    """Pure-JAX reference mirroring the PyTorch forward (use_groupnorm=False)."""
    w1x, w1e, b1, w2, b2, w3x, w3a, b3, w4, b4 = params
    N = x.shape[0]
    row, col = edge_index[0], edge_index[1]
    h = jnp.concatenate([x[row], edge_attr], axis=1)
    h = jnp.maximum(jnp.dot(h, jnp.concatenate([w1x, w1e], axis=0), precision=_HP) + b1, 0.0)
    h = jnp.maximum(jnp.dot(h, w2, precision=_HP) + b2, 0.0)
    seg_sum = jnp.zeros((N, h.shape[1]), jnp.float32).at[col].add(h)
    cnt = jnp.zeros((N,), jnp.float32).at[col].add(1.0)
    mean = seg_sum / jnp.maximum(cnt, 1.0)[:, None]               # scatter_mean
    g = jnp.concatenate([x, mean], axis=1)
    g = jnp.maximum(jnp.dot(g, jnp.concatenate([w3x, w3a], axis=0), precision=_HP) + b3, 0.0)
    return jnp.dot(g, w4, precision=_HP) + b4


def make_params(key, Cx, Ce, H1, H2, H3, Co):
    ks = jax.random.split(key, 10)
    s = 0.1
    w1x = s * jax.random.normal(ks[0], (Cx, H1), jnp.float32)
    w1e = s * jax.random.normal(ks[1], (Ce, H1), jnp.float32)
    b1 = s * jax.random.normal(ks[2], (1, H1), jnp.float32)
    w2 = s * jax.random.normal(ks[3], (H1, H2), jnp.float32)
    b2 = s * jax.random.normal(ks[4], (1, H2), jnp.float32)
    w3x = s * jax.random.normal(ks[5], (Cx, H3), jnp.float32)
    w3a = s * jax.random.normal(ks[6], (H2, H3), jnp.float32)
    b3 = s * jax.random.normal(ks[7], (1, H3), jnp.float32)
    w4 = s * jax.random.normal(ks[8], (H3, Co), jnp.float32)
    b4 = s * jax.random.normal(ks[9], (1, Co), jnp.float32)
    return (w1x, w1e, b1, w2, b2, w3x, w3a, b3, w4, b4)


if __name__ == "__main__":
    # Small graph; E is ragged w.r.t. the edge tile on purpose (exercises padding) and
    # big enough for >1 tile at the default edge_tile (exercises accumulation).
    N, E = 64, 2500
    Cx, Ce = 8, 8          # node_input_channels, edge_output_channels
    H1, H2 = 32, 16        # node_model_mlp1_hidden
    H3 = 32                # node_model_mlp2_hidden[0]
    Co = 8                 # node_output_channels

    key = jax.random.PRNGKey(0)
    kx, ke, kr, kc, kp = jax.random.split(key, 5)
    x = jax.random.normal(kx, (N, Cx), jnp.float32)
    edge_attr = jax.random.normal(ke, (E, Ce), jnp.float32)
    row = jax.random.randint(kr, (E,), 0, N, jnp.int32)
    col = jax.random.randint(kc, (E,), 0, N, jnp.int32)
    edge_index = jnp.stack([row, col], axis=0)                   # [2, E]
    params = make_params(kp, Cx, Ce, H1, H2, H3, Co)

    ref = node_model_reference(x, edge_index, edge_attr, params)

    # default edge_tile (2048) -> 2 tiles + 1596 padded edges
    fwd = jax.jit(lambda xx, ei, ea: node_model_forward(xx, ei, ea, params))
    out = jax.block_until_ready(fwd(x, edge_index, edge_attr))
    assert out.shape == (N, Co)
    assert jnp.allclose(out, ref, atol=1e-4, rtol=1e-4), "mismatch vs reference (default tile)"

    # small edge_tile -> many tiles, exercises multi-tile accumulation path
    out_small = jax.block_until_ready(
        node_model_forward(x, edge_index, edge_attr, params, edge_tile=256))
    assert jnp.allclose(out_small, ref, atol=1e-4, rtol=1e-4), "mismatch vs reference (small tile)"

    print("KERNEL_OK")
</pallas_src>

<mosaic_0001>
module attributes {stable_mosaic.version = 11 : i64} {
  func.func @_fused_node_model_kernel(%arg0: i32, %arg1: memref<2048x8xf32, #tpu.memory_space<vmem>>, %arg2: memref<1x2048xi32, #tpu.memory_space<vmem>>, %arg3: memref<1x2048xi32, #tpu.memory_space<vmem>>, %arg4: memref<33x64xf32, #tpu.memory_space<vmem>>, %arg5: memref<33x8xf32, #tpu.memory_space<vmem>>, %arg6: memref<17x33xf32, #tpu.memory_space<vmem>>, %arg7: memref<64x32xf32, #tpu.memory_space<vmem>>, %arg8: memref<16x32xf32, #tpu.memory_space<vmem>>, %arg9: memref<32x8xf32, #tpu.memory_space<vmem>>, %arg10: memref<1x8xf32, #tpu.memory_space<vmem>>, %arg11: memref<64x8xf32, #tpu.memory_space<vmem>>, %arg12: memref<64x17xf32, #tpu.memory_space<vmem>>) attributes {dimension_semantics = [#tpu.dimension_semantics<arbitrary>], iteration_bounds = array<i64: 2>, scalar_prefetch = 0 : i64, scratch_operands = 1 : i64, tpu.core_type = #tpu.core_type<tc>, window_params = [{transform_indices = @transform_0, window_bounds = array<i64: 2048, 8>}, {transform_indices = @transform_1, window_bounds = array<i64: 1, 2048>}, {transform_indices = @transform_2, window_bounds = array<i64: 1, 2048>}, {pipeline_mode = #tpu.pipeline_mode<synchronous>, transform_indices = @transform_3, window_bounds = array<i64: 33, 64>}, {pipeline_mode = #tpu.pipeline_mode<synchronous>, transform_indices = @transform_4, window_bounds = array<i64: 33, 8>}, {pipeline_mode = #tpu.pipeline_mode<synchronous>, transform_indices = @transform_5, window_bounds = array<i64: 17, 33>}, {pipeline_mode = #tpu.pipeline_mode<synchronous>, transform_indices = @transform_6, window_bounds = array<i64: 64, 32>}, {pipeline_mode = #tpu.pipeline_mode<synchronous>, transform_indices = @transform_7, window_bounds = array<i64: 16, 32>}, {pipeline_mode = #tpu.pipeline_mode<synchronous>, transform_indices = @transform_8, window_bounds = array<i64: 32, 8>}, {pipeline_mode = #tpu.pipeline_mode<synchronous>, transform_indices = @transform_9, window_bounds = array<i64: 1, 8>}, {pipeline_mode = #tpu.pipeline_mode<synchronous>, transform_indices = @transform_10, window_bounds = array<i64: 64, 8>}]} {
    %c0_i32 = arith.constant 0 : i32
    %0 = arith.cmpi eq, %arg0, %c0_i32 : i32
    %1 = arith.extui %0 : i1 to i32
    %c0_i32_0 = arith.constant 0 : i32
    %2 = arith.cmpi ne, %1, %c0_i32_0 : i32
    scf.if %2 {
      %cst_22 = arith.constant 0.000000e+00 : f32
      %33 = vector.broadcast %cst_22 : f32 to vector<64x17xf32>
      %c0_23 = arith.constant 0 : index
      %c0_24 = arith.constant 0 : index
      %34 = vector.load %arg12[%c0_23, %c0_24] : memref<64x17xf32, #tpu.memory_space<vmem>>, vector<64x17xf32>
      tpu.vector_store %arg12[%c0_23, %c0_24], %33 {strides = array<i32>} : memref<64x17xf32, #tpu.memory_space<vmem>>, vector<64x17xf32>,
      %cst_25 = arith.constant 0.000000e+00 : f32
      %35 = vector.broadcast %cst_25 : f32 to vector<64x8xf32>
      %c0_26 = arith.constant 0 : index
      %c0_27 = arith.constant 0 : index
      %36 = vector.load %arg11[%c0_26, %c0_27] : memref<64x8xf32, #tpu.memory_space<vmem>>, vector<64x8xf32>
      tpu.vector_store %arg11[%c0_26, %c0_27], %35 {strides = array<i32>} : memref<64x8xf32, #tpu.memory_space<vmem>>, vector<64x8xf32>,
    } else {
    }
    %3 = tpu.iota {dimensions = array<i32: 0>} : vector<64x2048xi32>
    %c0 = arith.constant 0 : index
    %c0_1 = arith.constant 0 : index
    %4 = vector.load %arg2[%c0, %c0_1] : memref<1x2048xi32, #tpu.memory_space<vmem>>, vector<1x2048xi32>
    %5 = vector.broadcast %4 : vector<1x2048xi32> to vector<64x2048xi32>
    %6 = arith.cmpi eq, %5, %3 : vector<64x2048xi32>
    %7 = arith.extui %6 : vector<64x2048xi1> to vector<64x2048xi32>
    %8 = arith.sitofp %7 : vector<64x2048xi32> to vector<64x2048xf32>
    %c0_2 = arith.constant 0 : index
    %c0_3 = arith.constant 0 : index
    %9 = vector.load %arg3[%c0_2, %c0_3] : memref<1x2048xi32, #tpu.memory_space<vmem>>, vector<1x2048xi32>
    %10 = vector.broadcast %9 : vector<1x2048xi32> to vector<64x2048xi32>
    %11 = arith.cmpi eq, %10, %3 : vector<64x2048xi32>
    %12 = arith.extui %11 : vector<64x2048xi1> to vector<64x2048xi32>
    %13 = arith.sitofp %12 : vector<64x2048xi32> to vector<64x2048xf32>
    %c0_4 = arith.constant 0 : index
    %c0_5 = arith.constant 0 : index
    %14 = vector.load %arg4[%c0_4, %c0_5] : memref<33x64xf32, #tpu.memory_space<vmem>>, vector<33x64xf32>
    %cst = arith.constant dense<0.000000e+00> : vector<33x2048xf32>
    %15 = tpu.matmul %14, %8, %cst {dimension_numbers = #tpu.dot_dimension_numbers<[1], [0], [0], [1], [0, 0, 1, 1], [], []>} : vector<33x64xf32>, vector<64x2048xf32>, vector<33x2048xf32> -> vector<33x2048xf32>
    %c0_6 = arith.constant 0 : index
    %c0_7 = arith.constant 0 : index
    %16 = vector.load %arg5[%c0_6, %c0_7] : memref<33x8xf32, #tpu.memory_space<vmem>>, vector<33x8xf32>
    %c0_8 = arith.constant 0 : index
    %c0_9 = arith.constant 0 : index
    %17 = vector.load %arg1[%c0_8, %c0_9] : memref<2048x8xf32, #tpu.memory_space<vmem>>, vector<2048x8xf32>
    %cst_10 = arith.constant dense<0.000000e+00> : vector<33x2048xf32>
    %18 = tpu.matmul %16, %17, %cst_10 {dimension_numbers = #tpu.dot_dimension_numbers<[1], [1], [0], [0], [0, 0, 1, 0], [], []>} : vector<33x8xf32>, vector<2048x8xf32>, vector<33x2048xf32> -> vector<33x2048xf32>
    %19 = arith.addf %15, %18 : vector<33x2048xf32>
    %cst_11 = arith.constant 0.000000e+00 : f32
    %20 = vector.broadcast %cst_11 : f32 to vector<33x2048xf32>
    %21 = arith.maximumf %19, %20 : vector<33x2048xf32>
    %c0_12 = arith.constant 0 : index
    %c0_13 = arith.constant 0 : index
    %22 = vector.load %arg6[%c0_12, %c0_13] : memref<17x33xf32, #tpu.memory_space<vmem>>, vector<17x33xf32>
    %cst_14 = arith.constant dense<0.000000e+00> : vector<17x2048xf32>
    %23 = tpu.matmul %22, %21, %cst_14 {dimension_numbers = #tpu.dot_dimension_numbers<[1], [0], [0], [1], [0, 0, 1, 1], [], []>} : vector<17x33xf32>, vector<33x2048xf32>, vector<17x2048xf32> -> vector<17x2048xf32>
    %cst_15 = arith.constant 0.000000e+00 : f32
    %24 = vector.broadcast %cst_15 : f32 to vector<17x2048xf32>
    %25 = arith.maximumf %23, %24 : vector<17x2048xf32>
    %c0_16 = arith.constant 0 : index
    %c0_17 = arith.constant 0 : index
    %26 = vector.load %arg12[%c0_16, %c0_17] : memref<64x17xf32, #tpu.memory_space<vmem>>, vector<64x17xf32>
    %cst_18 = arith.constant dense<0.000000e+00> : vector<64x17xf32>
    %27 = tpu.matmul %13, %25, %cst_18 {dimension_numbers = #tpu.dot_dimension_numbers<[1], [1], [0], [0], [0, 0, 1, 0], [], []>} : vector<64x2048xf32>, vector<17x2048xf32>, vector<64x17xf32> -> vector<64x17xf32>
    %28 = arith.addf %26, %27 : vector<64x17xf32>
    %c0_19 = arith.constant 0 : index
    %c0_20 = arith.constant 0 : index
    %29 = vector.load %arg12[%c0_19, %c0_20] : memref<64x17xf32, #tpu.memory_space<vmem>>, vector<64x17xf32>
    tpu.vector_store %arg12[%c0_19, %c0_20], %28 {strides = array<i32>} : memref<64x17xf32, #tpu.memory_space<vmem>>, vector<64x17xf32>,
    %c1_i32 = arith.constant 1 : i32
    %30 = arith.cmpi eq, %arg0, %c1_i32 : i32
    %31 = arith.extui %30 : i1 to i32
    %c0_i32_21 = arith.constant 0 : i32
    %32 = arith.cmpi ne, %31, %c0_i32_21 : i32
    scf.if %32 {
      %c0_22 = arith.constant 0 : index
      %c0_23 = arith.constant 0 : index
      %33 = vector.load %arg12[%c0_22, %c0_23] : memref<64x17xf32, #tpu.memory_space<vmem>>, vector<64x17xf32>
      %34 = vector.extract_strided_slice %33 {offsets = [0, 0], sizes = [64, 16], strides = [1, 1]} : vector<64x17xf32> to vector<64x16xf32>
      %35 = vector.extract_strided_slice %33 {offsets = [0, 16], sizes = [64, 1], strides = [1, 1]} : vector<64x17xf32> to vector<64x1xf32>
      %cst_24 = arith.constant 1.000000e+00 : f32
      %36 = vector.broadcast %cst_24 : f32 to vector<64x1xf32>
      %37 = arith.maximumf %35, %36 : vector<64x1xf32>
      %38 = vector.broadcast %37 : vector<64x1xf32> to vector<64x16xf32>
      %39 = arith.divf %34, %38 : vector<64x16xf32>
      %c0_25 = arith.constant 0 : index
      %c0_26 = arith.constant 0 : index
      %40 = vector.load %arg7[%c0_25, %c0_26] : memref<64x32xf32, #tpu.memory_space<vmem>>, vector<64x32xf32>
      %c0_27 = arith.constant 0 : index
      %c0_28 = arith.constant 0 : index
      %41 = vector.load %arg8[%c0_27, %c0_28] : memref<16x32xf32, #tpu.memory_space<vmem>>, vector<16x32xf32>
      %cst_29 = arith.constant dense<0.000000e+00> : vector<64x32xf32>
      %42 = tpu.matmul %39, %41, %cst_29 {dimension_numbers = #tpu.dot_dimension_numbers<[1], [0], [0], [1], [0, 0, 1, 1], [], []>} : vector<64x16xf32>, vector<16x32xf32>, vector<64x32xf32> -> vector<64x32xf32>
      %43 = arith.addf %40, %42 : vector<64x32xf32>
      %cst_30 = arith.constant 0.000000e+00 : f32
      %44 = vector.broadcast %cst_30 : f32 to vector<64x32xf32>
      %45 = arith.maximumf %43, %44 : vector<64x32xf32>
      %c0_31 = arith.constant 0 : index
      %c0_32 = arith.constant 0 : index
      %46 = vector.load %arg9[%c0_31, %c0_32] : memref<32x8xf32, #tpu.memory_space<vmem>>, vector<32x8xf32>
      %cst_33 = arith.constant dense<0.000000e+00> : vector<64x8xf32>
      %47 = tpu.matmul %45, %46, %cst_33 {dimension_numbers = #tpu.dot_dimension_numbers<[1], [0], [0], [1], [0, 0, 1, 1], [], []>} : vector<64x32xf32>, vector<32x8xf32>, vector<64x8xf32> -> vector<64x8xf32>
      %c0_34 = arith.constant 0 : index
      %c0_35 = arith.constant 0 : index
      %48 = vector.load %arg10[%c0_34, %c0_35] : memref<1x8xf32, #tpu.memory_space<vmem>>, vector<1x8xf32>
      %49 = vector.broadcast %48 : vector<1x8xf32> to vector<64x8xf32>
      %50 = arith.addf %47, %49 : vector<64x8xf32>
      %c0_36 = arith.constant 0 : index
      %c0_37 = arith.constant 0 : index
      %51 = vector.load %arg11[%c0_36, %c0_37] : memref<64x8xf32, #tpu.memory_space<vmem>>, vector<64x8xf32>
      tpu.vector_store %arg11[%c0_36, %c0_37], %50 {strides = array<i32>} : memref<64x8xf32, #tpu.memory_space<vmem>>, vector<64x8xf32>,
    } else {
    }
    return
  }
  func.func @transform_0(%arg0: i32) -> (i32, i32) {
    %c0_i32 = arith.constant 0 : i32
    %c0_i32_0 = arith.constant 0 : i32
    return %arg0, %c0_i32 : i32, i32
  }
  func.func @transform_1(%arg0: i32) -> (i32, i32) {
    %c0_i32 = arith.constant 0 : i32
    %c0_i32_0 = arith.constant 0 : i32
    return %c0_i32, %arg0 : i32, i32
  }
  func.func @transform_2(%arg0: i32) -> (i32, i32) {
    %c0_i32 = arith.constant 0 : i32
    %c0_i32_0 = arith.constant 0 : i32
    return %c0_i32, %arg0 : i32, i32
  }
  func.func @transform_3(%arg0: i32) -> (i32, i32) {
    %c0_i32 = arith.constant 0 : i32
    %c0_i32_0 = arith.constant 0 : i32
    %c0_i32_1 = arith.constant 0 : i32
    return %c0_i32, %c0_i32_0 : i32, i32
  }
  func.func @transform_4(%arg0: i32) -> (i32, i32) {
    %c0_i32 = arith.constant 0 : i32
    %c0_i32_0 = arith.constant 0 : i32
    %c0_i32_1 = arith.constant 0 : i32
    return %c0_i32, %c0_i32_0 : i32, i32
  }
  func.func @transform_5(%arg0: i32) -> (i32, i32) {
    %c0_i32 = arith.constant 0 : i32
    %c0_i32_0 = arith.constant 0 : i32
    %c0_i32_1 = arith.constant 0 : i32
    return %c0_i32, %c0_i32_0 : i32, i32
  }
  func.func @transform_6(%arg0: i32) -> (i32, i32) {
    %c0_i32 = arith.constant 0 : i32
    %c0_i32_0 = arith.constant 0 : i32
    %c0_i32_1 = arith.constant 0 : i32
    return %c0_i32, %c0_i32_0 : i32, i32
  }
  func.func @transform_7(%arg0: i32) -> (i32, i32) {
    %c0_i32 = arith.constant 0 : i32
    %c0_i32_0 = arith.constant 0 : i32
    %c0_i32_1 = arith.constant 0 : i32
    return %c0_i32, %c0_i32_0 : i32, i32
  }
  func.func @transform_8(%arg0: i32) -> (i32, i32) {
    %c0_i32 = arith.constant 0 : i32
    %c0_i32_0 = arith.constant 0 : i32
    %c0_i32_1 = arith.constant 0 : i32
    return %c0_i32, %c0_i32_0 : i32, i32
  }
  func.func @transform_9(%arg0: i32) -> (i32, i32) {
    %c0_i32 = arith.constant 0 : i32
    %c0_i32_0 = arith.constant 0 : i32
    %c0_i32_1 = arith.constant 0 : i32
    return %c0_i32, %c0_i32_0 : i32, i32
  }
  func.func @transform_10(%arg0: i32) -> (i32, i32) {
    %c0_i32 = arith.constant 0 : i32
    %c0_i32_0 = arith.constant 0 : i32
    %c0_i32_1 = arith.constant 0 : i32
    return %c0_i32, %c0_i32_0 : i32, i32
  }
}

</mosaic_0001>

<llo_original>
// kernel: _lambda_.1
$region0: #{_lambda_.1}
  #allocation0 [shape = 'u32[]', space=smem, size = 0x4, offset = 0x4, fixed_abs, tag = 'smem constant byte address 0x4 - core index']
  #allocation1 [shape = 'u32[144,128]{1,0:T(1,128)}', space=vmem, size = 0x12000, scoped, tag = 'internal scratch']
  #allocation2 [shape = 'f32[64,17]{1,0:T(8,128)}', space=vmem, size = 0x8000, scoped, tag = 'scratch operand']
  %s0 = inlined_call_operand.vmem [shape: f32[4096,8], index: 0, kind: input, shape index: {}]
  %s1 = inlined_call_operand.vmem [shape: s32[1,4096], index: 1, kind: input, shape index: {}]
  %s2 = inlined_call_operand.vmem [shape: s32[1,4096], index: 2, kind: input, shape index: {}]
  %s3 = inlined_call_operand.vmem [shape: f32[33,64], index: 3, kind: input, shape index: {}]
  %s4 = inlined_call_operand.vmem [shape: f32[33,8], index: 4, kind: input, shape index: {}]
  %s5 = inlined_call_operand.vmem [shape: f32[17,33], index: 5, kind: input, shape index: {}]
  %s6 = inlined_call_operand.vmem [shape: f32[64,32], index: 6, kind: input, shape index: {}]
  %s7 = inlined_call_operand.vmem [shape: f32[16,32], index: 7, kind: input, shape index: {}]
  %s8 = inlined_call_operand.vmem [shape: f32[32,8], index: 8, kind: input, shape index: {}]
  %s9 = inlined_call_operand.vmem [shape: f32[1,8], index: 9, kind: input, shape index: {}]
  %s10 = inlined_call_operand.vmem [shape: f32[64,8], index: 10, kind: output, shape index: {}]
  %s11 = sld [smem:[#allocation0]]
  $region81: #{_lambda_.1} parent=0
    _
  %s13 = ssub.s32 1, %s11
  %s14 = scalar_select 0, %s13, %s11
  loop: start=0, step=1, limit=4
  $region2: #{_lambda_.1} parent=0 // loop_pre_header
    _
  $region3: #{_lambda_.1} parent=0 // loop_header
    %s16 = sphi 0, %s20
    %p17 = scmp.ge.s32.totalorder %s16, 4
    %s26 = sphi 0, %s28
    %s29 = sphi 0, %s26
    %s30 = sphi 0, %s29
    %s46 = sphi 0, %s30
    %s52 = sphi 0, %s54
    %s55 = sphi 0, %s52
    %s56 = sphi 0, %s55
    %s72 = sphi 0, %s56
    %s78 = sphi 0, %s80
    %s81 = sphi 0, %s78
    %s82 = sphi 0, %s81
    %s98 = sphi 0, %s82
    %s102 = sphi 0, %s102
    %s104 = sphi 0, %s102
    %s105 = sphi 0, %s104
    %s119 = sphi 0, %s105
    %s123 = sphi 0, %s123
    %s125 = sphi 0, %s123
    %s126 = sphi 0, %s125
    %s140 = sphi 0, %s126
    %s144 = sphi 0, %s144
    %s146 = sphi 0, %s144
    %s147 = sphi 0, %s146
    %s161 = sphi 0, %s147
    %s165 = sphi 0, %s165
    %s167 = sphi 0, %s165
    %s168 = sphi 0, %s167
    %s182 = sphi 0, %s168
    %s186 = sphi 0, %s186
    %s188 = sphi 0, %s186
    %s189 = sphi 0, %s188
    %s203 = sphi 0, %s189
    %s207 = sphi 0, %s207
    %s209 = sphi 0, %s207
    %s210 = sphi 0, %s209
    %s224 = sphi 0, %s210
    %s228 = sphi 0, %s228
    %s230 = sphi 0, %s228
    %s231 = sphi 0, %s230
    %s245 = sphi 0, %s231
    %s249 = sphi 0, %s249
    %s251 = sphi 0, %s249
    %s252 = sphi 0, %s251
    %s266 = sphi 0, %s252
  $region4: #{_lambda_.1} parent=0 // loop_header_branch
    %19 = sbr.rel (%p17) target = $region8
  $region5: #{_lambda_.1} parent=0 // loop_body
    %s21 = ssub.s32 %s16, 1
    %s22 = ssub.s32 %s16, 2
    %s23 = sadd.s32 %s16, 1
    %s24 = ssub.s32 %s16, %s23
    %p25 = scmp.eq.s32.totalorder %s24, 0
    %s27 = sadd.s32 %s26, 1
    %s28 = scalar_select %p25, %s26, %s27
    %p31 = pneg %p25
    %p32 = scmp.eq.s32.totalorder %s16, 1
    %p33 = por %p31, %p32
    %p34 = scmp.ne.s32.totalorder %s26, %s29
    %p35 = scmp.eq.s32.totalorder %s16, 0
    %p36 = por %p34, %p35
    %p37 = scmp.ne.s32.totalorder %s26, %s29
    %p38 = scmp.eq.s32.totalorder %s21, 1
    %p39 = por %p37, %p38
    %p40 = scmp.ne.s32.totalorder %s29, %s30
    %p41 = scmp.eq.s32.totalorder %s21, 0
    %p42 = por %p40, %p41
    %p43 = scmp.ne.s32.totalorder %s29, %s30
    %p44 = scmp.eq.s32.totalorder %s22, 1
    %p45 = por %p43, %p44
    %p47 = scmp.ne.s32.totalorder %s30, %s46
    %p48 = scmp.eq.s32.totalorder %s22, 0
    %p49 = por %p47, %p48
    %s50 = ssub.s32 %s16, %s23
    %p51 = scmp.eq.s32.totalorder %s50, 0
    %s53 = sadd.s32 %s52, 1
    %s54 = scalar_select %p51, %s52, %s53
    %p57 = pneg %p51
    %p58 = scmp.eq.s32.totalorder %s16, 1
    %p59 = por %p57, %p58
    %p60 = scmp.ne.s32.totalorder %s52, %s55
    %p61 = scmp.eq.s32.totalorder %s16, 0
    %p62 = por %p60, %p61
    %p63 = scmp.ne.s32.totalorder %s52, %s55
    %p64 = scmp.eq.s32.totalorder %s21, 1
    %p65 = por %p63, %p64
    %p66 = scmp.ne.s32.totalorder %s55, %s56
    %p67 = scmp.eq.s32.totalorder %s21, 0
    %p68 = por %p66, %p67
    %p69 = scmp.ne.s32.totalorder %s55, %s56
    %p70 = scmp.eq.s32.totalorder %s22, 1
    %p71 = por %p69, %p70
    %p73 = scmp.ne.s32.totalorder %s56, %s72
    %p74 = scmp.eq.s32.totalorder %s22, 0
    %p75 = por %p73, %p74
    %s76 = ssub.s32 %s16, %s23
    %p77 = scmp.eq.s32.totalorder %s76, 0
    %s79 = sadd.s32 %s78, 1
    %s80 = scalar_select %p77, %s78, %s79
    %p83 = pneg %p77
    %p84 = scmp.eq.s32.totalorder %s16, 1
    %p85 = por %p83, %p84
    %p86 = scmp.ne.s32.totalorder %s78, %s81
    %p87 = scmp.eq.s32.totalorder %s16, 0
    %p88 = por %p86, %p87
    %p89 = scmp.ne.s32.totalorder %s78, %s81
    %p90 = scmp.eq.s32.totalorder %s21, 1
    %p91 = por %p89, %p90
    %p92 = scmp.ne.s32.totalorder %s81, %s82
    %p93 = scmp.eq.s32.totalorder %s21, 0
    %p94 = por %p92, %p93
    %p95 = scmp.ne.s32.totalorder %s81, %s82
    %p96 = scmp.eq.s32.totalorder %s22, 1
    %p97 = por %p95, %p96
    %p99 = scmp.ne.s32.totalorder %s82, %s98
    %p100 = scmp.eq.s32.totalorder %s22, 0
    %p101 = por %p99, %p100
    %s103 = sadd.s32 %s102, 1
    %p106 = scmp.eq.s32.totalorder %s16, 1
    %p107 = scmp.ne.s32.totalorder %s102, %s104
    %p108 = scmp.eq.s32.totalorder %s16, 0
    %p109 = por %p107, %p108
    %p110 = scmp.ne.s32.totalorder %s102, %s104
    %p111 = scmp.eq.s32.totalorder %s21, 1
    %p112 = por %p110, %p111
    %p113 = scmp.ne.s32.totalorder %s104, %s105
    %p114 = scmp.eq.s32.totalorder %s21, 0
    %p115 = por %p113, %p114
    %p116 = scmp.ne.s32.totalorder %s104, %s105
    %p117 = scmp.eq.s32.totalorder %s22, 1
    %p118 = por %p116, %p117
    %p120 = scmp.ne.s32.totalorder %s105, %s119
    %p121 = scmp.eq.s32.totalorder %s22, 0
    %p122 = por %p120, %p121
    %s124 = sadd.s32 %s123, 1
    %p127 = scmp.eq.s32.totalorder %s16, 1
    %p128 = scmp.ne.s32.totalorder %s123, %s125
    %p129 = scmp.eq.s32.totalorder %s16, 0
    %p130 = por %p128, %p129
    %p131 = scmp.ne.s32.totalorder %s123, %s125
    %p132 = scmp.eq.s32.totalorder %s21, 1
    %p133 = por %p131, %p132
    %p134 = scmp.ne.s32.totalorder %s125, %s126
    %p135 = scmp.eq.s32.totalorder %s21, 0
    %p136 = por %p134, %p135
    %p137 = scmp.ne.s32.totalorder %s125, %s126
    %p138 = scmp.eq.s32.totalorder %s22, 1
    %p139 = por %p137, %p138
    %p141 = scmp.ne.s32.totalorder %s126, %s140
    %p142 = scmp.eq.s32.totalorder %s22, 0
    %p143 = por %p141, %p142
    %s145 = sadd.s32 %s144, 1
    %p148 = scmp.eq.s32.totalorder %s16, 1
    %p149 = scmp.ne.s32.totalorder %s144, %s146
    %p150 = scmp.eq.s32.totalorder %s16, 0
    %p151 = por %p149, %p150
    %p152 = scmp.ne.s32.totalorder %s144, %s146
    %p153 = scmp.eq.s32.totalorder %s21, 1
    %p154 = por %p152, %p153
    %p155 = scmp.ne.s32.totalorder %s146, %s147
    %p156 = scmp.eq.s32.totalorder %s21, 0
    %p157 = por %p155, %p156
    %p158 = scmp.ne.s32.totalorder %s146, %s147
    %p159 = scmp.eq.s32.totalorder %s22, 1
    %p160 = por %p158, %p159
    %p162 = scmp.ne.s32.totalorder %s147, %s161
    %p163 = scmp.eq.s32.totalorder %s22, 0
    %p164 = por %p162, %p163
    %s166 = sadd.s32 %s165, 1
    %p169 = scmp.eq.s32.totalorder %s16, 1
    %p170 = scmp.ne.s32.totalorder %s165, %s167
    %p171 = scmp.eq.s32.totalorder %s16, 0
    %p172 = por %p170, %p171
    %p173 = scmp.ne.s32.totalorder %s165, %s167
    %p174 = scmp.eq.s32.totalorder %s21, 1
    %p175 = por %p173, %p174
    %p176 = scmp.ne.s32.totalorder %s167, %s168
    %p177 = scmp.eq.s32.totalorder %s21, 0
    %p178 = por %p176, %p177
    %p179 = scmp.ne.s32.totalorder %s167, %s168
    %p180 = scmp.eq.s32.totalorder %s22, 1
    %p181 = por %p179, %p180
    %p183 = scmp.ne.s32.totalorder %s168, %s182
    %p184 = scmp.eq.s32.totalorder %s22, 0
    %p185 = por %p183, %p184
    %s187 = sadd.s32 %s186, 1
    %p190 = scmp.eq.s32.totalorder %s16, 1
    %p191 = scmp.ne.s32.totalorder %s186, %s188
    %p192 = scmp.eq.s32.totalorder %s16, 0
    %p193 = por %p191, %p192
    %p194 = scmp.ne.s32.totalorder %s186, %s188
    %p195 = scmp.eq.s32.totalorder %s21, 1
    %p196 = por %p194, %p195
    %p197 = scmp.ne.s32.totalorder %s188, %s189
    %p198 = scmp.eq.s32.totalorder %s21, 0
    %p199 = por %p197, %p198
    %p200 = scmp.ne.s32.totalorder %s188, %s189
    %p201 = scmp.eq.s32.totalorder %s22, 1
    %p202 = por %p200, %p201
    %p204 = scmp.ne.s32.totalorder %s189, %s203
    %p205 = scmp.eq.s32.totalorder %s22, 0
    %p206 = por %p204, %p205
    %s208 = sadd.s32 %s207, 1
    %p211 = scmp.eq.s32.totalorder %s16, 1
    %p212 = scmp.ne.s32.totalorder %s207, %s209
    %p213 = scmp.eq.s32.totalorder %s16, 0
    %p214 = por %p212, %p213
    %p215 = scmp.ne.s32.totalorder %s207, %s209
    %p216 = scmp.eq.s32.totalorder %s21, 1
    %p217 = por %p215, %p216
    %p218 = scmp.ne.s32.totalorder %s209, %s210
    %p219 = scmp.eq.s32.totalorder %s21, 0
    %p220 = por %p218, %p219
    %p221 = scmp.ne.s32.totalorder %s209, %s210
    %p222 = scmp.eq.s32.totalorder %s22, 1
    %p223 = por %p221, %p222
    %p225 = scmp.ne.s32.totalorder %s210, %s224
    %p226 = scmp.eq.s32.totalorder %s22, 0
    %p227 = por %p225, %p226
    %s229 = sadd.s32 %s228, 1
    %p232 = scmp.eq.s32.totalorder %s16, 1
    %p233 = scmp.ne.s32.totalorder %s228, %s230
    %p234 = scmp.eq.s32.totalorder %s16, 0
    %p235 = por %p233, %p234
    %p236 = scmp.ne.s32.totalorder %s228, %s230
    %p237 = scmp.eq.s32.totalorder %s21, 1
    %p238 = por %p236, %p237
    %p239 = scmp.ne.s32.totalorder %s230, %s231
    %p240 = scmp.eq.s32.totalorder %s21, 0
    %p241 = por %p239, %p240
    %p242 = scmp.ne.s32.totalorder %s230, %s231
    %p243 = scmp.eq.s32.totalorder %s22, 1
    %p244 = por %p242, %p243
    %p246 = scmp.ne.s32.totalorder %s231, %s245
    %p247 = scmp.eq.s32.totalorder %s22, 0
    %p248 = por %p246, %p247
    %s250 = sadd.s32 %s249, 1
    %p253 = scmp.eq.s32.totalorder %s16, 1
    %p254 = scmp.ne.s32.totalorder %s249, %s251
    %p255 = scmp.eq.s32.totalorder %s16, 0
    %p256 = por %p254, %p255
    %p257 = scmp.ne.s32.totalorder %s249, %s251
    %p258 = scmp.eq.s32.totalorder %s21, 1
    %p259 = por %p257, %p258
    %p260 = scmp.ne.s32.totalorder %s251, %s252
    %p261 = scmp.eq.s32.totalorder %s21, 0
    %p262 = por %p260, %p261
    %p263 = scmp.ne.s32.totalorder %s251, %s252
    %p264 = scmp.eq.s32.totalorder %s22, 1
    %p265 = por %p263, %p264
    %p267 = scmp.ne.s32.totalorder %s252, %s266
    %p268 = scmp.eq.s32.totalorder %s22, 0
    %p269 = por %p267, %p268
    %p270 = scmp.le.s32.totalorder 1, %s16
    %p271 = scmp.lt.s32.totalorder %s16, 3
    %p272 = pnand %p270, %p271
    %p273 = pneg %p272
    // Predicated region
    $region9: #{_lambda_.1} parent=5 // pred_check
      _
    $region10: #{_lambda_.1} parent=5 // pred_check_branch
      %275 = sbr.rel (%p272) target = $region12
    $region11: #{_lambda_.1} parent=5 // pred_region
      %s276 = ssub.s32 %s16, 1
      // Predicated region
      $region13: #{_lambda_.1} parent=11 // pred_check
        %p277 = pneg %p115
      $region14: #{_lambda_.1} parent=11 // pred_check_branch
        %279 = sbr.rel (%p277) target = $region16
      $region15: #{_lambda_.1} parent=11 // pred_region
        _
      $region16: #{_lambda_.1} parent=11 // pred_fallthru
        _
      // Predicated region
      $region17: #{_lambda_.1} parent=11 // pred_check
        %p280 = pneg %p136
      $region18: #{_lambda_.1} parent=11 // pred_check_branch
        %282 = sbr.rel (%p280) target = $region20
      $region19: #{_lambda_.1} parent=11 // pred_region
        _
      $region20: #{_lambda_.1} parent=11 // pred_fallthru
        _
      // Predicated region
      $region21: #{_lambda_.1} parent=11 // pred_check
        %p283 = pneg %p157
      $region22: #{_lambda_.1} parent=11 // pred_check_branch
        %285 = sbr.rel (%p283) target = $region24
      $region23: #{_lambda_.1} parent=11 // pred_region
        _
      $region24: #{_lambda_.1} parent=11 // pred_fallthru
        _
      // Predicated region
      $region25: #{_lambda_.1} parent=11 // pred_check
        %p286 = pneg %p178
      $region26: #{_lambda_.1} parent=11 // pred_check_branch
        %288 = sbr.rel (%p286) target = $region28
      $region27: #{_lambda_.1} parent=11 // pred_region
        _
      $region28: #{_lambda_.1} parent=11 // pred_fallthru
        _
      // Predicated region
      $region29: #{_lambda_.1} parent=11 // pred_check
        %p289 = pneg %p199
      $region30: #{_lambda_.1} parent=11 // pred_check_branch
        %291 = sbr.rel (%p289) target = $region32
      $region31: #{_lambda_.1} parent=11 // pred_region
        _
      $region32: #{_lambda_.1} parent=11 // pred_fallthru
        _
      // Predicated region
      $region33: #{_lambda_.1} parent=11 // pred_check
        %p292 = pneg %p220
      $region34: #{_lambda_.1} parent=11 // pred_check_branch
        %294 = sbr.rel (%p292) target = $region36
      $region35: #{_lambda_.1} parent=11 // pred_region
        _
      $region36: #{_lambda_.1} parent=11 // pred_fallthru
        _
      // Predicated region
      $region37: #{_lambda_.1} parent=11 // pred_check
        %p295 = pneg %p241
      $region38: #{_lambda_.1} parent=11 // pred_check_branch
        %297 = sbr.rel (%p295) target = $region40
      $region39: #{_lambda_.1} parent=11 // pred_region
        _
      $region40: #{_lambda_.1} parent=11 // pred_fallthru
        _
    $region12: #{_lambda_.1} parent=5 // pred_fallthru
      _
    %p298 = scmp.lt.s32.totalorder %s16, 2
    // Predicated region
    $region41: #{_lambda_.1} parent=5 // pred_check
      %p299 = pneg %p298
    $region42: #{_lambda_.1} parent=5 // pred_check_branch
      %301 = sbr.rel (%p299) target = $region44
    $region43: #{_lambda_.1} parent=5 // pred_region
      // Predicated region
      $region45: #{_lambda_.1} parent=43 // pred_check
        %p302 = pneg %p36
      $region46: #{_lambda_.1} parent=43 // pred_check_branch
        %304 = sbr.rel (%p302) target = $region48
      $region47: #{_lambda_.1} parent=43 // pred_region
        %s305 = smul.u32 256, %s16
        %p306 = scmp.lt.s32.totalorder %s305, 511
        %s307 = scalar_select %p306, %s305, 511
        %s308 = smul.addr %s307, 8
        %s309 = scalar_lea.vmem %s0, %s308
        %s310 = smul.u32 256, %s16
      $region48: #{_lambda_.1} parent=43 // pred_fallthru
        _
      // Predicated region
      $region49: #{_lambda_.1} parent=43 // pred_check
        %p311 = pneg %p62
      $region50: #{_lambda_.1} parent=43 // pred_check_branch
        %313 = sbr.rel (%p311) target = $region52
      $region51: #{_lambda_.1} parent=43 // pred_region
        %s314 = smul.u32 16, %s16
        %p315 = scmp.lt.s32.totalorder %s314, 31
        %s316 = scalar_select %p315, %s314, 31
        %s317 = scalar_lea.vmem %s1, %s316
        %s318 = smul.u32 16, %s16
      $region52: #{_lambda_.1} parent=43 // pred_fallthru
        _
      // Predicated region
      $region53: #{_lambda_.1} parent=43 // pred_check
        %p319 = pneg %p88
      $region54: #{_lambda_.1} parent=43 // pred_check_branch
        %321 = sbr.rel (%p319) target = $region56
      $region55: #{_lambda_.1} parent=43 // pred_region
        %s322 = smul.u32 16, %s16
        %p323 = scmp.lt.s32.totalorder %s322, 31
        %s324 = scalar_select %p323, %s322, 31
        %s325 = scalar_lea.vmem %s2, %s324
        %s326 = smul.u32 16, %s16
      $region56: #{_lambda_.1} parent=43 // pred_fallthru
        _
    $region44: #{_lambda_.1} parent=5 // pred_fallthru
      _
    %p327 = scmp.le.s32.totalorder 1, %s16
    %p328 = scmp.lt.s32.totalorder %s16, 3
    %p329 = pnand %p327, %p328
    %p330 = pneg %p329
    // Predicated region
    $region57: #{_lambda_.1} parent=5 // pred_check
      _
    $region58: #{_lambda_.1} parent=5 // pred_check_branch
      %332 = sbr.rel (%p329) target = $region60
    $region59: #{_lambda_.1} parent=5 // pred_region
      %s333 = ssub.s32 %s16, 1
      %s334 = smul.u32 256, %s21
      %p335 = scmp.lt.s32.totalorder %s334, 511
      %s336 = scalar_select %p335, %s334, 511
      %s337 = smul.addr %s336, 8
      %s338 = scalar_lea.vmem %s0, %s337
      %p339 = pneg %p42
      %p340 = pneg %p39
      %s341 = smul.u32 16, %s21
      %p342 = scmp.lt.s32.totalorder %s341, 31
      %s343 = scalar_select %p342, %s341, 31
      %s344 = scalar_lea.vmem %s1, %s343
      %p345 = pneg %p68
      %p346 = pneg %p65
      %s347 = smul.u32 16, %s21
      %p348 = scmp.lt.s32.totalorder %s347, 31
      %s349 = scalar_select %p348, %s347, 31
      %s350 = scalar_lea.vmem %s2, %s349
      %p351 = pneg %p94
      %p352 = pneg %p91
      %p353 = pneg %p115
      %p354 = pneg %p112
      %p355 = pneg %p136
      %p356 = pneg %p133
      %p357 = pneg %p157
      %p358 = pneg %p154
      %p359 = pneg %p178
      %p360 = pneg %p175
      %p361 = pneg %p199
      %p362 = pneg %p196
      %p363 = pneg %p220
      %p364 = pneg %p217
      %p365 = pneg %p241
      %p366 = pneg %p238
      %p367 = pneg %p262
      %p368 = pneg %p259
      %s369 = smul.u32 256, %s21
      %p370 = scmp.lt.s32.totalorder %s369, 511
      %s371 = scalar_select %p370, %s369, 511
      %s372 = smul.addr %s371, 8
      %s373 = scalar_lea.vmem %s0, %s372
      %s374 = smul.u32 256, %s21
      %s375 = smul.u32 16, %s21
      %p376 = scmp.lt.s32.totalorder %s375, 31
      %s377 = scalar_select %p376, %s375, 31
      %s378 = scalar_lea.vmem %s1, %s377
      %s379 = smul.u32 16, %s21
      %s380 = smul.u32 16, %s21
      %p381 = scmp.lt.s32.totalorder %s380, 31
      %s382 = scalar_select %p381, %s380, 31
      %s383 = scalar_lea.vmem %s2, %s382
      %s384 = smul.u32 16, %s21
      %p385 = scmp.eq.s32.totalorder %s21, 0
      // Predicated region
      $region61: #{_lambda_.1} parent=59 // pred_check
        %p386 = pneg %p385
      $region62: #{_lambda_.1} parent=59 // pred_check_branch
        %388 = sbr.rel (%p386) target = $region64
      $region63: #{_lambda_.1} parent=59 // pred_region
        %vm389 = vcmask 138240
        %390 = vst.msk [vmem:[#allocation2] sm:$0xff] %vm389, 0.0
        %391 = vst.msk [vmem:[#allocation2 + $0x8] sm:$0xff] %vm389, 0.0
        %392 = vst.msk [vmem:[#allocation2 + $0x10] sm:$0xff] %vm389, 0.0
        %393 = vst.msk [vmem:[#allocation2 + $0x18] sm:$0xff] %vm389, 0.0
        %394 = vst.msk [vmem:[#allocation2 + $0x20] sm:$0xff] %vm389, 0.0
        %395 = vst.msk [vmem:[#allocation2 + $0x28] sm:$0xff] %vm389, 0.0
        %396 = vst.msk [vmem:[#allocation2 + $0x30] sm:$0xff] %vm389, 0.0
        %397 = vst.msk [vmem:[#allocation2 + $0x38] sm:$0xff] %vm389, 0.0
        %vm398 = vcmask 64512
        %399 = vst.msk [vmem:[%s10] sm:$0xff] %vm398, 0.0
        %400 = vst.msk [vmem:[%s10 + $0x8] sm:$0xff] %vm398, 0.0
        %401 = vst.msk [vmem:[%s10 + $0x10] sm:$0xff] %vm398, 0.0
        %402 = vst.msk [vmem:[%s10 + $0x18] sm:$0xff] %vm398, 0.0
        %403 = vst.msk [vmem:[%s10 + $0x20] sm:$0xff] %vm398, 0.0
        %404 = vst.msk [vmem:[%s10 + $0x28] sm:$0xff] %vm398, 0.0
        %405 = vst.msk [vmem:[%s10 + $0x30] sm:$0xff] %vm398, 0.0
        %406 = vst.msk [vmem:[%s10 + $0x38] sm:$0xff] %vm398, 0.0
      $region64: #{_lambda_.1} parent=59 // pred_fallthru
        _
      %v407 = vlaneseq
      %v408 = vshrl.u32 %v407, 7
      %v409 = vadd.s32 %v408, 8
      %v410 = vadd.s32 %v408, 16
      %v411 = vadd.s32 %v408, 24
      %v412 = vadd.s32 %v408, 32
      %v413 = vadd.s32 %v408, 40
      %v414 = vadd.s32 %v408, 48
      %v415 = vadd.s32 %v408, 56
      %v416 = vld [vmem:[%s378] sm:$0xff]
      %v417 = vld [vmem:[%s378 + $0x8] sm:$0xff]
      %v418 = vlaneseq
      %v419 = vshrl.u32 %v418, 7
      %v420 = vsub.s32 0, %v419
      %v421 = vrot.slane %v416, %v420
      %v422 = vlaneseq
      %v423 = vshrl.u32 %v422, 7
      %v424 = vsub.s32 1, %v423
      %v425 = vrot.slane %v416, %v424
      %v426 = vlaneseq
      %v427 = vshrl.u32 %v426, 7
      %v428 = vsub.s32 2, %v427
      %v429 = vrot.slane %v416, %v428
      %v430 = vlaneseq
      %v431 = vshrl.u32 %v430, 7
      %v432 = vsub.s32 3, %v431
      %v433 = vrot.slane %v416, %v432
      %v434 = vlaneseq
      %v435 = vshrl.u32 %v434, 7
      %v436 = vsub.s32 4, %v435
      %v437 = vrot.slane %v416, %v436
      %v438 = vlaneseq
      %v439 = vshrl.u32 %v438, 7
      %v440 = vsub.s32 5, %v439
      %v441 = vrot.slane %v416, %v440
      %v442 = vlaneseq
      %v443 = vshrl.u32 %v442, 7
      %v444 = vsub.s32 6, %v443
      %v445 = vrot.slane %v416, %v444
      %v446 = vlaneseq
      %v447 = vshrl.u32 %v446, 7
      %v448 = vsub.s32 7, %v447
      %v449 = vrot.slane %v416, %v448
      %v450 = vlaneseq
      %v451 = vshrl.u32 %v450, 7
      %v452 = vsub.s32 0, %v451
      %v453 = vrot.slane %v417, %v452
      %v454 = vlaneseq
      %v455 = vshrl.u32 %v454, 7
      %v456 = vsub.s32 1, %v455
      %v457 = vrot.slane %v417, %v456
      %v458 = vlaneseq
      %v459 = vshrl.u32 %v458, 7
      %v460 = vsub.s32 2, %v459
      %v461 = vrot.slane %v417, %v460
      %v462 = vlaneseq
      %v463 = vshrl.u32 %v462, 7
      %v464 = vsub.s32 3, %v463
      %v465 = vrot.slane %v417, %v464
      %v466 = vlaneseq
      %v467 = vshrl.u32 %v466, 7
      %v468 = vsub.s32 4, %v467
      %v469 = vrot.slane %v417, %v468
      %v470 = vlaneseq
      %v471 = vshrl.u32 %v470, 7
      %v472 = vsub.s32 5, %v471
      %v473 = vrot.slane %v417, %v472
      %v474 = vlaneseq
      %v475 = vshrl.u32 %v474, 7
      %v476 = vsub.s32 6, %v475
      %v477 = vrot.slane %v417, %v476
      %v478 = vlaneseq
      %v479 = vshrl.u32 %v478, 7
      %v480 = vsub.s32 7, %v479
      %v481 = vrot.slane %v417, %v480
      %vm482 = vcmp.eq.s32.totalorder %v421, %v408
      %vm483 = vcmp.eq.s32.totalorder %v425, %v408
      %vm484 = vcmp.eq.s32.totalorder %v429, %v408
      %vm485 = vcmp.eq.s32.totalorder %v433, %v408
      %vm486 = vcmp.eq.s32.totalorder %v437, %v408
      %vm487 = vcmp.eq.s32.totalorder %v441, %v408
      %vm488 = vcmp.eq.s32.totalorder %v445, %v408
      %vm489 = vcmp.eq.s32.totalorder %v449, %v408
      %vm490 = vcmp.eq.s32.totalorder %v453, %v408
      %vm491 = vcmp.eq.s32.totalorder %v457, %v408
      %vm492 = vcmp.eq.s32.totalorder %v461, %v408
      %vm493 = vcmp.eq.s32.totalorder %v465, %v408
      %vm494 = vcmp.eq.s32.totalorder %v469, %v408
      %vm495 = vcmp.eq.s32.totalorder %v473, %v408
      %vm496 = vcmp.eq.s32.totalorder %v477, %v408
      %vm497 = vcmp.eq.s32.totalorder %v481, %v408
      %vm498 = vcmp.eq.s32.totalorder %v421, %v409
      %vm499 = vcmp.eq.s32.totalorder %v425, %v409
      %vm500 = vcmp.eq.s32.totalorder %v429, %v409
      %vm501 = vcmp.eq.s32.totalorder %v433, %v409
      %vm502 = vcmp.eq.s32.totalorder %v437, %v409
      %vm503 = vcmp.eq.s32.totalorder %v441, %v409
      %vm504 = vcmp.eq.s32.totalorder %v445, %v409
      %vm505 = vcmp.eq.s32.totalorder %v449, %v409
      %vm506 = vcmp.eq.s32.totalorder %v453, %v409
      %vm507 = vcmp.eq.s32.totalorder %v457, %v409
      %vm508 = vcmp.eq.s32.totalorder %v461, %v409
      %vm509 = vcmp.eq.s32.totalorder %v465, %v409
      %vm510 = vcmp.eq.s32.totalorder %v469, %v409
      %vm511 = vcmp.eq.s32.totalorder %v473, %v409
      %vm512 = vcmp.eq.s32.totalorder %v477, %v409
      %vm513 = vcmp.eq.s32.totalorder %v481, %v409
      %vm514 = vcmp.eq.s32.totalorder %v421, %v410
      %vm515 = vcmp.eq.s32.totalorder %v425, %v410
      %vm516 = vcmp.eq.s32.totalorder %v429, %v410
      %vm517 = vcmp.eq.s32.totalorder %v433, %v410
      %vm518 = vcmp.eq.s32.totalorder %v437, %v410
      %vm519 = vcmp.eq.s32.totalorder %v441, %v410
      %vm520 = vcmp.eq.s32.totalorder %v445, %v410
      %vm521 = vcmp.eq.s32.totalorder %v449, %v410
      %vm522 = vcmp.eq.s32.totalorder %v453, %v410
      %vm523 = vcmp.eq.s32.totalorder %v457, %v410
      %vm524 = vcmp.eq.s32.totalorder %v461, %v410
      %vm525 = vcmp.eq.s32.totalorder %v465, %v410
      %vm526 = vcmp.eq.s32.totalorder %v469, %v410
      %vm527 = vcmp.eq.s32.totalorder %v473, %v410
      %vm528 = vcmp.eq.s32.totalorder %v477, %v410
      %vm529 = vcmp.eq.s32.totalorder %v481, %v410
      %vm530 = vcmp.eq.s32.totalorder %v421, %v411
      %vm531 = vcmp.eq.s32.totalorder %v425, %v411
      %vm532 = vcmp.eq.s32.totalorder %v429, %v411
      %vm533 = vcmp.eq.s32.totalorder %v433, %v411
      %vm534 = vcmp.eq.s32.totalorder %v437, %v411
      %vm535 = vcmp.eq.s32.totalorder %v441, %v411
      %vm536 = vcmp.eq.s32.totalorder %v445, %v411
      %vm537 = vcmp.eq.s32.totalorder %v449, %v411
      %vm538 = vcmp.eq.s32.totalorder %v453, %v411
      %vm539 = vcmp.eq.s32.totalorder %v457, %v411
      %vm540 = vcmp.eq.s32.totalorder %v461, %v411
      %vm541 = vcmp.eq.s32.totalorder %v465, %v411
      %vm542 = vcmp.eq.s32.totalorder %v469, %v411
      %vm543 = vcmp.eq.s32.totalorder %v473, %v411
      %vm544 = vcmp.eq.s32.totalorder %v477, %v411
      %vm545 = vcmp.eq.s32.totalorder %v481, %v411
      %vm546 = vcmp.eq.s32.totalorder %v421, %v412
      %vm547 = vcmp.eq.s32.totalorder %v425, %v412
      %vm548 = vcmp.eq.s32.totalorder %v429, %v412
      %vm549 = vcmp.eq.s32.totalorder %v433, %v412
      %vm550 = vcmp.eq.s32.totalorder %v437, %v412
      %vm551 = vcmp.eq.s32.totalorder %v441, %v412
      %vm552 = vcmp.eq.s32.totalorder %v445, %v412
      %vm553 = vcmp.eq.s32.totalorder %v449, %v412
      %vm554 = vcmp.eq.s32.totalorder %v453, %v412
      %vm555 = vcmp.eq.s32.totalorder %v457, %v412
      %vm556 = vcmp.eq.s32.totalorder %v461, %v412
      %vm557 = vcmp.eq.s32.totalorder %v465, %v412
      %vm558 = vcmp.eq.s32.totalorder %v469, %v412
      %vm559 = vcmp.eq.s32.totalorder %v473, %v412
      %vm560 = vcmp.eq.s32.totalorder %v477, %v412
      %vm561 = vcmp.eq.s32.totalorder %v481, %v412
      %vm562 = vcmp.eq.s32.totalorder %v421, %v413
      %vm563 = vcmp.eq.s32.totalorder %v425, %v413
      %vm564 = vcmp.eq.s32.totalorder %v429, %v413
      %vm565 = vcmp.eq.s32.totalorder %v433, %v413
      %vm566 = vcmp.eq.s32.totalorder %v437, %v413
      %vm567 = vcmp.eq.s32.totalorder %v441, %v413
      %vm568 = vcmp.eq.s32.totalorder %v445, %v413
      %vm569 = vcmp.eq.s32.totalorder %v449, %v413
      %vm570 = vcmp.eq.s32.totalorder %v453, %v413
      %vm571 = vcmp.eq.s32.totalorder %v457, %v413
      %vm572 = vcmp.eq.s32.totalorder %v461, %v413
      %vm573 = vcmp.eq.s32.totalorder %v465, %v413
      %vm574 = vcmp.eq.s32.totalorder %v469, %v413
      %vm575 = vcmp.eq.s32.totalorder %v473, %v413
      %vm576 = vcmp.eq.s32.totalorder %v477, %v413
      %vm577 = vcmp.eq.s32.totalorder %v481, %v413
      %vm578 = vcmp.eq.s32.totalorder %v421, %v414
      %vm579 = vcmp.eq.s32.totalorder %v425, %v414
      %vm580 = vcmp.eq.s32.totalorder %v429, %v414
      %vm581 = vcmp.eq.s32.totalorder %v433, %v414
      %vm582 = vcmp.eq.s32.totalorder %v437, %v414
      %vm583 = vcmp.eq.s32.totalorder %v441, %v414
      %vm584 = vcmp.eq.s32.totalorder %v445, %v414
      %vm585 = vcmp.eq.s32.totalorder %v449, %v414
      %vm586 = vcmp.eq.s32.totalorder %v453, %v414
      %vm587 = vcmp.eq.s32.totalorder %v457, %v414
      %vm588 = vcmp.eq.s32.totalorder %v461, %v414
      %vm589 = vcmp.eq.s32.totalorder %v465, %v414
      %vm590 = vcmp.eq.s32.totalorder %v469, %v414
      %vm591 = vcmp.eq.s32.totalorder %v473, %v414
      %vm592 = vcmp.eq.s32.totalorder %v477, %v414
      %vm593 = vcmp.eq.s32.totalorder %v481, %v414
      %vm594 = vcmp.eq.s32.totalorder %v421, %v415
      %vm595 = vcmp.eq.s32.totalorder %v425, %v415
      %vm596 = vcmp.eq.s32.totalorder %v429, %v415
      %vm597 = vcmp.eq.s32.totalorder %v433, %v415
      %vm598 = vcmp.eq.s32.totalorder %v437, %v415
      %vm599 = vcmp.eq.s32.totalorder %v441, %v415
      %vm600 = vcmp.eq.s32.totalorder %v445, %v415
      %vm601 = vcmp.eq.s32.totalorder %v449, %v415
      %vm602 = vcmp.eq.s32.totalorder %v453, %v415
      %vm603 = vcmp.eq.s32.totalorder %v457, %v415
      %vm604 = vcmp.eq.s32.totalorder %v461, %v415
      %vm605 = vcmp.eq.s32.totalorder %v465, %v415
      %vm606 = vcmp.eq.s32.totalorder %v469, %v415
      %vm607 = vcmp.eq.s32.totalorder %v473, %v415
      %vm608 = vcmp.eq.s32.totalorder %v477, %v415
      %vm609 = vcmp.eq.s32.totalorder %v481, %v415
      %v610 = vsel %vm482, 1, 0
      %v611 = vsel %vm483, 1, 0
      %v612 = vsel %vm484, 1, 0
      %v613 = vsel %vm485, 1, 0
      %v614 = vsel %vm486, 1, 0
      %v615 = vsel %vm487, 1, 0
      %v616 = vsel %vm488, 1, 0
      %v617 = vsel %vm489, 1, 0
      %v618 = vsel %vm490, 1, 0
      %v619 = vsel %vm491, 1, 0
      %v620 = vsel %vm492, 1, 0
      %v621 = vsel %vm493, 1, 0
      %v622 = vsel %vm494, 1, 0
      %v623 = vsel %vm495, 1, 0
      %v624 = vsel %vm496, 1, 0
      %v625 = vsel %vm497, 1, 0
      %v626 = vsel %vm498, 1, 0
      %v627 = vsel %vm499, 1, 0
      %v628 = vsel %vm500, 1, 0
      %v629 = vsel %vm501, 1, 0
      %v630 = vsel %vm502, 1, 0
      %v631 = vsel %vm503, 1, 0
      %v632 = vsel %vm504, 1, 0
      %v633 = vsel %vm505, 1, 0
      %v634 = vsel %vm506, 1, 0
      %v635 = vsel %vm507, 1, 0
      %v636 = vsel %vm508, 1, 0
      %v637 = vsel %vm509, 1, 0
      %v638 = vsel %vm510, 1, 0
      %v639 = vsel %vm511, 1, 0
      %v640 = vsel %vm512, 1, 0
      %v641 = vsel %vm513, 1, 0
      %v642 = vsel %vm514, 1, 0
      %v643 = vsel %vm515, 1, 0
      %v644 = vsel %vm516, 1, 0
      %v645 = vsel %vm517, 1, 0
      %v646 = vsel %vm518, 1, 0
      %v647 = vsel %vm519, 1, 0
      %v648 = vsel %vm520, 1, 0
      %v649 = vsel %vm521, 1, 0
      %v650 = vsel %vm522, 1, 0
      %v651 = vsel %vm523, 1, 0
      %v652 = vsel %vm524, 1, 0
      %v653 = vsel %vm525, 1, 0
      %v654 = vsel %vm526, 1, 0
      %v655 = vsel %vm527, 1, 0
      %v656 = vsel %vm528, 1, 0
      %v657 = vsel %vm529, 1, 0
      %v658 = vsel %vm530, 1, 0
      %v659 = vsel %vm531, 1, 0
      %v660 = vsel %vm532, 1, 0
      %v661 = vsel %vm533, 1, 0
      %v662 = vsel %vm534, 1, 0
      %v663 = vsel %vm535, 1, 0
      %v664 = vsel %vm536, 1, 0
      %v665 = vsel %vm537, 1, 0
      %v666 = vsel %vm538, 1, 0
      %v667 = vsel %vm539, 1, 0
      %v668 = vsel %vm540, 1, 0
      %v669 = vsel %vm541, 1, 0
      %v670 = vsel %vm542, 1, 0
      %v671 = vsel %vm543, 1, 0
      %v672 = vsel %vm544, 1, 0
      %v673 = vsel %vm545, 1, 0
      %v674 = vsel %vm546, 1, 0
      %v675 = vsel %vm547, 1, 0
      %v676 = vsel %vm548, 1, 0
      %v677 = vsel %vm549, 1, 0
      %v678 = vsel %vm550, 1, 0
      %v679 = vsel %vm551, 1, 0
      %v680 = vsel %vm552, 1, 0
      %v681 = vsel %vm553, 1, 0
      %v682 = vsel %vm554, 1, 0
      %v683 = vsel %vm555, 1, 0
      %v684 = vsel %vm556, 1, 0
      %v685 = vsel %vm557, 1, 0
      %v686 = vsel %vm558, 1, 0
      %v687 = vsel %vm559, 1, 0
      %v688 = vsel %vm560, 1, 0
      %v689 = vsel %vm561, 1, 0
      %v690 = vsel %vm562, 1, 0
      %v691 = vsel %vm563, 1, 0
      %v692 = vsel %vm564, 1, 0
      %v693 = vsel %vm565, 1, 0
      %v694 = vsel %vm566, 1, 0
      %v695 = vsel %vm567, 1, 0
      %v696 = vsel %vm568, 1, 0
      %v697 = vsel %vm569, 1, 0
      %v698 = vsel %vm570, 1, 0
      %v699 = vsel %vm571, 1, 0
      %v700 = vsel %vm572, 1, 0
      %v701 = vsel %vm573, 1, 0
      %v702 = vsel %vm574, 1, 0
      %v703 = vsel %vm575, 1, 0
      %v704 = vsel %vm576, 1, 0
      %v705 = vsel %vm577, 1, 0
      %v706 = vsel %vm578, 1, 0
      %v707 = vsel %vm579, 1, 0
      %v708 = vsel %vm580, 1, 0
      %v709 = vsel %vm581, 1, 0
      %v710 = vsel %vm582, 1, 0
      %v711 = vsel %vm583, 1, 0
      %v712 = vsel %vm584, 1, 0
      %v713 = vsel %vm585, 1, 0
      %v714 = vsel %vm586, 1, 0
      %v715 = vsel %vm587, 1, 0
      %v716 = vsel %vm588, 1, 0
      %v717 = vsel %vm589, 1, 0
      %v718 = vsel %vm590, 1, 0
      %v719 = vsel %vm591, 1, 0
      %v720 = vsel %vm592, 1, 0
      %v721 = vsel %vm593, 1, 0
      %v722 = vsel %vm594, 1, 0
      %v723 = vsel %vm595, 1, 0
      %v724 = vsel %vm596, 1, 0
      %v725 = vsel %vm597, 1, 0
      %v726 = vsel %vm598, 1, 0
      %v727 = vsel %vm599, 1, 0
      %v728 = vsel %vm600, 1, 0
      %v729 = vsel %vm601, 1, 0
      %v730 = vsel %vm602, 1, 0
      %v731 = vsel %vm603, 1, 0
      %v732 = vsel %vm604, 1, 0
      %v733 = vsel %vm605, 1, 0
      %v734 = vsel %vm606, 1, 0
      %v735 = vsel %vm607, 1, 0
      %v736 = vsel %vm608, 1, 0
      %v737 = vsel %vm609, 1, 0
      %v738 = vcvt.s32.f32 %v610
      %v739 = vcvt.s32.f32 %v611
      %v740 = vcvt.s32.f32 %v612
      %v741 = vcvt.s32.f32 %v613
      %v742 = vcvt.s32.f32 %v614
      %v743 = vcvt.s32.f32 %v615
      %v744 = vcvt.s32.f32 %v616
      %v745 = vcvt.s32.f32 %v617
      %v746 = vcvt.s32.f32 %v618
      %v747 = vcvt.s32.f32 %v619
      %v748 = vcvt.s32.f32 %v620
      %v749 = vcvt.s32.f32 %v621
      %v750 = vcvt.s32.f32 %v622
      %v751 = vcvt.s32.f32 %v623
      %v752 = vcvt.s32.f32 %v624
      %v753 = vcvt.s32.f32 %v625
      %v754 = vcvt.s32.f32 %v626
      %v755 = vcvt.s32.f32 %v627
      %v756 = vcvt.s32.f32 %v628
      %v757 = vcvt.s32.f32 %v629
      %v758 = vcvt.s32.f32 %v630
      %v759 = vcvt.s32.f32 %v631
      %v760 = vcvt.s32.f32 %v632
      %v761 = vcvt.s32.f32 %v633
      %v762 = vcvt.s32.f32 %v634
      %v763 = vcvt.s32.f32 %v635
      %v764 = vcvt.s32.f32 %v636
      %v765 = vcvt.s32.f32 %v637
      %v766 = vcvt.s32.f32 %v638
      %v767 = vcvt.s32.f32 %v639
      %v768 = vcvt.s32.f32 %v640
      %v769 = vcvt.s32.f32 %v641
      %v770 = vcvt.s32.f32 %v642
      %v771 = vcvt.s32.f32 %v643
      %v772 = vcvt.s32.f32 %v644
      %v773 = vcvt.s32.f32 %v645
      %v774 = vcvt.s32.f32 %v646
      %v775 = vcvt.s32.f32 %v647
      %v776 = vcvt.s32.f32 %v648
      %v777 = vcvt.s32.f32 %v649
      %v778 = vcvt.s32.f32 %v650
      %v779 = vcvt.s32.f32 %v651
      %v780 = vcvt.s32.f32 %v652
      %v781 = vcvt.s32.f32 %v653
      %v782 = vcvt.s32.f32 %v654
      %v783 = vcvt.s32.f32 %v655
      %v784 = vcvt.s32.f32 %v656
      %v785 = vcvt.s32.f32 %v657
      %v786 = vcvt.s32.f32 %v658
      %v787 = vcvt.s32.f32 %v659
      %v788 = vcvt.s32.f32 %v660
      %v789 = vcvt.s32.f32 %v661
      %v790 = vcvt.s32.f32 %v662
      %v791 = vcvt.s32.f32 %v663
      %v792 = vcvt.s32.f32 %v664
      %v793 = vcvt.s32.f32 %v665
      %v794 = vcvt.s32.f32 %v666
      %v795 = vcvt.s32.f32 %v667
      %v796 = vcvt.s32.f32 %v668
      %v797 = vcvt.s32.f32 %v669
      %v798 = vcvt.s32.f32 %v670
      %v799 = vcvt.s32.f32 %v671
      %v800 = vcvt.s32.f32 %v672
      %v801 = vcvt.s32.f32 %v673
      %v802 = vcvt.s32.f32 %v674
      %v803 = vcvt.s32.f32 %v675
      %v804 = vcvt.s32.f32 %v676
      %v805 = vcvt.s32.f32 %v677
      %v806 = vcvt.s32.f32 %v678
      %v807 = vcvt.s32.f32 %v679
      %v808 = vcvt.s32.f32 %v680
      %v809 = vcvt.s32.f32 %v681
      %v810 = vcvt.s32.f32 %v682
      %v811 = vcvt.s32.f32 %v683
      %v812 = vcvt.s32.f32 %v684
      %v813 = vcvt.s32.f32 %v685
      %v814 = vcvt.s32.f32 %v686
      %v815 = vcvt.s32.f32 %v687
      %v816 = vcvt.s32.f32 %v688
      %v817 = vcvt.s32.f32 %v689
      %v818 = vcvt.s32.f32 %v690
      %v819 = vcvt.s32.f32 %v691
      %v820 = vcvt.s32.f32 %v692
      %v821 = vcvt.s32.f32 %v693
      %v822 = vcvt.s32.f32 %v694
      %v823 = vcvt.s32.f32 %v695
      %v824 = vcvt.s32.f32 %v696
      %v825 = vcvt.s32.f32 %v697
      %v826 = vcvt.s32.f32 %v698
      %v827 = vcvt.s32.f32 %v699
      %v828 = vcvt.s32.f32 %v700
      %v829 = vcvt.s32.f32 %v701
      %v830 = vcvt.s32.f32 %v702
      %v831 = vcvt.s32.f32 %v703
      %v832 = vcvt.s32.f32 %v704
      %v833 = vcvt.s32.f32 %v705
      %v834 = vcvt.s32.f32 %v706
      %v835 = vcvt.s32.f32 %v707
      %v836 = vcvt.s32.f32 %v708
      %v837 = vcvt.s32.f32 %v709
      %v838 = vcvt.s32.f32 %v710
      %v839 = vcvt.s32.f32 %v711
      %v840 = vcvt.s32.f32 %v712
      %v841 = vcvt.s32.f32 %v713
      %v842 = vcvt.s32.f32 %v714
      %v843 = vcvt.s32.f32 %v715
      %v844 = vcvt.s32.f32 %v716
      %v845 = vcvt.s32.f32 %v717
      %v846 = vcvt.s32.f32 %v718
      %v847 = vcvt.s32.f32 %v719
      %v848 = vcvt.s32.f32 %v720
      %v849 = vcvt.s32.f32 %v721
      %v850 = vcvt.s32.f32 %v722
      %v851 = vcvt.s32.f32 %v723
      %v852 = vcvt.s32.f32 %v724
      %v853 = vcvt.s32.f32 %v725
      %v854 = vcvt.s32.f32 %v726
      %v855 = vcvt.s32.f32 %v727
      %v856 = vcvt.s32.f32 %v728
      %v857 = vcvt.s32.f32 %v729
      %v858 = vcvt.s32.f32 %v730
      %v859 = vcvt.s32.f32 %v731
      %v860 = vcvt.s32.f32 %v732
      %v861 = vcvt.s32.f32 %v733
      %v862 = vcvt.s32.f32 %v734
      %v863 = vcvt.s32.f32 %v735
      %v864 = vcvt.s32.f32 %v736
      %v865 = vcvt.s32.f32 %v737
      %v866 = vld [vmem:[%s383] sm:$0xff]
      %v867 = vld [vmem:[%s383 + $0x8] sm:$0xff]
      %v868 = vlaneseq
      %v869 = vshrl.u32 %v868, 7
      %v870 = vsub.s32 0, %v869
      %v871 = vrot.slane %v866, %v870
      %v872 = vlaneseq
      %v873 = vshrl.u32 %v872, 7
      %v874 = vsub.s32 1, %v873
      %v875 = vrot.slane %v866, %v874
      %v876 = vlaneseq
      %v877 = vshrl.u32 %v876, 7
      %v878 = vsub.s32 2, %v877
      %v879 = vrot.slane %v866, %v878
      %v880 = vlaneseq
      %v881 = vshrl.u32 %v880, 7
      %v882 = vsub.s32 3, %v881
      %v883 = vrot.slane %v866, %v882
      %v884 = vlaneseq
      %v885 = vshrl.u32 %v884, 7
      %v886 = vsub.s32 4, %v885
      %v887 = vrot.slane %v866, %v886
      %v888 = vlaneseq
      %v889 = vshrl.u32 %v888, 7
      %v890 = vsub.s32 5, %v889
      %v891 = vrot.slane %v866, %v890
      %v892 = vlaneseq
      %v893 = vshrl.u32 %v892, 7
      %v894 = vsub.s32 6, %v893
      %v895 = vrot.slane %v866, %v894
      %v896 = vlaneseq
      %v897 = vshrl.u32 %v896, 7
      %v898 = vsub.s32 7, %v897
      %v899 = vrot.slane %v866, %v898
      %v900 = vlaneseq
      %v901 = vshrl.u32 %v900, 7
      %v902 = vsub.s32 0, %v901
      %v903 = vrot.slane %v867, %v902
      %v904 = vlaneseq
      %v905 = vshrl.u32 %v904, 7
      %v906 = vsub.s32 1, %v905
      %v907 = vrot.slane %v867, %v906
      %v908 = vlaneseq
      %v909 = vshrl.u32 %v908, 7
      %v910 = vsub.s32 2, %v909
      %v911 = vrot.slane %v867, %v910
      %v912 = vlaneseq
      %v913 = vshrl.u32 %v912, 7
      %v914 = vsub.s32 3, %v913
      %v915 = vrot.slane %v867, %v914
      %v916 = vlaneseq
      %v917 = vshrl.u32 %v916, 7
      %v918 = vsub.s32 4, %v917
      %v919 = vrot.slane %v867, %v918
      %v920 = vlaneseq
      %v921 = vshrl.u32 %v920, 7
      %v922 = vsub.s32 5, %v921
      %v923 = vrot.slane %v867, %v922
      %v924 = vlaneseq
      %v925 = vshrl.u32 %v924, 7
      %v926 = vsub.s32 6, %v925
      %v927 = vrot.slane %v867, %v926
      %v928 = vlaneseq
      %v929 = vshrl.u32 %v928, 7
      %v930 = vsub.s32 7, %v929
      %v931 = vrot.slane %v867, %v930
      %vm932 = vcmp.eq.s32.totalorder %v871, %v408
      %vm933 = vcmp.eq.s32.totalorder %v875, %v408
      %vm934 = vcmp.eq.s32.totalorder %v879, %v408
      %vm935 = vcmp.eq.s32.totalorder %v883, %v408
      %vm936 = vcmp.eq.s32.totalorder %v887, %v408
      %vm937 = vcmp.eq.s32.totalorder %v891, %v408
      %vm938 = vcmp.eq.s32.totalorder %v895, %v408
      %vm939 = vcmp.eq.s32.totalorder %v899, %v408
      %vm940 = vcmp.eq.s32.totalorder %v903, %v408
      %vm941 = vcmp.eq.s32.totalorder %v907, %v408
      %vm942 = vcmp.eq.s32.totalorder %v911, %v408
      %vm943 = vcmp.eq.s32.totalorder %v915, %v408
      %vm944 = vcmp.eq.s32.totalorder %v919, %v408
      %vm945 = vcmp.eq.s32.totalorder %v923, %v408
      %vm946 = vcmp.eq.s32.totalorder %v927, %v408
      %vm947 = vcmp.eq.s32.totalorder %v931, %v408
      %vm948 = vcmp.eq.s32.totalorder %v871, %v409
      %vm949 = vcmp.eq.s32.totalorder %v875, %v409
      %vm950 = vcmp.eq.s32.totalorder %v879, %v409
      %vm951 = vcmp.eq.s32.totalorder %v883, %v409
      %vm952 = vcmp.eq.s32.totalorder %v887, %v409
      %vm953 = vcmp.eq.s32.totalorder %v891, %v409
      %vm954 = vcmp.eq.s32.totalorder %v895, %v409
      %vm955 = vcmp.eq.s32.totalorder %v899, %v409
      %vm956 = vcmp.eq.s32.totalorder %v903, %v409
      %vm957 = vcmp.eq.s32.totalorder %v907, %v409
      %vm958 = vcmp.eq.s32.totalorder %v911, %v409
      %vm959 = vcmp.eq.s32.totalorder %v915, %v409
      %vm960 = vcmp.eq.s32.totalorder %v919, %v409
      %vm961 = vcmp.eq.s32.totalorder %v923, %v409
      %vm962 = vcmp.eq.s32.totalorder %v927, %v409
      %vm963 = vcmp.eq.s32.totalorder %v931, %v409
      %vm964 = vcmp.eq.s32.totalorder %v871, %v410
      %vm965 = vcmp.eq.s32.totalorder %v875, %v410
      %vm966 = vcmp.eq.s32.totalorder %v879, %v410
      %vm967 = vcmp.eq.s32.totalorder %v883, %v410
      %vm968 = vcmp.eq.s32.totalorder %v887, %v410
      %vm969 = vcmp.eq.s32.totalorder %v891, %v410
      %vm970 = vcmp.eq.s32.totalorder %v895, %v410
      %vm971 = vcmp.eq.s32.totalorder %v899, %v410
      %vm972 = vcmp.eq.s32.totalorder %v903, %v410
      %vm973 = vcmp.eq.s32.totalorder %v907, %v410
      %vm974 = vcmp.eq.s32.totalorder %v911, %v410
      %vm975 = vcmp.eq.s32.totalorder %v915, %v410
      %vm976 = vcmp.eq.s32.totalorder %v919, %v410
      %vm977 = vcmp.eq.s32.totalorder %v923, %v410
      %vm978 = vcmp.eq.s32.totalorder %v927, %v410
      %vm979 = vcmp.eq.s32.totalorder %v931, %v410
      %vm980 = vcmp.eq.s32.totalorder %v871, %v411
      %vm981 = vcmp.eq.s32.totalorder %v875, %v411
      %vm982 = vcmp.eq.s32.totalorder %v879, %v411
      %vm983 = vcmp.eq.s32.totalorder %v883, %v411
      %vm984 = vcmp.eq.s32.totalorder %v887, %v411
      %vm985 = vcmp.eq.s32.totalorder %v891, %v411
      %vm986 = vcmp.eq.s32.totalorder %v895, %v411
      %vm987 = vcmp.eq.s32.totalorder %v899, %v411
      %vm988 = vcmp.eq.s32.totalorder %v903, %v411
      %vm989 = vcmp.eq.s32.totalorder %v907, %v411
      %vm990 = vcmp.eq.s32.totalorder %v911, %v411
      %vm991 = vcmp.eq.s32.totalorder %v915, %v411
      %vm992 = vcmp.eq.s32.totalorder %v919, %v411
      %vm993 = vcmp.eq.s32.totalorder %v923, %v411
      %vm994 = vcmp.eq.s32.totalorder %v927, %v411
      %vm995 = vcmp.eq.s32.totalorder %v931, %v411
      %vm996 = vcmp.eq.s32.totalorder %v871, %v412
      %vm997 = vcmp.eq.s32.totalorder %v875, %v412
      %vm998 = vcmp.eq.s32.totalorder %v879, %v412
      %vm999 = vcmp.eq.s32.totalorder %v883, %v412
      %vm1000 = vcmp.eq.s32.totalorder %v887, %v412
      %vm1001 = vcmp.eq.s32.totalorder %v891, %v412
      %vm1002 = vcmp.eq.s32.totalorder %v895, %v412
      %vm1003 = vcmp.eq.s32.totalorder %v899, %v412
      %vm1004 = vcmp.eq.s32.totalorder %v903, %v412
      %vm1005 = vcmp.eq.s32.totalorder %v907, %v412
      %vm1006 = vcmp.eq.s32.totalorder %v911, %v412
      %vm1007 = vcmp.eq.s32.totalorder %v915, %v412
      %vm1008 = vcmp.eq.s32.totalorder %v919, %v412
      %vm1009 = vcmp.eq.s32.totalorder %v923, %v412
      %vm1010 = vcmp.eq.s32.totalorder %v927, %v412
      %vm1011 = vcmp.eq.s32.totalorder %v931, %v412
      %vm1012 = vcmp.eq.s32.totalorder %v871, %v413
      %vm1013 = vcmp.eq.s32.totalorder %v875, %v413
      %vm1014 = vcmp.eq.s32.totalorder %v879, %v413
      %vm1015 = vcmp.eq.s32.totalorder %v883, %v413
      %vm1016 = vcmp.eq.s32.totalorder %v887, %v413
      %vm1017 = vcmp.eq.s32.totalorder %v891, %v413
      %vm1018 = vcmp.eq.s32.totalorder %v895, %v413
      %vm1019 = vcmp.eq.s32.totalorder %v899, %v413
      %vm1020 = vcmp.eq.s32.totalorder %v903, %v413
      %vm1021 = vcmp.eq.s32.totalorder %v907, %v413
      %vm1022 = vcmp.eq.s32.totalorder %v911, %v413
      %vm1023 = vcmp.eq.s32.totalorder %v915, %v413
      %vm1024 = vcmp.eq.s32.totalorder %v919, %v413
      %vm1025 = vcmp.eq.s32.totalorder %v923, %v413
      %vm1026 = vcmp.eq.s32.totalorder %v927, %v413
      %vm1027 = vcmp.eq.s32.totalorder %v931, %v413
      %vm1028 = vcmp.eq.s32.totalorder %v871, %v414
      %vm1029 = vcmp.eq.s32.totalorder %v875, %v414
      %vm1030 = vcmp.eq.s32.totalorder %v879, %v414
      %vm1031 = vcmp.eq.s32.totalorder %v883, %v414
      %vm1032 = vcmp.eq.s32.totalorder %v887, %v414
      %vm1033 = vcmp.eq.s32.totalorder %v891, %v414
      %vm1034 = vcmp.eq.s32.totalorder %v895, %v414
      %vm1035 = vcmp.eq.s32.totalorder %v899, %v414
      %vm1036 = vcmp.eq.s32.totalorder %v903, %v414
      %vm1037 = vcmp.eq.s32.totalorder %v907, %v414
      %vm1038 = vcmp.eq.s32.totalorder %v911, %v414
      %vm1039 = vcmp.eq.s32.totalorder %v915, %v414
      %vm1040 = vcmp.eq.s32.totalorder %v919, %v414
      %vm1041 = vcmp.eq.s32.totalorder %v923, %v414
      %vm1042 = vcmp.eq.s32.totalorder %v927, %v414
      %vm1043 = vcmp.eq.s32.totalorder %v931, %v414
      %vm1044 = vcmp.eq.s32.totalorder %v871, %v415
      %vm1045 = vcmp.eq.s32.totalorder %v875, %v415
      %vm1046 = vcmp.eq.s32.totalorder %v879, %v415
      %vm1047 = vcmp.eq.s32.totalorder %v883, %v415
      %vm1048 = vcmp.eq.s32.totalorder %v887, %v415
      %vm1049 = vcmp.eq.s32.totalorder %v891, %v415
      %vm1050 = vcmp.eq.s32.totalorder %v895, %v415
      %vm1051 = vcmp.eq.s32.totalorder %v899, %v415
      %vm1052 = vcmp.eq.s32.totalorder %v903, %v415
      %vm1053 = vcmp.eq.s32.totalorder %v907, %v415
      %vm1054 = vcmp.eq.s32.totalorder %v911, %v415
      %vm1055 = vcmp.eq.s32.totalorder %v915, %v415
      %vm1056 = vcmp.eq.s32.totalorder %v919, %v415
      %vm1057 = vcmp.eq.s32.totalorder %v923, %v415
      %vm1058 = vcmp.eq.s32.totalorder %v927, %v415
      %vm1059 = vcmp.eq.s32.totalorder %v931, %v415
      %v1060 = vsel %vm932, 1, 0
      %v1061 = vsel %vm933, 1, 0
      %v1062 = vsel %vm934, 1, 0
      %v1063 = vsel %vm935, 1, 0
      %v1064 = vsel %vm936, 1, 0
      %v1065 = vsel %vm937, 1, 0
      %v1066 = vsel %vm938, 1, 0
      %v1067 = vsel %vm939, 1, 0
      %v1068 = vsel %vm940, 1, 0
      %v1069 = vsel %vm941, 1, 0
      %v1070 = vsel %vm942, 1, 0
      %v1071 = vsel %vm943, 1, 0
      %v1072 = vsel %vm944, 1, 0
      %v1073 = vsel %vm945, 1, 0
      %v1074 = vsel %vm946, 1, 0
      %v1075 = vsel %vm947, 1, 0
      %v1076 = vsel %vm948, 1, 0
      %v1077 = vsel %vm949, 1, 0
      %v1078 = vsel %vm950, 1, 0
      %v1079 = vsel %vm951, 1, 0
      %v1080 = vsel %vm952, 1, 0
      %v1081 = vsel %vm953, 1, 0
      %v1082 = vsel %vm954, 1, 0
      %v1083 = vsel %vm955, 1, 0
      %v1084 = vsel %vm956, 1, 0
      %v1085 = vsel %vm957, 1, 0
      %v1086 = vsel %vm958, 1, 0
      %v1087 = vsel %vm959, 1, 0
      %v1088 = vsel %vm960, 1, 0
      %v1089 = vsel %vm961, 1, 0
      %v1090 = vsel %vm962, 1, 0
      %v1091 = vsel %vm963, 1, 0
      %v1092 = vsel %vm964, 1, 0
      %v1093 = vsel %vm965, 1, 0
      %v1094 = vsel %vm966, 1, 0
      %v1095 = vsel %vm967, 1, 0
      %v1096 = vsel %vm968, 1, 0
      %v1097 = vsel %vm969, 1, 0
      %v1098 = vsel %vm970, 1, 0
      %v1099 = vsel %vm971, 1, 0
      %v1100 = vsel %vm972, 1, 0
      %v1101 = vsel %vm973, 1, 0
      %v1102 = vsel %vm974, 1, 0
      %v1103 = vsel %vm975, 1, 0
      %v1104 = vsel %vm976, 1, 0
      %v1105 = vsel %vm977, 1, 0
      %v1106 = vsel %vm978, 1, 0
      %v1107 = vsel %vm979, 1, 0
      %v1108 = vsel %vm980, 1, 0
      %v1109 = vsel %vm981, 1, 0
      %v1110 = vsel %vm982, 1, 0
      %v1111 = vsel %vm983, 1, 0
      %v1112 = vsel %vm984, 1, 0
      %v1113 = vsel %vm985, 1, 0
      %v1114 = vsel %vm986, 1, 0
      %v1115 = vsel %vm987, 1, 0
      %v1116 = vsel %vm988, 1, 0
      %v1117 = vsel %vm989, 1, 0
      %v1118 = vsel %vm990, 1, 0
      %v1119 = vsel %vm991, 1, 0
      %v1120 = vsel %vm992, 1, 0
      %v1121 = vsel %vm993, 1, 0
      %v1122 = vsel %vm994, 1, 0
      %v1123 = vsel %vm995, 1, 0
      %v1124 = vsel %vm996, 1, 0
      %v1125 = vsel %vm997, 1, 0
      %v1126 = vsel %vm998, 1, 0
      %v1127 = vsel %vm999, 1, 0
      %v1128 = vsel %vm1000, 1, 0
      %v1129 = vsel %vm1001, 1, 0
      %v1130 = vsel %vm1002, 1, 0
      %v1131 = vsel %vm1003, 1, 0
      %v1132 = vsel %vm1004, 1, 0
      %v1133 = vsel %vm1005, 1, 0
      %v1134 = vsel %vm1006, 1, 0
      %v1135 = vsel %vm1007, 1, 0
      %v1136 = vsel %vm1008, 1, 0
      %v1137 = vsel %vm1009, 1, 0
      %v1138 = vsel %vm1010, 1, 0
      %v1139 = vsel %vm1011, 1, 0
      %v1140 = vsel %vm1012, 1, 0
      %v1141 = vsel %vm1013, 1, 0
      %v1142 = vsel %vm1014, 1, 0
      %v1143 = vsel %vm1015, 1, 0
      %v1144 = vsel %vm1016, 1, 0
      %v1145 = vsel %vm1017, 1, 0
      %v1146 = vsel %vm1018, 1, 0
      %v1147 = vsel %vm1019, 1, 0
      %v1148 = vsel %vm1020, 1, 0
      %v1149 = vsel %vm1021, 1, 0
      %v1150 = vsel %vm1022, 1, 0
      %v1151 = vsel %vm1023, 1, 0
      %v1152 = vsel %vm1024, 1, 0
      %v1153 = vsel %vm1025, 1, 0
      %v1154 = vsel %vm1026, 1, 0
      %v1155 = vsel %vm1027, 1, 0
      %v1156 = vsel %vm1028, 1, 0
      %v1157 = vsel %vm1029, 1, 0
      %v1158 = vsel %vm1030, 1, 0
      %v1159 = vsel %vm1031, 1, 0
      %v1160 = vsel %vm1032, 1, 0
      %v1161 = vsel %vm1033, 1, 0
      %v1162 = vsel %vm1034, 1, 0
      %v1163 = vsel %vm1035, 1, 0
      %v1164 = vsel %vm1036, 1, 0
      %v1165 = vsel %vm1037, 1, 0
      %v1166 = vsel %vm1038, 1, 0
      %v1167 = vsel %vm1039, 1, 0
      %v1168 = vsel %vm1040, 1, 0
      %v1169 = vsel %vm1041, 1, 0
      %v1170 = vsel %vm1042, 1, 0
      %v1171 = vsel %vm1043, 1, 0
      %v1172 = vsel %vm1044, 1, 0
      %v1173 = vsel %vm1045, 1, 0
      %v1174 = vsel %vm1046, 1, 0
      %v1175 = vsel %vm1047, 1, 0
      %v1176 = vsel %vm1048, 1, 0
      %v1177 = vsel %vm1049, 1, 0
      %v1178 = vsel %vm1050, 1, 0
      %v1179 = vsel %vm1051, 1, 0
      %v1180 = vsel %vm1052, 1, 0
      %v1181 = vsel %vm1053, 1, 0
      %v1182 = vsel %vm1054, 1, 0
      %v1183 = vsel %vm1055, 1, 0
      %v1184 = vsel %vm1056, 1, 0
      %v1185 = vsel %vm1057, 1, 0
      %v1186 = vsel %vm1058, 1, 0
      %v1187 = vsel %vm1059, 1, 0
      %v1188 = vcvt.s32.f32 %v1060
      %v1189 = vcvt.s32.f32 %v1061
      %v1190 = vcvt.s32.f32 %v1062
      %v1191 = vcvt.s32.f32 %v1063
      %v1192 = vcvt.s32.f32 %v1064
      %v1193 = vcvt.s32.f32 %v1065
      %v1194 = vcvt.s32.f32 %v1066
      %v1195 = vcvt.s32.f32 %v1067
      %v1196 = vcvt.s32.f32 %v1068
      %v1197 = vcvt.s32.f32 %v1069
      %v1198 = vcvt.s32.f32 %v1070
      %v1199 = vcvt.s32.f32 %v1071
      %v1200 = vcvt.s32.f32 %v1072
      %v1201 = vcvt.s32.f32 %v1073
      %v1202 = vcvt.s32.f32 %v1074
      %v1203 = vcvt.s32.f32 %v1075
      %v1204 = vcvt.s32.f32 %v1076
      %v1205 = vcvt.s32.f32 %v1077
      %v1206 = vcvt.s32.f32 %v1078
      %v1207 = vcvt.s32.f32 %v1079
      %v1208 = vcvt.s32.f32 %v1080
      %v1209 = vcvt.s32.f32 %v1081
      %v1210 = vcvt.s32.f32 %v1082
      %v1211 = vcvt.s32.f32 %v1083
      %v1212 = vcvt.s32.f32 %v1084
      %v1213 = vcvt.s32.f32 %v1085
      %v1214 = vcvt.s32.f32 %v1086
      %v1215 = vcvt.s32.f32 %v1087
      %v1216 = vcvt.s32.f32 %v1088
      %v1217 = vcvt.s32.f32 %v1089
      %v1218 = vcvt.s32.f32 %v1090
      %v1219 = vcvt.s32.f32 %v1091
      %v1220 = vcvt.s32.f32 %v1092
      %v1221 = vcvt.s32.f32 %v1093
      %v1222 = vcvt.s32.f32 %v1094
      %v1223 = vcvt.s32.f32 %v1095
      %v1224 = vcvt.s32.f32 %v1096
      %v1225 = vcvt.s32.f32 %v1097
      %v1226 = vcvt.s32.f32 %v1098
      %v1227 = vcvt.s32.f32 %v1099
      %v1228 = vcvt.s32.f32 %v1100
      %v1229 = vcvt.s32.f32 %v1101
      %v1230 = vcvt.s32.f32 %v1102
      %v1231 = vcvt.s32.f32 %v1103
      %v1232 = vcvt.s32.f32 %v1104
      %v1233 = vcvt.s32.f32 %v1105
      %v1234 = vcvt.s32.f32 %v1106
      %v1235 = vcvt.s32.f32 %v1107
      %v1236 = vcvt.s32.f32 %v1108
      %v1237 = vcvt.s32.f32 %v1109
      %v1238 = vcvt.s32.f32 %v1110
      %v1239 = vcvt.s32.f32 %v1111
      %v1240 = vcvt.s32.f32 %v1112
      %v1241 = vcvt.s32.f32 %v1113
      %v1242 = vcvt.s32.f32 %v1114
      %v1243 = vcvt.s32.f32 %v1115
      %v1244 = vcvt.s32.f32 %v1116
      %v1245 = vcvt.s32.f32 %v1117
      %v1246 = vcvt.s32.f32 %v1118
      %v1247 = vcvt.s32.f32 %v1119
      %v1248 = vcvt.s32.f32 %v1120
      %v1249 = vcvt.s32.f32 %v1121
      %v1250 = vcvt.s32.f32 %v1122
      %v1251 = vcvt.s32.f32 %v1123
      %v1252 = vcvt.s32.f32 %v1124
      %v1253 = vcvt.s32.f32 %v1125
      %v1254 = vcvt.s32.f32 %v1126
      %v1255 = vcvt.s32.f32 %v1127
      %v1256 = vcvt.s32.f32 %v1128
      %v1257 = vcvt.s32.f32 %v1129
      %v1258 = vcvt.s32.f32 %v1130
      %v1259 = vcvt.s32.f32 %v1131
      %v1260 = vcvt.s32.f32 %v1132
      %v1261 = vcvt.s32.f32 %v1133
      %v1262 = vcvt.s32.f32 %v1134
      %v1263 = vcvt.s32.f32 %v1135
      %v1264 = vcvt.s32.f32 %v1136
      %v1265 = vcvt.s32.f32 %v1137
      %v1266 = vcvt.s32.f32 %v1138
      %v1267 = vcvt.s32.f32 %v1139
      %v1268 = vcvt.s32.f32 %v1140
      %v1269 = vcvt.s32.f32 %v1141
      %v1270 = vcvt.s32.f32 %v1142
      %v1271 = vcvt.s32.f32 %v1143
      %v1272 = vcvt.s32.f32 %v1144
      %v1273 = vcvt.s32.f32 %v1145
      %v1274 = vcvt.s32.f32 %v1146
      %v1275 = vcvt.s32.f32 %v1147
      %v1276 = vcvt.s32.f32 %v1148
      %v1277 = vcvt.s32.f32 %v1149
      %v1278 = vcvt.s32.f32 %v1150
      %v1279 = vcvt.s32.f32 %v1151
      %v1280 = vcvt.s32.f32 %v1152
      %v1281 = vcvt.s32.f32 %v1153
      %v1282 = vcvt.s32.f32 %v1154
      %v1283 = vcvt.s32.f32 %v1155
      %v1284 = vcvt.s32.f32 %v1156
      %v1285 = vcvt.s32.f32 %v1157
      %v1286 = vcvt.s32.f32 %v1158
      %v1287 = vcvt.s32.f32 %v1159
      %v1288 = vcvt.s32.f32 %v1160
      %v1289 = vcvt.s32.f32 %v1161
      %v1290 = vcvt.s32.f32 %v1162
      %v1291 = vcvt.s32.f32 %v1163
      %v1292 = vcvt.s32.f32 %v1164
      %v1293 = vcvt.s32.f32 %v1165
      %v1294 = vcvt.s32.f32 %v1166
      %v1295 = vcvt.s32.f32 %v1167
      %v1296 = vcvt.s32.f32 %v1168
      %v1297 = vcvt.s32.f32 %v1169
      %v1298 = vcvt.s32.f32 %v1170
      %v1299 = vcvt.s32.f32 %v1171
      %v1300 = vcvt.s32.f32 %v1172
      %v1301 = vcvt.s32.f32 %v1173
      %v1302 = vcvt.s32.f32 %v1174
      %v1303 = vcvt.s32.f32 %v1175
      %v1304 = vcvt.s32.f32 %v1176
      %v1305 = vcvt.s32.f32 %v1177
      %v1306 = vcvt.s32.f32 %v1178
      %v1307 = vcvt.s32.f32 %v1179
      %v1308 = vcvt.s32.f32 %v1180
      %v1309 = vcvt.s32.f32 %v1181
      %v1310 = vcvt.s32.f32 %v1182
      %v1311 = vcvt.s32.f32 %v1183
      %v1312 = vcvt.s32.f32 %v1184
      %v1313 = vcvt.s32.f32 %v1185
      %v1314 = vcvt.s32.f32 %v1186
      %v1315 = vcvt.s32.f32 %v1187
      %v1316 = vld [vmem:[%s3] sm:$0xff]
      %v1317 = vld [vmem:[%s3 + $0x8] sm:$0xff]
      %v1318 = vld [vmem:[%s3 + $0x10] sm:$0xff]
      %v1319 = vld [vmem:[%s3 + $0x18] sm:$0xff]
      %v1320 = vld [vmem:[%s3 + $0x20] sm:$0x1]
      %v1321 = vld [vmem:[%s4] sm:$0xff]
      %v1322 = vld [vmem:[%s4 + $0x8] sm:$0xff]
      %v1323 = vld [vmem:[%s4 + $0x10] sm:$0xff]
      %v1324 = vld [vmem:[%s4 + $0x18] sm:$0xff]
      %v1325 = vld [vmem:[%s4 + $0x20] sm:$0x1]
      %v1326 = vld [vmem:[%s373] sm:$0xff]
      %v1327 = vld [vmem:[%s373 + $0x8] sm:$0xff]
      %v1328 = vld [vmem:[%s373 + $0x10] sm:$0xff]
      %v1329 = vld [vmem:[%s373 + $0x18] sm:$0xff]
      %v1330 = vld [vmem:[%s373 + $0x20] sm:$0xff]
      %v1331 = vld [vmem:[%s373 + $0x28] sm:$0xff]
      %v1332 = vld [vmem:[%s373 + $0x30] sm:$0xff]
      %v1333 = vld [vmem:[%s373 + $0x38] sm:$0xff]
      %v1334 = vld [vmem:[%s373 + $0x40] sm:$0xff]
      %v1335 = vld [vmem:[%s373 + $0x48] sm:$0xff]
      %v1336 = vld [vmem:[%s373 + $0x50] sm:$0xff]
      %v1337 = vld [vmem:[%s373 + $0x58] sm:$0xff]
      %v1338 = vld [vmem:[%s373 + $0x60] sm:$0xff]
      %v1339 = vld [vmem:[%s373 + $0x68] sm:$0xff]
      %v1340 = vld [vmem:[%s373 + $0x70] sm:$0xff]
      %v1341 = vld [vmem:[%s373 + $0x78] sm:$0xff]
      %v1342 = vld [vmem:[%s373 + $0x80] sm:$0xff]
      %v1343 = vld [vmem:[%s373 + $0x88] sm:$0xff]
      %v1344 = vld [vmem:[%s373 + $0x90] sm:$0xff]
      %v1345 = vld [vmem:[%s373 + $0x98] sm:$0xff]
      %v1346 = vld [vmem:[%s373 + $0xa0] sm:$0xff]
      %v1347 = vld [vmem:[%s373 + $0xa8] sm:$0xff]
      %v1348 = vld [vmem:[%s373 + $0xb0] sm:$0xff]
      %v1349 = vld [vmem:[%s373 + $0xb8] sm:$0xff]
      %v1350 = vld [vmem:[%s373 + $0xc0] sm:$0xff]
      %v1351 = vld [vmem:[%s373 + $0xc8] sm:$0xff]
      %v1352 = vld [vmem:[%s373 + $0xd0] sm:$0xff]
      %v1353 = vld [vmem:[%s373 + $0xd8] sm:$0xff]
      %v1354 = vld [vmem:[%s373 + $0xe0] sm:$0xff]
      %v1355 = vld [vmem:[%s373 + $0xe8] sm:$0xff]
      %v1356 = vld [vmem:[%s373 + $0xf0] sm:$0xff]
      %v1357 = vld [vmem:[%s373 + $0xf8] sm:$0xff]
      %v1358 = vld [vmem:[%s373 + $0x100] sm:$0xff]
      %v1359 = vld [vmem:[%s373 + $0x108] sm:$0xff]
      %v1360 = vld [vmem:[%s373 + $0x110] sm:$0xff]
      %v1361 = vld [vmem:[%s373 + $0x118] sm:$0xff]
      %v1362 = vld [vmem:[%s373 + $0x120] sm:$0xff]
      %v1363 = vld [vmem:[%s373 + $0x128] sm:$0xff]
      %v1364 = vld [vmem:[%s373 + $0x130] sm:$0xff]
      %v1365 = vld [vmem:[%s373 + $0x138] sm:$0xff]
      %v1366 = vld [vmem:[%s373 + $0x140] sm:$0xff]
      %v1367 = vld [vmem:[%s373 + $0x148] sm:$0xff]
      %v1368 = vld [vmem:[%s373 + $0x150] sm:$0xff]
      %v1369 = vld [vmem:[%s373 + $0x158] sm:$0xff]
      %v1370 = vld [vmem:[%s373 + $0x160] sm:$0xff]
      %v1371 = vld [vmem:[%s373 + $0x168] sm:$0xff]
      %v1372 = vld [vmem:[%s373 + $0x170] sm:$0xff]
      %v1373 = vld [vmem:[%s373 + $0x178] sm:$0xff]
      %v1374 = vld [vmem:[%s373 + $0x180] sm:$0xff]
      %v1375 = vld [vmem:[%s373 + $0x188] sm:$0xff]
      %v1376 = vld [vmem:[%s373 + $0x190] sm:$0xff]
      %v1377 = vld [vmem:[%s373 + $0x198] sm:$0xff]
      %v1378 = vld [vmem:[%s373 + $0x1a0] sm:$0xff]
      %v1379 = vld [vmem:[%s373 + $0x1a8] sm:$0xff]
      %v1380 = vld [vmem:[%s373 + $0x1b0] sm:$0xff]
      %v1381 = vld [vmem:[%s373 + $0x1b8] sm:$0xff]
      %v1382 = vld [vmem:[%s373 + $0x1c0] sm:$0xff]
      %v1383 = vld [vmem:[%s373 + $0x1c8] sm:$0xff]
      %v1384 = vld [vmem:[%s373 + $0x1d0] sm:$0xff]
      %v1385 = vld [vmem:[%s373 + $0x1d8] sm:$0xff]
      %v1386 = vld [vmem:[%s373 + $0x1e0] sm:$0xff]
      %v1387 = vld [vmem:[%s373 + $0x1e8] sm:$0xff]
      %v1388 = vld [vmem:[%s373 + $0x1f0] sm:$0xff]
      %v1389 = vld [vmem:[%s373 + $0x1f8] sm:$0xff]
      %v1390 = vld [vmem:[%s373 + $0x200] sm:$0xff]
      %v1391 = vld [vmem:[%s373 + $0x208] sm:$0xff]
      %v1392 = vld [vmem:[%s373 + $0x210] sm:$0xff]
      %v1393 = vld [vmem:[%s373 + $0x218] sm:$0xff]
      %v1394 = vld [vmem:[%s373 + $0x220] sm:$0xff]
      %v1395 = vld [vmem:[%s373 + $0x228] sm:$0xff]
      %v1396 = vld [vmem:[%s373 + $0x230] sm:$0xff]
      %v1397 = vld [vmem:[%s373 + $0x238] sm:$0xff]
      %v1398 = vld [vmem:[%s373 + $0x240] sm:$0xff]
      %v1399 = vld [vmem:[%s373 + $0x248] sm:$0xff]
      %v1400 = vld [vmem:[%s373 + $0x250] sm:$0xff]
      %v1401 = vld [vmem:[%s373 + $0x258] sm:$0xff]
      %v1402 = vld [vmem:[%s373 + $0x260] sm:$0xff]
      %v1403 = vld [vmem:[%s373 + $0x268] sm:$0xff]
      %v1404 = vld [vmem:[%s373 + $0x270] sm:$0xff]
      %v1405 = vld [vmem:[%s373 + $0x278] sm:$0xff]
      %v1406 = vld [vmem:[%s373 + $0x280] sm:$0xff]
      %v1407 = vld [vmem:[%s373 + $0x288] sm:$0xff]
      %v1408 = vld [vmem:[%s373 + $0x290] sm:$0xff]
      %v1409 = vld [vmem:[%s373 + $0x298] sm:$0xff]
      %v1410 = vld [vmem:[%s373 + $0x2a0] sm:$0xff]
      %v1411 = vld [vmem:[%s373 + $0x2a8] sm:$0xff]
      %v1412 = vld [vmem:[%s373 + $0x2b0] sm:$0xff]
      %v1413 = vld [vmem:[%s373 + $0x2b8] sm:$0xff]
      %v1414 = vld [vmem:[%s373 + $0x2c0] sm:$0xff]
      %v1415 = vld [vmem:[%s373 + $0x2c8] sm:$0xff]
      %v1416 = vld [vmem:[%s373 + $0x2d0] sm:$0xff]
      %v1417 = vld [vmem:[%s373 + $0x2d8] sm:$0xff]
      %v1418 = vld [vmem:[%s373 + $0x2e0] sm:$0xff]
      %v1419 = vld [vmem:[%s373 + $0x2e8] sm:$0xff]
      %v1420 = vld [vmem:[%s373 + $0x2f0] sm:$0xff]
      %v1421 = vld [vmem:[%s373 + $0x2f8] sm:$0xff]
      %v1422 = vld [vmem:[%s373 + $0x300] sm:$0xff]
      %v1423 = vld [vmem:[%s373 + $0x308] sm:$0xff]
      %v1424 = vld [vmem:[%s373 + $0x310] sm:$0xff]
      %v1425 = vld [vmem:[%s373 + $0x318] sm:$0xff]
      %v1426 = vld [vmem:[%s373 + $0x320] sm:$0xff]
      %v1427 = vld [vmem:[%s373 + $0x328] sm:$0xff]
      %v1428 = vld [vmem:[%s373 + $0x330] sm:$0xff]
      %v1429 = vld [vmem:[%s373 + $0x338] sm:$0xff]
      %v1430 = vld [vmem:[%s373 + $0x340] sm:$0xff]
      %v1431 = vld [vmem:[%s373 + $0x348] sm:$0xff]
      %v1432 = vld [vmem:[%s373 + $0x350] sm:$0xff]
      %v1433 = vld [vmem:[%s373 + $0x358] sm:$0xff]
      %v1434 = vld [vmem:[%s373 + $0x360] sm:$0xff]
      %v1435 = vld [vmem:[%s373 + $0x368] sm:$0xff]
      %v1436 = vld [vmem:[%s373 + $0x370] sm:$0xff]
      %v1437 = vld [vmem:[%s373 + $0x378] sm:$0xff]
      %v1438 = vld [vmem:[%s373 + $0x380] sm:$0xff]
      %v1439 = vld [vmem:[%s373 + $0x388] sm:$0xff]
      %v1440 = vld [vmem:[%s373 + $0x390] sm:$0xff]
      %v1441 = vld [vmem:[%s373 + $0x398] sm:$0xff]
      %v1442 = vld [vmem:[%s373 + $0x3a0] sm:$0xff]
      %v1443 = vld [vmem:[%s373 + $0x3a8] sm:$0xff]
      %v1444 = vld [vmem:[%s373 + $0x3b0] sm:$0xff]
      %v1445 = vld [vmem:[%s373 + $0x3b8] sm:$0xff]
      %v1446 = vld [vmem:[%s373 + $0x3c0] sm:$0xff]
      %v1447 = vld [vmem:[%s373 + $0x3c8] sm:$0xff]
      %v1448 = vld [vmem:[%s373 + $0x3d0] sm:$0xff]
      %v1449 = vld [vmem:[%s373 + $0x3d8] sm:$0xff]
      %v1450 = vld [vmem:[%s373 + $0x3e0] sm:$0xff]
      %v1451 = vld [vmem:[%s373 + $0x3e8] sm:$0xff]
      %v1452 = vld [vmem:[%s373 + $0x3f0] sm:$0xff]
      %v1453 = vld [vmem:[%s373 + $0x3f8] sm:$0xff]
      %v1454 = vld [vmem:[%s373 + $0x400] sm:$0xff]
      %v1455 = vld [vmem:[%s373 + $0x408] sm:$0xff]
      %v1456 = vld [vmem:[%s373 + $0x410] sm:$0xff]
      %v1457 = vld [vmem:[%s373 + $0x418] sm:$0xff]
      %v1458 = vld [vmem:[%s373 + $0x420] sm:$0xff]
      %v1459 = vld [vmem:[%s373 + $0x428] sm:$0xff]
      %v1460 = vld [vmem:[%s373 + $0x430] sm:$0xff]
      %v1461 = vld [vmem:[%s373 + $0x438] sm:$0xff]
      %v1462 = vld [vmem:[%s373 + $0x440] sm:$0xff]
      %v1463 = vld [vmem:[%s373 + $0x448] sm:$0xff]
      %v1464 = vld [vmem:[%s373 + $0x450] sm:$0xff]
      %v1465 = vld [vmem:[%s373 + $0x458] sm:$0xff]
      %v1466 = vld [vmem:[%s373 + $0x460] sm:$0xff]
      %v1467 = vld [vmem:[%s373 + $0x468] sm:$0xff]
      %v1468 = vld [vmem:[%s373 + $0x470] sm:$0xff]
      %v1469 = vld [vmem:[%s373 + $0x478] sm:$0xff]
      %v1470 = vld [vmem:[%s373 + $0x480] sm:$0xff]
      %v1471 = vld [vmem:[%s373 + $0x488] sm:$0xff]
      %v1472 = vld [vmem:[%s373 + $0x490] sm:$0xff]
      %v1473 = vld [vmem:[%s373 + $0x498] sm:$0xff]
      %v1474 = vld [vmem:[%s373 + $0x4a0] sm:$0xff]
      %v1475 = vld [vmem:[%s373 + $0x4a8] sm:$0xff]
      %v1476 = vld [vmem:[%s373 + $0x4b0] sm:$0xff]
      %v1477 = vld [vmem:[%s373 + $0x4b8] sm:$0xff]
      %v1478 = vld [vmem:[%s373 + $0x4c0] sm:$0xff]
      %v1479 = vld [vmem:[%s373 + $0x4c8] sm:$0xff]
      %v1480 = vld [vmem:[%s373 + $0x4d0] sm:$0xff]
      %v1481 = vld [vmem:[%s373 + $0x4d8] sm:$0xff]
      %v1482 = vld [vmem:[%s373 + $0x4e0] sm:$0xff]
      %v1483 = vld [vmem:[%s373 + $0x4e8] sm:$0xff]
      %v1484 = vld [vmem:[%s373 + $0x4f0] sm:$0xff]
      %v1485 = vld [vmem:[%s373 + $0x4f8] sm:$0xff]
      %v1486 = vld [vmem:[%s373 + $0x500] sm:$0xff]
      %v1487 = vld [vmem:[%s373 + $0x508] sm:$0xff]
      %v1488 = vld [vmem:[%s373 + $0x510] sm:$0xff]
      %v1489 = vld [vmem:[%s373 + $0x518] sm:$0xff]
      %v1490 = vld [vmem:[%s373 + $0x520] sm:$0xff]
      %v1491 = vld [vmem:[%s373 + $0x528] sm:$0xff]
      %v1492 = vld [vmem:[%s373 + $0x530] sm:$0xff]
      %v1493 = vld [vmem:[%s373 + $0x538] sm:$0xff]
      %v1494 = vld [vmem:[%s373 + $0x540] sm:$0xff]
      %v1495 = vld [vmem:[%s373 + $0x548] sm:$0xff]
      %v1496 = vld [vmem:[%s373 + $0x550] sm:$0xff]
      %v1497 = vld [vmem:[%s373 + $0x558] sm:$0xff]
      %v1498 = vld [vmem:[%s373 + $0x560] sm:$0xff]
      %v1499 = vld [vmem:[%s373 + $0x568] sm:$0xff]
      %v1500 = vld [vmem:[%s373 + $0x570] sm:$0xff]
      %v1501 = vld [vmem:[%s373 + $0x578] sm:$0xff]
      %v1502 = vld [vmem:[%s373 + $0x580] sm:$0xff]
      %v1503 = vld [vmem:[%s373 + $0x588] sm:$0xff]
      %v1504 = vld [vmem:[%s373 + $0x590] sm:$0xff]
      %v1505 = vld [vmem:[%s373 + $0x598] sm:$0xff]
      %v1506 = vld [vmem:[%s373 + $0x5a0] sm:$0xff]
      %v1507 = vld [vmem:[%s373 + $0x5a8] sm:$0xff]
      %v1508 = vld [vmem:[%s373 + $0x5b0] sm:$0xff]
      %v1509 = vld [vmem:[%s373 + $0x5b8] sm:$0xff]
      %v1510 = vld [vmem:[%s373 + $0x5c0] sm:$0xff]
      %v1511 = vld [vmem:[%s373 + $0x5c8] sm:$0xff]
      %v1512 = vld [vmem:[%s373 + $0x5d0] sm:$0xff]
      %v1513 = vld [vmem:[%s373 + $0x5d8] sm:$0xff]
      %v1514 = vld [vmem:[%s373 + $0x5e0] sm:$0xff]
      %v1515 = vld [vmem:[%s373 + $0x5e8] sm:$0xff]
      %v1516 = vld [vmem:[%s373 + $0x5f0] sm:$0xff]
      %v1517 = vld [vmem:[%s373 + $0x5f8] sm:$0xff]
      %v1518 = vld [vmem:[%s373 + $0x600] sm:$0xff]
      %v1519 = vld [vmem:[%s373 + $0x608] sm:$0xff]
      %v1520 = vld [vmem:[%s373 + $0x610] sm:$0xff]
      %v1521 = vld [vmem:[%s373 + $0x618] sm:$0xff]
      %v1522 = vld [vmem:[%s373 + $0x620] sm:$0xff]
      %v1523 = vld [vmem:[%s373 + $0x628] sm:$0xff]
      %v1524 = vld [vmem:[%s373 + $0x630] sm:$0xff]
      %v1525 = vld [vmem:[%s373 + $0x638] sm:$0xff]
      %v1526 = vld [vmem:[%s373 + $0x640] sm:$0xff]
      %v1527 = vld [vmem:[%s373 + $0x648] sm:$0xff]
      %v1528 = vld [vmem:[%s373 + $0x650] sm:$0xff]
      %v1529 = vld [vmem:[%s373 + $0x658] sm:$0xff]
      %v1530 = vld [vmem:[%s373 + $0x660] sm:$0xff]
      %v1531 = vld [vmem:[%s373 + $0x668] sm:$0xff]
      %v1532 = vld [vmem:[%s373 + $0x670] sm:$0xff]
      %v1533 = vld [vmem:[%s373 + $0x678] sm:$0xff]
      %v1534 = vld [vmem:[%s373 + $0x680] sm:$0xff]
      %v1535 = vld [vmem:[%s373 + $0x688] sm:$0xff]
      %v1536 = vld [vmem:[%s373 + $0x690] sm:$0xff]
      %v1537 = vld [vmem:[%s373 + $0x698] sm:$0xff]
      %v1538 = vld [vmem:[%s373 + $0x6a0] sm:$0xff]
      %v1539 = vld [vmem:[%s373 + $0x6a8] sm:$0xff]
      %v1540 = vld [vmem:[%s373 + $0x6b0] sm:$0xff]
      %v1541 = vld [vmem:[%s373 + $0x6b8] sm:$0xff]
      %v1542 = vld [vmem:[%s373 + $0x6c0] sm:$0xff]
      %v1543 = vld [vmem:[%s373 + $0x6c8] sm:$0xff]
      %v1544 = vld [vmem:[%s373 + $0x6d0] sm:$0xff]
      %v1545 = vld [vmem:[%s373 + $0x6d8] sm:$0xff]
      %v1546 = vld [vmem:[%s373 + $0x6e0] sm:$0xff]
      %v1547 = vld [vmem:[%s373 + $0x6e8] sm:$0xff]
      %v1548 = vld [vmem:[%s373 + $0x6f0] sm:$0xff]
      %v1549 = vld [vmem:[%s373 + $0x6f8] sm:$0xff]
      %v1550 = vld [vmem:[%s373 + $0x700] sm:$0xff]
      %v1551 = vld [vmem:[%s373 + $0x708] sm:$0xff]
      %v1552 = vld [vmem:[%s373 + $0x710] sm:$0xff]
      %v1553 = vld [vmem:[%s373 + $0x718] sm:$0xff]
      %v1554 = vld [vmem:[%s373 + $0x720] sm:$0xff]
      %v1555 = vld [vmem:[%s373 + $0x728] sm:$0xff]
      %v1556 = vld [vmem:[%s373 + $0x730] sm:$0xff]
      %v1557 = vld [vmem:[%s373 + $0x738] sm:$0xff]
      %v1558 = vld [vmem:[%s373 + $0x740] sm:$0xff]
      %v1559 = vld [vmem:[%s373 + $0x748] sm:$0xff]
      %v1560 = vld [vmem:[%s373 + $0x750] sm:$0xff]
      %v1561 = vld [vmem:[%s373 + $0x758] sm:$0xff]
      %v1562 = vld [vmem:[%s373 + $0x760] sm:$0xff]
      %v1563 = vld [vmem:[%s373 + $0x768] sm:$0xff]
      %v1564 = vld [vmem:[%s373 + $0x770] sm:$0xff]
      %v1565 = vld [vmem:[%s373 + $0x778] sm:$0xff]
      %v1566 = vld [vmem:[%s373 + $0x780] sm:$0xff]
      %v1567 = vld [vmem:[%s373 + $0x788] sm:$0xff]
      %v1568 = vld [vmem:[%s373 + $0x790] sm:$0xff]
      %v1569 = vld [vmem:[%s373 + $0x798] sm:$0xff]
      %v1570 = vld [vmem:[%s373 + $0x7a0] sm:$0xff]
      %v1571 = vld [vmem:[%s373 + $0x7a8] sm:$0xff]
      %v1572 = vld [vmem:[%s373 + $0x7b0] sm:$0xff]
      %v1573 = vld [vmem:[%s373 + $0x7b8] sm:$0xff]
      %v1574 = vld [vmem:[%s373 + $0x7c0] sm:$0xff]
      %v1575 = vld [vmem:[%s373 + $0x7c8] sm:$0xff]
      %v1576 = vld [vmem:[%s373 + $0x7d0] sm:$0xff]
      %v1577 = vld [vmem:[%s373 + $0x7d8] sm:$0xff]
      %v1578 = vld [vmem:[%s373 + $0x7e0] sm:$0xff]
      %v1579 = vld [vmem:[%s373 + $0x7e8] sm:$0xff]
      %v1580 = vld [vmem:[%s373 + $0x7f0] sm:$0xff]
      %v1581 = vld [vmem:[%s373 + $0x7f8] sm:$0xff]
      %vm1582 = vcmask 64512
      %v1584 = vsel %vm1582, %v1321, 0
      %v1587 = vsel %vm1582, %v1322, 0
      %v1590 = vsel %vm1582, %v1323, 0
      %v1593 = vsel %vm1582, %v1324, 0
      %v1596 = vsel %vm1582, %v1325, 0
      %v1599 = vsel %vm1582, %v1326, 0
      %v1602 = vsel %vm1582, %v1327, 0
      %v1605 = vsel %vm1582, %v1328, 0
      %v1608 = vsel %vm1582, %v1329, 0
      %v1611 = vsel %vm1582, %v1330, 0
      %v1614 = vsel %vm1582, %v1331, 0
      %v1617 = vsel %vm1582, %v1332, 0
      %v1620 = vsel %vm1582, %v1333, 0
      %v1623 = vsel %vm1582, %v1334, 0
      %v1626 = vsel %vm1582, %v1335, 0
      %v1629 = vsel %vm1582, %v1336, 0
      %v1632 = vsel %vm1582, %v1337, 0
      %v1635 = vsel %vm1582, %v1338, 0
      %v1638 = vsel %vm1582, %v1339, 0
      %v1641 = vsel %vm1582, %v1340, 0
      %v1644 = vsel %vm1582, %v1341, 0
      %v1647 = vsel %vm1582, %v1342, 0
      %v1650 = vsel %vm1582, %v1343, 0
      %v1653 = vsel %vm1582, %v1344, 0
      %v1656 = vsel %vm1582, %v1345, 0
      %v1659 = vsel %vm1582, %v1346, 0
      %v1662 = vsel %vm1582, %v1347, 0
      %v1665 = vsel %vm1582, %v1348, 0
      %v1668 = vsel %vm1582, %v1349, 0
      %v1671 = vsel %vm1582, %v1350, 0
      %v1674 = vsel %vm1582, %v1351, 0
      %v1677 = vsel %vm1582, %v1352, 0
      %v1680 = vsel %vm1582, %v1353, 0
      %v1683 = vsel %vm1582, %v1354, 0
      %v1686 = vsel %vm1582, %v1355, 0
      %v1689 = vsel %vm1582, %v1356, 0
      %v1692 = vsel %vm1582, %v1357, 0
      %v1695 = vsel %vm1582, %v1358, 0
      %v1698 = vsel %vm1582, %v1359, 0
      %v1701 = vsel %vm1582, %v1360, 0
      %v1704 = vsel %vm1582, %v1361, 0
      %v1707 = vsel %vm1582, %v1362, 0
      %v1710 = vsel %vm1582, %v1363, 0
      %v1713 = vsel %vm1582, %v1364, 0
      %v1716 = vsel %vm1582, %v1365, 0
      %v1719 = vsel %vm1582, %v1366, 0
      %v1722 = vsel %vm1582, %v1367, 0
      %v1725 = vsel %vm1582, %v1368, 0
      %v1728 = vsel %vm1582, %v1369, 0
      %v1731 = vsel %vm1582, %v1370, 0
      %v1734 = vsel %vm1582, %v1371, 0
      %v1737 = vsel %vm1582, %v1372, 0
      %v1740 = vsel %vm1582, %v1373, 0
      %v1743 = vsel %vm1582, %v1374, 0
      %v1746 = vsel %vm1582, %v1375, 0
      %v1749 = vsel %vm1582, %v1376, 0
      %v1752 = vsel %vm1582, %v1377, 0
      %v1755 = vsel %vm1582, %v1378, 0
      %v1758 = vsel %vm1582, %v1379, 0
      %v1761 = vsel %vm1582, %v1380, 0
      %v1764 = vsel %vm1582, %v1381, 0
      %v1767 = vsel %vm1582, %v1382, 0
      %v1770 = vsel %vm1582, %v1383, 0
      %v1773 = vsel %vm1582, %v1384, 0
      %v1776 = vsel %vm1582, %v1385, 0
      %v1779 = vsel %vm1582, %v1386, 0
      %v1782 = vsel %vm1582, %v1387, 0
      %v1785 = vsel %vm1582, %v1388, 0
      %v1788 = vsel %vm1582, %v1389, 0
      %v1791 = vsel %vm1582, %v1390, 0
      %v1794 = vsel %vm1582, %v1391, 0
      %v1797 = vsel %vm1582, %v1392, 0
      %v1800 = vsel %vm1582, %v1393, 0
      %v1803 = vsel %vm1582, %v1394, 0
      %v1806 = vsel %vm1582, %v1395, 0
      %v1809 = vsel %vm1582, %v1396, 0
      %v1812 = vsel %vm1582, %v1397, 0
      %v1815 = vsel %vm1582, %v1398, 0
      %v1818 = vsel %vm1582, %v1399, 0
      %v1821 = vsel %vm1582, %v1400, 0
      %v1824 = vsel %vm1582, %v1401, 0
      %v1827 = vsel %vm1582, %v1402, 0
      %v1830 = vsel %vm1582, %v1403, 0
      %v1833 = vsel %vm1582, %v1404, 0
      %v1836 = vsel %vm1582, %v1405, 0
      %v1839 = vsel %vm1582, %v1406, 0
      %v1842 = vsel %vm1582, %v1407, 0
      %v1845 = vsel %vm1582, %v1408, 0
      %v1848 = vsel %vm1582, %v1409, 0
      %v1851 = vsel %vm1582, %v1410, 0
      %v1854 = vsel %vm1582, %v1411, 0
      %v1857 = vsel %vm1582, %v1412, 0
      %v1860 = vsel %vm1582, %v1413, 0
      %v1863 = vsel %vm1582, %v1414, 0
      %v1866 = vsel %vm1582, %v1415, 0
      %v1869 = vsel %vm1582, %v1416, 0
      %v1872 = vsel %vm1582, %v1417, 0
      %v1875 = vsel %vm1582, %v1418, 0
      %v1878 = vsel %vm1582, %v1419, 0
      %v1881 = vsel %vm1582, %v1420, 0
      %v1884 = vsel %vm1582, %v1421, 0
      %v1887 = vsel %vm1582, %v1422, 0
      %v1890 = vsel %vm1582, %v1423, 0
      %v1893 = vsel %vm1582, %v1424, 0
      %v1896 = vsel %vm1582, %v1425, 0
      %v1899 = vsel %vm1582, %v1426, 0
      %v1902 = vsel %vm1582, %v1427, 0
      %v1905 = vsel %vm1582, %v1428, 0
      %v1908 = vsel %vm1582, %v1429, 0
      %v1911 = vsel %vm1582, %v1430, 0
      %v1914 = vsel %vm1582, %v1431, 0
      %v1917 = vsel %vm1582, %v1432, 0
      %v1920 = vsel %vm1582, %v1433, 0
      %v1923 = vsel %vm1582, %v1434, 0
      %v1926 = vsel %vm1582, %v1435, 0
      %v1929 = vsel %vm1582, %v1436, 0
      %v1932 = vsel %vm1582, %v1437, 0
      %v1935 = vsel %vm1582, %v1438, 0
      %v1938 = vsel %vm1582, %v1439, 0
      %v1941 = vsel %vm1582, %v1440, 0
      %v1944 = vsel %vm1582, %v1441, 0
      %v1947 = vsel %vm1582, %v1442, 0
      %v1950 = vsel %vm1582, %v1443, 0
      %v1953 = vsel %vm1582, %v1444, 0
      %v1956 = vsel %vm1582, %v1445, 0
      %v1959 = vsel %vm1582, %v1446, 0
      %v1962 = vsel %vm1582, %v1447, 0
      %v1965 = vsel %vm1582, %v1448, 0
      %v1968 = vsel %vm1582, %v1449, 0
      %v1971 = vsel %vm1582, %v1450, 0
      %v1974 = vsel %vm1582, %v1451, 0
      %v1977 = vsel %vm1582, %v1452, 0
      %v1980 = vsel %vm1582, %v1453, 0
      %v1983 = vsel %vm1582, %v1454, 0
      %v1986 = vsel %vm1582, %v1455, 0
      %v1989 = vsel %vm1582, %v1456, 0
      %v1992 = vsel %vm1582, %v1457, 0
      %v1995 = vsel %vm1582, %v1458, 0
      %v1998 = vsel %vm1582, %v1459, 0
      %v2001 = vsel %vm1582, %v1460, 0
      %v2004 = vsel %vm1582, %v1461, 0
      %v2007 = vsel %vm1582, %v1462, 0
      %v2010 = vsel %vm1582, %v1463, 0
      %v2013 = vsel %vm1582, %v1464, 0
      %v2016 = vsel %vm1582, %v1465, 0
      %v2019 = vsel %vm1582, %v1466, 0
      %v2022 = vsel %vm1582, %v1467, 0
      %v2025 = vsel %vm1582, %v1468, 0
      %v2028 = vsel %vm1582, %v1469, 0
      %v2031 = vsel %vm1582, %v1470, 0
      %v2034 = vsel %vm1582, %v1471, 0
      %v2037 = vsel %vm1582, %v1472, 0
      %v2040 = vsel %vm1582, %v1473, 0
      %v2043 = vsel %vm1582, %v1474, 0
      %v2046 = vsel %vm1582, %v1475, 0
      %v2049 = vsel %vm1582, %v1476, 0
      %v2052 = vsel %vm1582, %v1477, 0
      %v2055 = vsel %vm1582, %v1478, 0
      %v2058 = vsel %vm1582, %v1479, 0
      %v2061 = vsel %vm1582, %v1480, 0
      %v2064 = vsel %vm1582, %v1481, 0
      %v2067 = vsel %vm1582, %v1482, 0
      %v2070 = vsel %vm1582, %v1483, 0
      %v2073 = vsel %vm1582, %v1484, 0
      %v2076 = vsel %vm1582, %v1485, 0
      %v2079 = vsel %vm1582, %v1486, 0
      %v2082 = vsel %vm1582, %v1487, 0
      %v2085 = vsel %vm1582, %v1488, 0
      %v2088 = vsel %vm1582, %v1489, 0
      %v2091 = vsel %vm1582, %v1490, 0
      %v2094 = vsel %vm1582, %v1491, 0
      %v2097 = vsel %vm1582, %v1492, 0
      %v2100 = vsel %vm1582, %v1493, 0
      %v2103 = vsel %vm1582, %v1494, 0
      %v2106 = vsel %vm1582, %v1495, 0
      %v2109 = vsel %vm1582, %v1496, 0
      %v2112 = vsel %vm1582, %v1497, 0
      %v2115 = vsel %vm1582, %v1498, 0
      %v2118 = vsel %vm1582, %v1499, 0
      %v2121 = vsel %vm1582, %v1500, 0
      %v2124 = vsel %vm1582, %v1501, 0
      %v2127 = vsel %vm1582, %v1502, 0
      %v2130 = vsel %vm1582, %v1503, 0
      %v2133 = vsel %vm1582, %v1504, 0
      %v2136 = vsel %vm1582, %v1505, 0
      %v2139 = vsel %vm1582, %v1506, 0
      %v2142 = vsel %vm1582, %v1507, 0
      %v2145 = vsel %vm1582, %v1508, 0
      %v2148 = vsel %vm1582, %v1509, 0
      %v2151 = vsel %vm1582, %v1510, 0
      %v2154 = vsel %vm1582, %v1511, 0
      %v2157 = vsel %vm1582, %v1512, 0
      %v2160 = vsel %vm1582, %v1513, 0
      %v2163 = vsel %vm1582, %v1514, 0
      %v2166 = vsel %vm1582, %v1515, 0
      %v2169 = vsel %vm1582, %v1516, 0
      %v2172 = vsel %vm1582, %v1517, 0
      %v2175 = vsel %vm1582, %v1518, 0
      %v2178 = vsel %vm1582, %v1519, 0
      %v2181 = vsel %vm1582, %v1520, 0
      %v2184 = vsel %vm1582, %v1521, 0
      %v2187 = vsel %vm1582, %v1522, 0
      %v2190 = vsel %vm1582, %v1523, 0
      %v2193 = vsel %vm1582, %v1524, 0
      %v2196 = vsel %vm1582, %v1525, 0
      %v2199 = vsel %vm1582, %v1526, 0
      %v2202 = vsel %vm1582, %v1527, 0
      %v2205 = vsel %vm1582, %v1528, 0
      %v2208 = vsel %vm1582, %v1529, 0
      %v2211 = vsel %vm1582, %v1530, 0
      %v2214 = vsel %vm1582, %v1531, 0
      %v2217 = vsel %vm1582, %v1532, 0
      %v2220 = vsel %vm1582, %v1533, 0
      %v2223 = vsel %vm1582, %v1534, 0
      %v2226 = vsel %vm1582, %v1535, 0
      %v2229 = vsel %vm1582, %v1536, 0
      %v2232 = vsel %vm1582, %v1537, 0
      %v2235 = vsel %vm1582, %v1538, 0
      %v2238 = vsel %vm1582, %v1539, 0
      %v2241 = vsel %vm1582, %v1540, 0
      %v2244 = vsel %vm1582, %v1541, 0
      %v2247 = vsel %vm1582, %v1542, 0
      %v2250 = vsel %vm1582, %v1543, 0
      %v2253 = vsel %vm1582, %v1544, 0
      %v2256 = vsel %vm1582, %v1545, 0
      %v2259 = vsel %vm1582, %v1546, 0
      %v2262 = vsel %vm1582, %v1547, 0
      %v2265 = vsel %vm1582, %v1548, 0
      %v2268 = vsel %vm1582, %v1549, 0
      %v2271 = vsel %vm1582, %v1550, 0
      %v2274 = vsel %vm1582, %v1551, 0
      %v2277 = vsel %vm1582, %v1552, 0
      %v2280 = vsel %vm1582, %v1553, 0
      %v2283 = vsel %vm1582, %v1554, 0
      %v2286 = vsel %vm1582, %v1555, 0
      %v2289 = vsel %vm1582, %v1556, 0
      %v2292 = vsel %vm1582, %v1557, 0
      %v2295 = vsel %vm1582, %v1558, 0
      %v2298 = vsel %vm1582, %v1559, 0
      %v2301 = vsel %vm1582, %v1560, 0
      %v2304 = vsel %vm1582, %v1561, 0
      %v2307 = vsel %vm1582, %v1562, 0
      %v2310 = vsel %vm1582, %v1563, 0
      %v2313 = vsel %vm1582, %v1564, 0
      %v2316 = vsel %vm1582, %v1565, 0
      %v2319 = vsel %vm1582, %v1566, 0
      %v2322 = vsel %vm1582, %v1567, 0
      %v2325 = vsel %vm1582, %v1568, 0
      %v2328 = vsel %vm1582, %v1569, 0
      %v2331 = vsel %vm1582, %v1570, 0
      %v2334 = vsel %vm1582, %v1571, 0
      %v2337 = vsel %vm1582, %v1572, 0
      %v2340 = vsel %vm1582, %v1573, 0
      %v2343 = vsel %vm1582, %v1574, 0
      %v2346 = vsel %vm1582, %v1575, 0
      %v2349 = vsel %vm1582, %v1576, 0
      %v2352 = vsel %vm1582, %v1577, 0
      %v2355 = vsel %vm1582, %v1578, 0
      %v2358 = vsel %vm1582, %v1579, 0
      %v2361 = vsel %vm1582, %v1580, 0
      %v2364 = vsel %vm1582, %v1581, 0
      %2366 = vmatprep.subr.mxu0 0.0
      %2367 = vmatpush1.xpose.msra.mxu0 %v1644
      %2368 = vmatprep.subr.mxu0 0.0
      %2369 = vmatpush1.xpose.msra.mxu0 %v1641
      %2370 = vmatprep.subr.mxu0 0.0
      %2371 = vmatpush1.xpose.msra.mxu0 %v1638
      %2372 = vmatprep.subr.mxu0 0.0
      %2373 = vmatpush1.xpose.msra.mxu0 %v1635
      %2374 = vmatprep.subr.mxu0 0.0
      %2375 = vmatpush1.xpose.msra.mxu0 %v1632
      %2376 = vmatprep.subr.mxu0 0.0
      %2377 = vmatpush1.xpose.msra.mxu0 %v1629
      %2378 = vmatprep.subr.mxu0 0.0
      %2379 = vmatpush1.xpose.msra.mxu0 %v1626
      %2380 = vmatprep.subr.mxu0 0.0
      %2381 = vmatpush1.xpose.msra.mxu0 %v1623
      %2382 = vmatprep.subr.mxu0 0.0
      %2383 = vmatpush1.xpose.msra.mxu0 %v1620
      %2384 = vmatprep.subr.mxu0 0.0
      %2385 = vmatpush1.xpose.msra.mxu0 %v1617
      %2386 = vmatprep.subr.mxu0 0.0
      %2387 = vmatpush1.xpose.msra.mxu0 %v1614
      %2388 = vmatprep.subr.mxu0 0.0
      %2389 = vmatpush1.xpose.msra.mxu0 %v1611
      %2390 = vmatprep.subr.mxu0 0.0
      %2391 = vmatpush1.xpose.msra.mxu0 %v1608
      %2392 = vmatprep.subr.mxu0 0.0
      %2393 = vmatpush1.xpose.msra.mxu0 %v1605
      %2394 = vmatprep.subr.mxu0 0.0
      %2395 = vmatpush1.xpose.msra.mxu0 %v1602
      %2396 = vmatprep.subr.mxu0 0.0
      %2397 = vmatpush1.xpose.msra.mxu0 %v1599
      %2398 = vmatprep.subr.mxu0 0.0
      %2399 = vmatpush2.xpose.msra.mxu0 %v1692
      %2400 = vmatprep.subr.mxu0 0.0
      %2401 = vmatpush2.xpose.msra.mxu0 %v1689
      %2402 = vmatprep.subr.mxu0 0.0
      %2403 = vmatpush2.xpose.msra.mxu0 %v1686
      %2404 = vmatprep.subr.mxu0 0.0
      %2405 = vmatpush2.xpose.msra.mxu0 %v1683
      %2406 = vmatprep.subr.mxu0 0.0
      %2407 = vmatpush2.xpose.msra.mxu0 %v1680
      %2408 = vmatprep.subr.mxu0 0.0
      %2409 = vmatpush2.xpose.msra.mxu0 %v1677
      %2410 = vmatprep.subr.mxu0 0.0
      %2411 = vmatpush2.xpose.msra.mxu0 %v1674
      %2412 = vmatprep.subr.mxu0 0.0
      %2413 = vmatpush2.xpose.msra.mxu0 %v1671
      %2414 = vmatprep.subr.mxu0 0.0
      %2415 = vmatpush2.xpose.msra.mxu0 %v1668
      %2416 = vmatprep.subr.mxu0 0.0
      %2417 = vmatpush2.xpose.msra.mxu0 %v1665
      %2418 = vmatprep.subr.mxu0 0.0
      %2419 = vmatpush2.xpose.msra.mxu0 %v1662
      %2420 = vmatprep.subr.mxu0 0.0
      %2421 = vmatpush2.xpose.msra.mxu0 %v1659
      %2422 = vmatprep.subr.mxu0 0.0
      %2423 = vmatpush2.xpose.msra.mxu0 %v1656
      %2424 = vmatprep.subr.mxu0 0.0
      %2425 = vmatpush2.xpose.msra.mxu0 %v1653
      %2426 = vmatprep.subr.mxu0 0.0
      %2427 = vmatpush2.xpose.msra.mxu0 %v1650
      %2428 = vmatprep.subr.mxu0 0.0
      %2429 = vmatpush2.xpose.msra.mxu0 %v1647
      %2430 = vmatprep.mubr.f32.mxu0 0.0
      %2431 = vmatmul.mubr.f32.gmra.mxu0 %v1584
      %v2432 = vpop.f32.mrf.mxu0
      %v2433 = vadd.f32 0.0, %v2432
      %v2434 = vpop.f32.mrf.mxu0
      %v2435 = vadd.f32 0.0, %v2434
      %2436 = vmatprep.mubr.f32.mxu0 0.0
      %2437 = vmatmul.mubr.f32.gmra.mxu0 %v1587
      %v2438 = vpop.f32.mrf.mxu0
      %v2439 = vadd.f32 0.0, %v2438
      %v2440 = vpop.f32.mrf.mxu0
      %v2441 = vadd.f32 0.0, %v2440
      %2442 = vmatprep.mubr.f32.mxu0 0.0
      %2443 = vmatmul.mubr.f32.gmra.mxu0 %v1590
      %v2444 = vpop.f32.mrf.mxu0
      %v2445 = vadd.f32 0.0, %v2444
      %v2446 = vpop.f32.mrf.mxu0
      %v2447 = vadd.f32 0.0, %v2446
      %2448 = vmatprep.mubr.f32.mxu0 0.0
      %2449 = vmatmul.mubr.f32.gmra.mxu0 %v1593
      %v2450 = vpop.f32.mrf.mxu0
      %v2451 = vadd.f32 0.0, %v2450
      %v2452 = vpop.f32.mrf.mxu0
      %v2453 = vadd.f32 0.0, %v2452
      %2454 = vmatprep.mubr.f32.mxu0 0.0
      %2455 = vmatmul.mubr.f32.gmra.mxu0 %v1596
      %v2456 = vpop.f32.mrf.mxu0
      %v2457 = vadd.f32 0.0, %v2456
      %v2458 = vpop.f32.mrf.mxu0
      %v2459 = vadd.f32 0.0, %v2458
      %2460 = vdwg.mxu0
      %2461 = vmatprep.subr.mxu0 0.0
      %2462 = vmatpush1.xpose.msra.mxu0 %v1740
      %2463 = vmatprep.subr.mxu0 0.0
      %2464 = vmatpush1.xpose.msra.mxu0 %v1737
      %2465 = vmatprep.subr.mxu0 0.0
      %2466 = vmatpush1.xpose.msra.mxu0 %v1734
      %2467 = vmatprep.subr.mxu0 0.0
      %2468 = vmatpush1.xpose.msra.mxu0 %v1731
      %2469 = vmatprep.subr.mxu0 0.0
      %2470 = vmatpush1.xpose.msra.mxu0 %v1728
      %2471 = vmatprep.subr.mxu0 0.0
      %2472 = vmatpush1.xpose.msra.mxu0 %v1725
      %2473 = vmatprep.subr.mxu0 0.0
      %2474 = vmatpush1.xpose.msra.mxu0 %v1722
      %2475 = vmatprep.subr.mxu0 0.0
      %2476 = vmatpush1.xpose.msra.mxu0 %v1719
      %2477 = vmatprep.subr.mxu0 0.0
      %2478 = vmatpush1.xpose.msra.mxu0 %v1716
      %2479 = vmatprep.subr.mxu0 0.0
      %2480 = vmatpush1.xpose.msra.mxu0 %v1713
      %2481 = vmatprep.subr.mxu0 0.0
      %2482 = vmatpush1.xpose.msra.mxu0 %v1710
      %2483 = vmatprep.subr.mxu0 0.0
      %2484 = vmatpush1.xpose.msra.mxu0 %v1707
      %2485 = vmatprep.subr.mxu0 0.0
      %2486 = vmatpush1.xpose.msra.mxu0 %v1704
      %2487 = vmatprep.subr.mxu0 0.0
      %2488 = vmatpush1.xpose.msra.mxu0 %v1701
      %2489 = vmatprep.subr.mxu0 0.0
      %2490 = vmatpush1.xpose.msra.mxu0 %v1698
      %2491 = vmatprep.subr.mxu0 0.0
      %2492 = vmatpush1.xpose.msra.mxu0 %v1695
      %2493 = vmatprep.subr.mxu0 0.0
      %2494 = vmatpush2.xpose.msra.mxu0 %v1788
      %2495 = vmatprep.subr.mxu0 0.0
      %2496 = vmatpush2.xpose.msra.mxu0 %v1785
      %2497 = vmatprep.subr.mxu0 0.0
      %2498 = vmatpush2.xpose.msra.mxu0 %v1782
      %2499 = vmatprep.subr.mxu0 0.0
      %2500 = vmatpush2.xpose.msra.mxu0 %v1779
      %2501 = vmatprep.subr.mxu0 0.0
      %2502 = vmatpush2.xpose.msra.mxu0 %v1776
      %2503 = vmatprep.subr.mxu0 0.0
      %2504 = vmatpush2.xpose.msra.mxu0 %v1773
      %2505 = vmatprep.subr.mxu0 0.0
      %2506 = vmatpush2.xpose.msra.mxu0 %v1770
      %2507 = vmatprep.subr.mxu0 0.0
      %2508 = vmatpush2.xpose.msra.mxu0 %v1767
      %2509 = vmatprep.subr.mxu0 0.0
      %2510 = vmatpush2.xpose.msra.mxu0 %v1764
      %2511 = vmatprep.subr.mxu0 0.0
      %2512 = vmatpush2.xpose.msra.mxu0 %v1761
      %2513 = vmatprep.subr.mxu0 0.0
      %2514 = vmatpush2.xpose.msra.mxu0 %v1758
      %2515 = vmatprep.subr.mxu0 0.0
      %2516 = vmatpush2.xpose.msra.mxu0 %v1755
      %2517 = vmatprep.subr.mxu0 0.0
      %2518 = vmatpush2.xpose.msra.mxu0 %v1752
      %2519 = vmatprep.subr.mxu0 0.0
      %2520 = vmatpush2.xpose.msra.mxu0 %v1749
      %2521 = vmatprep.subr.mxu0 0.0
      %2522 = vmatpush2.xpose.msra.mxu0 %v1746
      %2523 = vmatprep.subr.mxu0 0.0
      %2524 = vmatpush2.xpose.msra.mxu0 %v1743
      %2525 = vmatprep.mubr.f32.mxu0 0.0
      %2526 = vmatmul.mubr.f32.gmra.mxu0 %v1584
      %v2527 = vpop.f32.mrf.mxu0
      %v2528 = vadd.f32 0.0, %v2527
      %v2529 = vpop.f32.mrf.mxu0
      %v2530 = vadd.f32 0.0, %v2529
      %2531 = vmatprep.mubr.f32.mxu0 0.0
      %2532 = vmatmul.mubr.f32.gmra.mxu0 %v1587
      %v2533 = vpop.f32.mrf.mxu0
      %v2534 = vadd.f32 0.0, %v2533
      %v2535 = vpop.f32.mrf.mxu0
      %v2536 = vadd.f32 0.0, %v2535
      %2537 = vmatprep.mubr.f32.mxu0 0.0
      %2538 = vmatmul.mubr.f32.gmra.mxu0 %v1590
      %v2539 = vpop.f32.mrf.mxu0
      %v2540 = vadd.f32 0.0, %v2539
      %v2541 = vpop.f32.mrf.mxu0
      %v2542 = vadd.f32 0.0, %v2541
      %2543 = vmatprep.mubr.f32.mxu0 0.0
      %2544 = vmatmul.mubr.f32.gmra.mxu0 %v1593
      %v2545 = vpop.f32.mrf.mxu0
      %v2546 = vadd.f32 0.0, %v2545
      %v2547 = vpop.f32.mrf.mxu0
      %v2548 = vadd.f32 0.0, %v2547
      %2549 = vmatprep.mubr.f32.mxu0 0.0
      %2550 = vmatmul.mubr.f32.gmra.mxu0 %v1596
      %v2551 = vpop.f32.mrf.mxu0
      %v2552 = vadd.f32 0.0, %v2551
      %v2553 = vpop.f32.mrf.mxu0
      %v2554 = vadd.f32 0.0, %v2553
      %2555 = vdwg.mxu0
      %2556 = vmatprep.subr.mxu0 0.0
      %2557 = vmatpush1.xpose.msra.mxu0 %v1836
      %2558 = vmatprep.subr.mxu0 0.0
      %2559 = vmatpush1.xpose.msra.mxu0 %v1833
      %2560 = vmatprep.subr.mxu0 0.0
      %2561 = vmatpush1.xpose.msra.mxu0 %v1830
      %2562 = vmatprep.subr.mxu0 0.0
      %2563 = vmatpush1.xpose.msra.mxu0 %v1827
      %2564 = vmatprep.subr.mxu0 0.0
      %2565 = vmatpush1.xpose.msra.mxu0 %v1824
      %2566 = vmatprep.subr.mxu0 0.0
      %2567 = vmatpush1.xpose.msra.mxu0 %v1821
      %2568 = vmatprep.subr.mxu0 0.0
      %2569 = vmatpush1.xpose.msra.mxu0 %v1818
      %2570 = vmatprep.subr.mxu0 0.0
      %2571 = vmatpush1.xpose.msra.mxu0 %v1815
      %2572 = vmatprep.subr.mxu0 0.0
      %2573 = vmatpush1.xpose.msra.mxu0 %v1812
      %2574 = vmatprep.subr.mxu0 0.0
      %2575 = vmatpush1.xpose.msra.mxu0 %v1809
      %2576 = vmatprep.subr.mxu0 0.0
      %2577 = vmatpush1.xpose.msra.mxu0 %v1806
      %2578 = vmatprep.subr.mxu0 0.0
      %2579 = vmatpush1.xpose.msra.mxu0 %v1803
      %2580 = vmatprep.subr.mxu0 0.0
      %2581 = vmatpush1.xpose.msra.mxu0 %v1800
      %2582 = vmatprep.subr.mxu0 0.0
      %2583 = vmatpush1.xpose.msra.mxu0 %v1797
      %2584 = vmatprep.subr.mxu0 0.0
      %2585 = vmatpush1.xpose.msra.mxu0 %v1794
      %2586 = vmatprep.subr.mxu0 0.0
      %2587 = vmatpush1.xpose.msra.mxu0 %v1791
      %2588 = vmatprep.subr.mxu0 0.0
      %2589 = vmatpush2.xpose.msra.mxu0 %v1884
      %2590 = vmatprep.subr.mxu0 0.0
      %2591 = vmatpush2.xpose.msra.mxu0 %v1881
      %2592 = vmatprep.subr.mxu0 0.0
      %2593 = vmatpush2.xpose.msra.mxu0 %v1878
      %2594 = vmatprep.subr.mxu0 0.0
      %2595 = vmatpush2.xpose.msra.mxu0 %v1875
      %2596 = vmatprep.subr.mxu0 0.0
      %2597 = vmatpush2.xpose.msra.mxu0 %v1872
      %2598 = vmatprep.subr.mxu0 0.0
      %2599 = vmatpush2.xpose.msra.mxu0 %v1869
      %2600 = vmatprep.subr.mxu0 0.0
      %2601 = vmatpush2.xpose.msra.mxu0 %v1866
      %2602 = vmatprep.subr.mxu0 0.0
      %2603 = vmatpush2.xpose.msra.mxu0 %v1863
      %2604 = vmatprep.subr.mxu0 0.0
      %2605 = vmatpush2.xpose.msra.mxu0 %v1860
      %2606 = vmatprep.subr.mxu0 0.0
      %2607 = vmatpush2.xpose.msra.mxu0 %v1857
      %2608 = vmatprep.subr.mxu0 0.0
      %2609 = vmatpush2.xpose.msra.mxu0 %v1854
      %2610 = vmatprep.subr.mxu0 0.0
      %2611 = vmatpush2.xpose.msra.mxu0 %v1851
      %2612 = vmatprep.subr.mxu0 0.0
      %2613 = vmatpush2.xpose.msra.mxu0 %v1848
      %2614 = vmatprep.subr.mxu0 0.0
      %2615 = vmatpush2.xpose.msra.mxu0 %v1845
      %2616 = vmatprep.subr.mxu0 0.0
      %2617 = vmatpush2.xpose.msra.mxu0 %v1842
      %2618 = vmatprep.subr.mxu0 0.0
      %2619 = vmatpush2.xpose.msra.mxu0 %v1839
      %2620 = vmatprep.mubr.f32.mxu0 0.0
      %2621 = vmatmul.mubr.f32.gmra.mxu0 %v1584
      %v2622 = vpop.f32.mrf.mxu0
      %v2623 = vadd.f32 0.0, %v2622
      %v2624 = vpop.f32.mrf.mxu0
      %v2625 = vadd.f32 0.0, %v2624
      %2626 = vmatprep.mubr.f32.mxu0 0.0
      %2627 = vmatmul.mubr.f32.gmra.mxu0 %v1587
      %v2628 = vpop.f32.mrf.mxu0
      %v2629 = vadd.f32 0.0, %v2628
      %v2630 = vpop.f32.mrf.mxu0
      %v2631 = vadd.f32 0.0, %v2630
      %2632 = vmatprep.mubr.f32.mxu0 0.0
      %2633 = vmatmul.mubr.f32.gmra.mxu0 %v1590
      %v2634 = vpop.f32.mrf.mxu0
      %v2635 = vadd.f32 0.0, %v2634
      %v2636 = vpop.f32.mrf.mxu0
      %v2637 = vadd.f32 0.0, %v2636
      %2638 = vmatprep.mubr.f32.mxu0 0.0
      %2639 = vmatmul.mubr.f32.gmra.mxu0 %v1593
      %v2640 = vpop.f32.mrf.mxu0
      %v2641 = vadd.f32 0.0, %v2640
      %v2642 = vpop.f32.mrf.mxu0
      %v2643 = vadd.f32 0.0, %v2642
      %2644 = vmatprep.mubr.f32.mxu0 0.0
      %2645 = vmatmul.mubr.f32.gmra.mxu0 %v1596
      %v2646 = vpop.f32.mrf.mxu0
      %v2647 = vadd.f32 0.0, %v2646
      %v2648 = vpop.f32.mrf.mxu0
      %v2649 = vadd.f32 0.0, %v2648
      %2650 = vdwg.mxu0
      %2651 = vmatprep.subr.mxu0 0.0
      %2652 = vmatpush1.xpose.msra.mxu0 %v1932
      %2653 = vmatprep.subr.mxu0 0.0
      %2654 = vmatpush1.xpose.msra.mxu0 %v1929
      %2655 = vmatprep.subr.mxu0 0.0
      %2656 = vmatpush1.xpose.msra.mxu0 %v1926
      %2657 = vmatprep.subr.mxu0 0.0
      %2658 = vmatpush1.xpose.msra.mxu0 %v1923
      %2659 = vmatprep.subr.mxu0 0.0
      %2660 = vmatpush1.xpose.msra.mxu0 %v1920
      %2661 = vmatprep.subr.mxu0 0.0
      %2662 = vmatpush1.xpose.msra.mxu0 %v1917
      %2663 = vmatprep.subr.mxu0 0.0
      %2664 = vmatpush1.xpose.msra.mxu0 %v1914
      %2665 = vmatprep.subr.mxu0 0.0
      %2666 = vmatpush1.xpose.msra.mxu0 %v1911
      %2667 = vmatprep.subr.mxu0 0.0
      %2668 = vmatpush1.xpose.msra.mxu0 %v1908
      %2669 = vmatprep.subr.mxu0 0.0
      %2670 = vmatpush1.xpose.msra.mxu0 %v1905
      %2671 = vmatprep.subr.mxu0 0.0
      %2672 = vmatpush1.xpose.msra.mxu0 %v1902
      %2673 = vmatprep.subr.mxu0 0.0
      %2674 = vmatpush1.xpose.msra.mxu0 %v1899
      %2675 = vmatprep.subr.mxu0 0.0
      %2676 = vmatpush1.xpose.msra.mxu0 %v1896
      %2677 = vmatprep.subr.mxu0 0.0
      %2678 = vmatpush1.xpose.msra.mxu0 %v1893
      %2679 = vmatprep.subr.mxu0 0.0
      %2680 = vmatpush1.xpose.msra.mxu0 %v1890
      %2681 = vmatprep.subr.mxu0 0.0
      %2682 = vmatpush1.xpose.msra.mxu0 %v1887
      %2683 = vmatprep.subr.mxu0 0.0
      %2684 = vmatpush2.xpose.msra.mxu0 %v1980
      %2685 = vmatprep.subr.mxu0 0.0
      %2686 = vmatpush2.xpose.msra.mxu0 %v1977
      %2687 = vmatprep.subr.mxu0 0.0
      %2688 = vmatpush2.xpose.msra.mxu0 %v1974
      %2689 = vmatprep.subr.mxu0 0.0
      %2690 = vmatpush2.xpose.msra.mxu0 %v1971
      %2691 = vmatprep.subr.mxu0 0.0
      %2692 = vmatpush2.xpose.msra.mxu0 %v1968
      %2693 = vmatprep.subr.mxu0 0.0
      %2694 = vmatpush2.xpose.msra.mxu0 %v1965
      %2695 = vmatprep.subr.mxu0 0.0
      %2696 = vmatpush2.xpose.msra.mxu0 %v1962
      %2697 = vmatprep.subr.mxu0 0.0
      %2698 = vmatpush2.xpose.msra.mxu0 %v1959
      %2699 = vmatprep.subr.mxu0 0.0
      %2700 = vmatpush2.xpose.msra.mxu0 %v1956
      %2701 = vmatprep.subr.mxu0 0.0
      %2702 = vmatpush2.xpose.msra.mxu0 %v1953
      %2703 = vmatprep.subr.mxu0 0.0
      %2704 = vmatpush2.xpose.msra.mxu0 %v1950
      %2705 = vmatprep.subr.mxu0 0.0
      %2706 = vmatpush2.xpose.msra.mxu0 %v1947
      %2707 = vmatprep.subr.mxu0 0.0
      %2708 = vmatpush2.xpose.msra.mxu0 %v1944
      %2709 = vmatprep.subr.mxu0 0.0
      %2710 = vmatpush2.xpose.msra.mxu0 %v1941
      %2711 = vmatprep.subr.mxu0 0.0
      %2712 = vmatpush2.xpose.msra.mxu0 %v1938
      %2713 = vmatprep.subr.mxu0 0.0
      %2714 = vmatpush2.xpose.msra.mxu0 %v1935
      %2715 = vmatprep.mubr.f32.mxu0 0.0
      %2716 = vmatmul.mubr.f32.gmra.mxu0 %v1584
      %v2717 = vpop.f32.mrf.mxu0
      %v2718 = vadd.f32 0.0, %v2717
      %v2719 = vpop.f32.mrf.mxu0
      %v2720 = vadd.f32 0.0, %v2719
      %2721 = vmatprep.mubr.f32.mxu0 0.0
      %2722 = vmatmul.mubr.f32.gmra.mxu0 %v1587
      %v2723 = vpop.f32.mrf.mxu0
      %v2724 = vadd.f32 0.0, %v2723
      %v2725 = vpop.f32.mrf.mxu0
      %v2726 = vadd.f32 0.0, %v2725
      %2727 = vmatprep.mubr.f32.mxu0 0.0
      %2728 = vmatmul.mubr.f32.gmra.mxu0 %v1590
      %v2729 = vpop.f32.mrf.mxu0
      %v2730 = vadd.f32 0.0, %v2729
      %v2731 = vpop.f32.mrf.mxu0
      %v2732 = vadd.f32 0.0, %v2731
      %2733 = vmatprep.mubr.f32.mxu0 0.0
      %2734 = vmatmul.mubr.f32.gmra.mxu0 %v1593
      %v2735 = vpop.f32.mrf.mxu0
      %v2736 = vadd.f32 0.0, %v2735
      %v2737 = vpop.f32.mrf.mxu0
      %v2738 = vadd.f32 0.0, %v2737
      %2739 = vmatprep.mubr.f32.mxu0 0.0
      %2740 = vmatmul.mubr.f32.gmra.mxu0 %v1596
      %v2741 = vpop.f32.mrf.mxu0
      %v2742 = vadd.f32 0.0, %v2741
      %v2743 = vpop.f32.mrf.mxu0
      %v2744 = vadd.f32 0.0, %v2743
      %2745 = vdwg.mxu0
      %2746 = vmatprep.subr.mxu0 0.0
      %2747 = vmatpush1.xpose.msra.mxu0 %v2028
      %2748 = vmatprep.subr.mxu0 0.0
      %2749 = vmatpush1.xpose.msra.mxu0 %v2025
      %2750 = vmatprep.subr.mxu0 0.0
      %2751 = vmatpush1.xpose.msra.mxu0 %v2022
      %2752 = vmatprep.subr.mxu0 0.0
      %2753 = vmatpush1.xpose.msra.mxu0 %v2019
      %2754 = vmatprep.subr.mxu0 0.0
      %2755 = vmatpush1.xpose.msra.mxu0 %v2016
      %2756 = vmatprep.subr.mxu0 0.0
      %2757 = vmatpush1.xpose.msra.mxu0 %v2013
      %2758 = vmatprep.subr.mxu0 0.0
      %2759 = vmatpush1.xpose.msra.mxu0 %v2010
      %2760 = vmatprep.subr.mxu0 0.0
      %2761 = vmatpush1.xpose.msra.mxu0 %v2007
      %2762 = vmatprep.subr.mxu0 0.0
      %2763 = vmatpush1.xpose.msra.mxu0 %v2004
      %2764 = vmatprep.subr.mxu0 0.0
      %2765 = vmatpush1.xpose.msra.mxu0 %v2001
      %2766 = vmatprep.subr.mxu0 0.0
      %2767 = vmatpush1.xpose.msra.mxu0 %v1998
      %2768 = vmatprep.subr.mxu0 0.0
      %2769 = vmatpush1.xpose.msra.mxu0 %v1995
      %2770 = vmatprep.subr.mxu0 0.0
      %2771 = vmatpush1.xpose.msra.mxu0 %v1992
      %2772 = vmatprep.subr.mxu0 0.0
      %2773 = vmatpush1.xpose.msra.mxu0 %v1989
      %2774 = vmatprep.subr.mxu0 0.0
      %2775 = vmatpush1.xpose.msra.mxu0 %v1986
      %2776 = vmatprep.subr.mxu0 0.0
      %2777 = vmatpush1.xpose.msra.mxu0 %v1983
      %2778 = vmatprep.subr.mxu0 0.0
      %2779 = vmatpush2.xpose.msra.mxu0 %v2076
      %2780 = vmatprep.subr.mxu0 0.0
      %2781 = vmatpush2.xpose.msra.mxu0 %v2073
      %2782 = vmatprep.subr.mxu0 0.0
      %2783 = vmatpush2.xpose.msra.mxu0 %v2070
      %2784 = vmatprep.subr.mxu0 0.0
      %2785 = vmatpush2.xpose.msra.mxu0 %v2067
      %2786 = vmatprep.subr.mxu0 0.0
      %2787 = vmatpush2.xpose.msra.mxu0 %v2064
      %2788 = vmatprep.subr.mxu0 0.0
      %2789 = vmatpush2.xpose.msra.mxu0 %v2061
      %2790 = vmatprep.subr.mxu0 0.0
      %2791 = vmatpush2.xpose.msra.mxu0 %v2058
      %2792 = vmatprep.subr.mxu0 0.0
      %2793 = vmatpush2.xpose.msra.mxu0 %v2055
      %2794 = vmatprep.subr.mxu0 0.0
      %2795 = vmatpush2.xpose.msra.mxu0 %v2052
      %2796 = vmatprep.subr.mxu0 0.0
      %2797 = vmatpush2.xpose.msra.mxu0 %v2049
      %2798 = vmatprep.subr.mxu0 0.0
      %2799 = vmatpush2.xpose.msra.mxu0 %v2046
      %2800 = vmatprep.subr.mxu0 0.0
      %2801 = vmatpush2.xpose.msra.mxu0 %v2043
      %2802 = vmatprep.subr.mxu0 0.0
      %2803 = vmatpush2.xpose.msra.mxu0 %v2040
      %2804 = vmatprep.subr.mxu0 0.0
      %2805 = vmatpush2.xpose.msra.mxu0 %v2037
      %2806 = vmatprep.subr.mxu0 0.0
      %2807 = vmatpush2.xpose.msra.mxu0 %v2034
      %2808 = vmatprep.subr.mxu0 0.0
      %2809 = vmatpush2.xpose.msra.mxu0 %v2031
      %2810 = vmatprep.mubr.f32.mxu0 0.0
      %2811 = vmatmul.mubr.f32.gmra.mxu0 %v1584
      %v2812 = vpop.f32.mrf.mxu0
      %v2813 = vadd.f32 0.0, %v2812
      %v2814 = vpop.f32.mrf.mxu0
      %v2815 = vadd.f32 0.0, %v2814
      %2816 = vmatprep.mubr.f32.mxu0 0.0
      %2817 = vmatmul.mubr.f32.gmra.mxu0 %v1587
      %v2818 = vpop.f32.mrf.mxu0
      %v2819 = vadd.f32 0.0, %v2818
      %v2820 = vpop.f32.mrf.mxu0
      %v2821 = vadd.f32 0.0, %v2820
      %2822 = vmatprep.mubr.f32.mxu0 0.0
      %2823 = vmatmul.mubr.f32.gmra.mxu0 %v1590
      %v2824 = vpop.f32.mrf.mxu0
      %v2825 = vadd.f32 0.0, %v2824
      %v2826 = vpop.f32.mrf.mxu0
      %v2827 = vadd.f32 0.0, %v2826
      %2828 = vmatprep.mubr.f32.mxu0 0.0
      %2829 = vmatmul.mubr.f32.gmra.mxu0 %v1593
      %v2830 = vpop.f32.mrf.mxu0
      %v2831 = vadd.f32 0.0, %v2830
      %v2832 = vpop.f32.mrf.mxu0
      %v2833 = vadd.f32 0.0, %v2832
      %2834 = vmatprep.mubr.f32.mxu0 0.0
      %2835 = vmatmul.mubr.f32.gmra.mxu0 %v1596
      %v2836 = vpop.f32.mrf.mxu0
      %v2837 = vadd.f32 0.0, %v2836
      %v2838 = vpop.f32.mrf.mxu0
      %v2839 = vadd.f32 0.0, %v2838
      %2840 = vdwg.mxu0
      %2841 = vmatprep.subr.mxu0 0.0
      %2842 = vmatpush1.xpose.msra.mxu0 %v2124
      %2843 = vmatprep.subr.mxu0 0.0
      %2844 = vmatpush1.xpose.msra.mxu0 %v2121
      %2845 = vmatprep.subr.mxu0 0.0
      %2846 = vmatpush1.xpose.msra.mxu0 %v2118
      %2847 = vmatprep.subr.mxu0 0.0
      %2848 = vmatpush1.xpose.msra.mxu0 %v2115
      %2849 = vmatprep.subr.mxu0 0.0
      %2850 = vmatpush1.xpose.msra.mxu0 %v2112
      %2851 = vmatprep.subr.mxu0 0.0
      %2852 = vmatpush1.xpose.msra.mxu0 %v2109
      %2853 = vmatprep.subr.mxu0 0.0
      %2854 = vmatpush1.xpose.msra.mxu0 %v2106
      %2855 = vmatprep.subr.mxu0 0.0
      %2856 = vmatpush1.xpose.msra.mxu0 %v2103
      %2857 = vmatprep.subr.mxu0 0.0
      %2858 = vmatpush1.xpose.msra.mxu0 %v2100
      %2859 = vmatprep.subr.mxu0 0.0
      %2860 = vmatpush1.xpose.msra.mxu0 %v2097
      %2861 = vmatprep.subr.mxu0 0.0
      %2862 = vmatpush1.xpose.msra.mxu0 %v2094
      %2863 = vmatprep.subr.mxu0 0.0
      %2864 = vmatpush1.xpose.msra.mxu0 %v2091
      %2865 = vmatprep.subr.mxu0 0.0
      %2866 = vmatpush1.xpose.msra.mxu0 %v2088
      %2867 = vmatprep.subr.mxu0 0.0
      %2868 = vmatpush1.xpose.msra.mxu0 %v2085
      %2869 = vmatprep.subr.mxu0 0.0
      %2870 = vmatpush1.xpose.msra.mxu0 %v2082
      %2871 = vmatprep.subr.mxu0 0.0
      %2872 = vmatpush1.xpose.msra.mxu0 %v2079
      %2873 = vmatprep.subr.mxu0 0.0
      %2874 = vmatpush2.xpose.msra.mxu0 %v2172
      %2875 = vmatprep.subr.mxu0 0.0
      %2876 = vmatpush2.xpose.msra.mxu0 %v2169
      %2877 = vmatprep.subr.mxu0 0.0
      %2878 = vmatpush2.xpose.msra.mxu0 %v2166
      %2879 = vmatprep.subr.mxu0 0.0
      %2880 = vmatpush2.xpose.msra.mxu0 %v2163
      %2881 = vmatprep.subr.mxu0 0.0
      %2882 = vmatpush2.xpose.msra.mxu0 %v2160
      %2883 = vmatprep.subr.mxu0 0.0
      %2884 = vmatpush2.xpose.msra.mxu0 %v2157
      %2885 = vmatprep.subr.mxu0 0.0
      %2886 = vmatpush2.xpose.msra.mxu0 %v2154
      %2887 = vmatprep.subr.mxu0 0.0
      %2888 = vmatpush2.xpose.msra.mxu0 %v2151
      %2889 = vmatprep.subr.mxu0 0.0
      %2890 = vmatpush2.xpose.msra.mxu0 %v2148
      %2891 = vmatprep.subr.mxu0 0.0
      %2892 = vmatpush2.xpose.msra.mxu0 %v2145
      %2893 = vmatprep.subr.mxu0 0.0
      %2894 = vmatpush2.xpose.msra.mxu0 %v2142
      %2895 = vmatprep.subr.mxu0 0.0
      %2896 = vmatpush2.xpose.msra.mxu0 %v2139
      %2897 = vmatprep.subr.mxu0 0.0
      %2898 = vmatpush2.xpose.msra.mxu0 %v2136
      %2899 = vmatprep.subr.mxu0 0.0
      %2900 = vmatpush2.xpose.msra.mxu0 %v2133
      %2901 = vmatprep.subr.mxu0 0.0
      %2902 = vmatpush2.xpose.msra.mxu0 %v2130
      %2903 = vmatprep.subr.mxu0 0.0
      %2904 = vmatpush2.xpose.msra.mxu0 %v2127
      %2905 = vmatprep.mubr.f32.mxu0 0.0
      %2906 = vmatmul.mubr.f32.gmra.mxu0 %v1584
      %v2907 = vpop.f32.mrf.mxu0
      %v2908 = vadd.f32 0.0, %v2907
      %v2909 = vpop.f32.mrf.mxu0
      %v2910 = vadd.f32 0.0, %v2909
      %2911 = vmatprep.mubr.f32.mxu0 0.0
      %2912 = vmatmul.mubr.f32.gmra.mxu0 %v1587
      %v2913 = vpop.f32.mrf.mxu0
      %v2914 = vadd.f32 0.0, %v2913
      %v2915 = vpop.f32.mrf.mxu0
      %v2916 = vadd.f32 0.0, %v2915
      %2917 = vmatprep.mubr.f32.mxu0 0.0
      %2918 = vmatmul.mubr.f32.gmra.mxu0 %v1590
      %v2919 = vpop.f32.mrf.mxu0
      %v2920 = vadd.f32 0.0, %v2919
      %v2921 = vpop.f32.mrf.mxu0
      %v2922 = vadd.f32 0.0, %v2921
      %2923 = vmatprep.mubr.f32.mxu0 0.0
      %2924 = vmatmul.mubr.f32.gmra.mxu0 %v1593
      %v2925 = vpop.f32.mrf.mxu0
      %v2926 = vadd.f32 0.0, %v2925
      %v2927 = vpop.f32.mrf.mxu0
      %v2928 = vadd.f32 0.0, %v2927
      %2929 = vmatprep.mubr.f32.mxu0 0.0
      %2930 = vmatmul.mubr.f32.gmra.mxu0 %v1596
      %v2931 = vpop.f32.mrf.mxu0
      %v2932 = vadd.f32 0.0, %v2931
      %v2933 = vpop.f32.mrf.mxu0
      %v2934 = vadd.f32 0.0, %v2933
      %2935 = vdwg.mxu0
      %2936 = vmatprep.subr.mxu0 0.0
      %2937 = vmatpush1.xpose.msra.mxu0 %v2220
      %2938 = vmatprep.subr.mxu0 0.0
      %2939 = vmatpush1.xpose.msra.mxu0 %v2217
      %2940 = vmatprep.subr.mxu0 0.0
      %2941 = vmatpush1.xpose.msra.mxu0 %v2214
      %2942 = vmatprep.subr.mxu0 0.0
      %2943 = vmatpush1.xpose.msra.mxu0 %v2211
      %2944 = vmatprep.subr.mxu0 0.0
      %2945 = vmatpush1.xpose.msra.mxu0 %v2208
      %2946 = vmatprep.subr.mxu0 0.0
      %2947 = vmatpush1.xpose.msra.mxu0 %v2205
      %2948 = vmatprep.subr.mxu0 0.0
      %2949 = vmatpush1.xpose.msra.mxu0 %v2202
      %2950 = vmatprep.subr.mxu0 0.0
      %2951 = vmatpush1.xpose.msra.mxu0 %v2199
      %2952 = vmatprep.subr.mxu0 0.0
      %2953 = vmatpush1.xpose.msra.mxu0 %v2196
      %2954 = vmatprep.subr.mxu0 0.0
      %2955 = vmatpush1.xpose.msra.mxu0 %v2193
      %2956 = vmatprep.subr.mxu0 0.0
      %2957 = vmatpush1.xpose.msra.mxu0 %v2190
      %2958 = vmatprep.subr.mxu0 0.0
      %2959 = vmatpush1.xpose.msra.mxu0 %v2187
      %2960 = vmatprep.subr.mxu0 0.0
      %2961 = vmatpush1.xpose.msra.mxu0 %v2184
      %2962 = vmatprep.subr.mxu0 0.0
      %2963 = vmatpush1.xpose.msra.mxu0 %v2181
      %2964 = vmatprep.subr.mxu0 0.0
      %2965 = vmatpush1.xpose.msra.mxu0 %v2178
      %2966 = vmatprep.subr.mxu0 0.0
      %2967 = vmatpush1.xpose.msra.mxu0 %v2175
      %2968 = vmatprep.subr.mxu0 0.0
      %2969 = vmatpush2.xpose.msra.mxu0 %v2268
      %2970 = vmatprep.subr.mxu0 0.0
      %2971 = vmatpush2.xpose.msra.mxu0 %v2265
      %2972 = vmatprep.subr.mxu0 0.0
      %2973 = vmatpush2.xpose.msra.mxu0 %v2262
      %2974 = vmatprep.subr.mxu0 0.0
      %2975 = vmatpush2.xpose.msra.mxu0 %v2259
      %2976 = vmatprep.subr.mxu0 0.0
      %2977 = vmatpush2.xpose.msra.mxu0 %v2256
      %2978 = vmatprep.subr.mxu0 0.0
      %2979 = vmatpush2.xpose.msra.mxu0 %v2253
      %2980 = vmatprep.subr.mxu0 0.0
      %2981 = vmatpush2.xpose.msra.mxu0 %v2250
      %2982 = vmatprep.subr.mxu0 0.0
      %2983 = vmatpush2.xpose.msra.mxu0 %v2247
      %2984 = vmatprep.subr.mxu0 0.0
      %2985 = vmatpush2.xpose.msra.mxu0 %v2244
      %2986 = vmatprep.subr.mxu0 0.0
      %2987 = vmatpush2.xpose.msra.mxu0 %v2241
      %2988 = vmatprep.subr.mxu0 0.0
      %2989 = vmatpush2.xpose.msra.mxu0 %v2238
      %2990 = vmatprep.subr.mxu0 0.0
      %2991 = vmatpush2.xpose.msra.mxu0 %v2235
      %2992 = vmatprep.subr.mxu0 0.0
      %2993 = vmatpush2.xpose.msra.mxu0 %v2232
      %2994 = vmatprep.subr.mxu0 0.0
      %2995 = vmatpush2.xpose.msra.mxu0 %v2229
      %2996 = vmatprep.subr.mxu0 0.0
      %2997 = vmatpush2.xpose.msra.mxu0 %v2226
      %2998 = vmatprep.subr.mxu0 0.0
      %2999 = vmatpush2.xpose.msra.mxu0 %v2223
      %3000 = vmatprep.mubr.f32.mxu0 0.0
      %3001 = vmatmul.mubr.f32.gmra.mxu0 %v1584
      %v3002 = vpop.f32.mrf.mxu0
      %v3003 = vadd.f32 0.0, %v3002
      %v3004 = vpop.f32.mrf.mxu0
      %v3005 = vadd.f32 0.0, %v3004
      %3006 = vmatprep.mubr.f32.mxu0 0.0
      %3007 = vmatmul.mubr.f32.gmra.mxu0 %v1587
      %v3008 = vpop.f32.mrf.mxu0
      %v3009 = vadd.f32 0.0, %v3008
      %v3010 = vpop.f32.mrf.mxu0
      %v3011 = vadd.f32 0.0, %v3010
      %3012 = vmatprep.mubr.f32.mxu0 0.0
      %3013 = vmatmul.mubr.f32.gmra.mxu0 %v1590
      %v3014 = vpop.f32.mrf.mxu0
      %v3015 = vadd.f32 0.0, %v3014
      %v3016 = vpop.f32.mrf.mxu0
      %v3017 = vadd.f32 0.0, %v3016
      %3018 = vmatprep.mubr.f32.mxu0 0.0
      %3019 = vmatmul.mubr.f32.gmra.mxu0 %v1593
      %v3020 = vpop.f32.mrf.mxu0
      %v3021 = vadd.f32 0.0, %v3020
      %v3022 = vpop.f32.mrf.mxu0
      %v3023 = vadd.f32 0.0, %v3022
      %3024 = vmatprep.mubr.f32.mxu0 0.0
      %3025 = vmatmul.mubr.f32.gmra.mxu0 %v1596
      %v3026 = vpop.f32.mrf.mxu0
      %v3027 = vadd.f32 0.0, %v3026
      %v3028 = vpop.f32.mrf.mxu0
      %v3029 = vadd.f32 0.0, %v3028
      %3030 = vdwg.mxu0
      %3031 = vmatprep.subr.mxu0 0.0
      %3032 = vmatpush1.xpose.msra.mxu0 %v2316
      %3033 = vmatprep.subr.mxu0 0.0
      %3034 = vmatpush1.xpose.msra.mxu0 %v2313
      %3035 = vmatprep.subr.mxu0 0.0
      %3036 = vmatpush1.xpose.msra.mxu0 %v2310
      %3037 = vmatprep.subr.mxu0 0.0
      %3038 = vmatpush1.xpose.msra.mxu0 %v2307
      %3039 = vmatprep.subr.mxu0 0.0
      %3040 = vmatpush1.xpose.msra.mxu0 %v2304
      %3041 = vmatprep.subr.mxu0 0.0
      %3042 = vmatpush1.xpose.msra.mxu0 %v2301
      %3043 = vmatprep.subr.mxu0 0.0
      %3044 = vmatpush1.xpose.msra.mxu0 %v2298
      %3045 = vmatprep.subr.mxu0 0.0
      %3046 = vmatpush1.xpose.msra.mxu0 %v2295
      %3047 = vmatprep.subr.mxu0 0.0
      %3048 = vmatpush1.xpose.msra.mxu0 %v2292
      %3049 = vmatprep.subr.mxu0 0.0
      %3050 = vmatpush1.xpose.msra.mxu0 %v2289
      %3051 = vmatprep.subr.mxu0 0.0
      %3052 = vmatpush1.xpose.msra.mxu0 %v2286
      %3053 = vmatprep.subr.mxu0 0.0
      %3054 = vmatpush1.xpose.msra.mxu0 %v2283
      %3055 = vmatprep.subr.mxu0 0.0
      %3056 = vmatpush1.xpose.msra.mxu0 %v2280
      %3057 = vmatprep.subr.mxu0 0.0
      %3058 = vmatpush1.xpose.msra.mxu0 %v2277
      %3059 = vmatprep.subr.mxu0 0.0
      %3060 = vmatpush1.xpose.msra.mxu0 %v2274
      %3061 = vmatprep.subr.mxu0 0.0
      %3062 = vmatpush1.xpose.msra.mxu0 %v2271
      %3063 = vmatprep.subr.mxu0 0.0
      %3064 = vmatpush2.xpose.msra.mxu0 %v2364
      %3065 = vmatprep.subr.mxu0 0.0
      %3066 = vmatpush2.xpose.msra.mxu0 %v2361
      %3067 = vmatprep.subr.mxu0 0.0
      %3068 = vmatpush2.xpose.msra.mxu0 %v2358
      %3069 = vmatprep.subr.mxu0 0.0
      %3070 = vmatpush2.xpose.msra.mxu0 %v2355
      %3071 = vmatprep.subr.mxu0 0.0
      %3072 = vmatpush2.xpose.msra.mxu0 %v2352
      %3073 = vmatprep.subr.mxu0 0.0
      %3074 = vmatpush2.xpose.msra.mxu0 %v2349
      %3075 = vmatprep.subr.mxu0 0.0
      %3076 = vmatpush2.xpose.msra.mxu0 %v2346
      %3077 = vmatprep.subr.mxu0 0.0
      %3078 = vmatpush2.xpose.msra.mxu0 %v2343
      %3079 = vmatprep.subr.mxu0 0.0
      %3080 = vmatpush2.xpose.msra.mxu0 %v2340
      %3081 = vmatprep.subr.mxu0 0.0
      %3082 = vmatpush2.xpose.msra.mxu0 %v2337
      %3083 = vmatprep.subr.mxu0 0.0
      %3084 = vmatpush2.xpose.msra.mxu0 %v2334
      %3085 = vmatprep.subr.mxu0 0.0
      %3086 = vmatpush2.xpose.msra.mxu0 %v2331
      %3087 = vmatprep.subr.mxu0 0.0
      %3088 = vmatpush2.xpose.msra.mxu0 %v2328
      %3089 = vmatprep.subr.mxu0 0.0
      %3090 = vmatpush2.xpose.msra.mxu0 %v2325
      %3091 = vmatprep.subr.mxu0 0.0
      %3092 = vmatpush2.xpose.msra.mxu0 %v2322
      %3093 = vmatprep.subr.mxu0 0.0
      %3094 = vmatpush2.xpose.msra.mxu0 %v2319
      %3095 = vmatprep.mubr.f32.mxu0 0.0
      %3096 = vmatmul.mubr.f32.gmra.mxu0 %v1584
      %v3097 = vpop.f32.mrf.mxu0
      %v3098 = vadd.f32 0.0, %v3097
      %v3099 = vpop.f32.mrf.mxu0
      %v3100 = vadd.f32 0.0, %v3099
      %3101 = vmatprep.mubr.f32.mxu0 0.0
      %3102 = vmatmul.mubr.f32.gmra.mxu0 %v1587
      %v3103 = vpop.f32.mrf.mxu0
      %v3104 = vadd.f32 0.0, %v3103
      %v3105 = vpop.f32.mrf.mxu0
      %v3106 = vadd.f32 0.0, %v3105
      %3107 = vmatprep.mubr.f32.mxu0 0.0
      %3108 = vmatmul.mubr.f32.gmra.mxu0 %v1590
      %v3109 = vpop.f32.mrf.mxu0
      %v3110 = vadd.f32 0.0, %v3109
      %v3111 = vpop.f32.mrf.mxu0
      %v3112 = vadd.f32 0.0, %v3111
      %3113 = vmatprep.mubr.f32.mxu0 0.0
      %3114 = vmatmul.mubr.f32.gmra.mxu0 %v1593
      %v3115 = vpop.f32.mrf.mxu0
      %v3116 = vadd.f32 0.0, %v3115
      %v3117 = vpop.f32.mrf.mxu0
      %v3118 = vadd.f32 0.0, %v3117
      %3119 = vmatprep.mubr.f32.mxu0 0.0
      %3120 = vmatmul.mubr.f32.gmra.mxu0 %v1596
      %v3121 = vpop.f32.mrf.mxu0
      %v3122 = vadd.f32 0.0, %v3121
      %v3123 = vpop.f32.mrf.mxu0
      %v3124 = vadd.f32 0.0, %v3123
      %3125 = vdwg.mxu0
      %vm3126 = vcmask 523264
      %v3128 = vsel %vm3126, %v1316, 0
      %v3131 = vsel %vm3126, %v1317, 0
      %v3134 = vsel %vm3126, %v1318, 0
      %v3137 = vsel %vm3126, %v1319, 0
      %v3140 = vsel %vm3126, %v1320, 0
      %3142 = vmatprep.subr.mxu0 0.0
      %3143 = vmatpush1.msra.mxu0 0.0
      %3144 = vmatprep.subr.mxu0 0.0
      %3145 = vmatpush1.msra.mxu0 0.0
      %3146 = vmatprep.subr.mxu0 0.0
      %3147 = vmatpush1.msra.mxu0 0.0
      %3148 = vmatprep.subr.mxu0 0.0
      %3149 = vmatpush1.msra.mxu0 0.0
      %3150 = vmatprep.subr.mxu0 0.0
      %3151 = vmatpush1.msra.mxu0 0.0
      %3152 = vmatprep.subr.mxu0 0.0
      %3153 = vmatpush1.msra.mxu0 0.0
      %3154 = vmatprep.subr.mxu0 0.0
      %3155 = vmatpush1.msra.mxu0 0.0
      %3156 = vmatprep.subr.mxu0 0.0
      %3157 = vmatpush1.msra.mxu0 0.0
      %3158 = vmatprep.subr.mxu0 %v851
      %3159 = vmatpush1.msra.mxu0 %v850
      %3160 = vmatprep.subr.mxu0 %v835
      %3161 = vmatpush1.msra.mxu0 %v834
      %3162 = vmatprep.subr.mxu0 %v819
      %3163 = vmatpush1.msra.mxu0 %v818
      %3164 = vmatprep.subr.mxu0 %v803
      %3165 = vmatpush1.msra.mxu0 %v802
      %3166 = vmatprep.subr.mxu0 %v787
      %3167 = vmatpush1.msra.mxu0 %v786
      %3168 = vmatprep.subr.mxu0 %v771
      %3169 = vmatpush1.msra.mxu0 %v770
      %3170 = vmatprep.subr.mxu0 %v755
      %3171 = vmatpush1.msra.mxu0 %v754
      %3172 = vmatprep.subr.mxu0 %v739
      %3173 = vmatpush1.msra.mxu0 %v738
      %3174 = vmatprep.subr.mxu0 0.0
      %3175 = vmatpush2.msra.mxu0 0.0
      %3176 = vmatprep.subr.mxu0 0.0
      %3177 = vmatpush2.msra.mxu0 0.0
      %3178 = vmatprep.subr.mxu0 0.0
      %3179 = vmatpush2.msra.mxu0 0.0
      %3180 = vmatprep.subr.mxu0 0.0
      %3181 = vmatpush2.msra.mxu0 0.0
      %3182 = vmatprep.subr.mxu0 0.0
      %3183 = vmatpush2.msra.mxu0 0.0
      %3184 = vmatprep.subr.mxu0 0.0
      %3185 = vmatpush2.msra.mxu0 0.0
      %3186 = vmatprep.subr.mxu0 0.0
      %3187 = vmatpush2.msra.mxu0 0.0
      %3188 = vmatprep.subr.mxu0 0.0
      %3189 = vmatpush2.msra.mxu0 0.0
      %3190 = vmatprep.subr.mxu0 0.0
      %3191 = vmatpush2.msra.mxu0 0.0
      %3192 = vmatprep.subr.mxu0 0.0
      %3193 = vmatpush2.msra.mxu0 0.0
      %3194 = vmatprep.subr.mxu0 0.0
      %3195 = vmatpush2.msra.mxu0 0.0
      %3196 = vmatprep.subr.mxu0 0.0
      %3197 = vmatpush2.msra.mxu0 0.0
      %3198 = vmatprep.subr.mxu0 0.0
      %3199 = vmatpush2.msra.mxu0 0.0
      %3200 = vmatprep.subr.mxu0 0.0
      %3201 = vmatpush2.msra.mxu0 0.0
      %3202 = vmatprep.subr.mxu0 0.0
      %3203 = vmatpush2.msra.mxu0 0.0
      %3204 = vmatprep.subr.mxu0 0.0
      %3205 = vmatpush2.msra.mxu0 0.0
      %3206 = vmatprep.mubr.f32.mxu0 0.0
      %3207 = vmatmul.mubr.f32.gmra.mxu0 %v3128
      %v3208 = vpop.f32.mrf.mxu0
      %v3209 = vadd.f32 %v2433, %v3208
      %v3210 = vpop.f32.mrf.mxu0
      %v3211 = vadd.f32 %v2435, %v3210
      %3212 = vmatprep.mubr.f32.mxu0 0.0
      %3213 = vmatmul.mubr.f32.gmra.mxu0 %v3131
      %v3214 = vpop.f32.mrf.mxu0
      %v3215 = vadd.f32 %v2439, %v3214
      %v3216 = vpop.f32.mrf.mxu0
      %v3217 = vadd.f32 %v2441, %v3216
      %3218 = vmatprep.mubr.f32.mxu0 0.0
      %3219 = vmatmul.mubr.f32.gmra.mxu0 %v3134
      %v3220 = vpop.f32.mrf.mxu0
      %v3221 = vadd.f32 %v2445, %v3220
      %v3222 = vpop.f32.mrf.mxu0
      %v3223 = vadd.f32 %v2447, %v3222
      %3224 = vmatprep.mubr.f32.mxu0 0.0
      %3225 = vmatmul.mubr.f32.gmra.mxu0 %v3137
      %v3226 = vpop.f32.mrf.mxu0
      %v3227 = vadd.f32 %v2451, %v3226
      %v3228 = vpop.f32.mrf.mxu0
      %v3229 = vadd.f32 %v2453, %v3228
      %3230 = vmatprep.mubr.f32.mxu0 0.0
      %3231 = vmatmul.mubr.f32.gmra.mxu0 %v3140
      %v3232 = vpop.f32.mrf.mxu0
      %v3233 = vadd.f32 %v2457, %v3232
      %v3234 = vpop.f32.mrf.mxu0
      %v3235 = vadd.f32 %v2459, %v3234
      %3236 = vdwg.mxu0
      %3237 = vmatprep.subr.mxu0 0.0
      %3238 = vmatpush1.msra.mxu0 0.0
      %3239 = vmatprep.subr.mxu0 0.0
      %3240 = vmatpush1.msra.mxu0 0.0
      %3241 = vmatprep.subr.mxu0 0.0
      %3242 = vmatpush1.msra.mxu0 0.0
      %3243 = vmatprep.subr.mxu0 0.0
      %3244 = vmatpush1.msra.mxu0 0.0
      %3245 = vmatprep.subr.mxu0 0.0
      %3246 = vmatpush1.msra.mxu0 0.0
      %3247 = vmatprep.subr.mxu0 0.0
      %3248 = vmatpush1.msra.mxu0 0.0
      %3249 = vmatprep.subr.mxu0 0.0
      %3250 = vmatpush1.msra.mxu0 0.0
      %3251 = vmatprep.subr.mxu0 0.0
      %3252 = vmatpush1.msra.mxu0 0.0
      %3253 = vmatprep.subr.mxu0 %v853
      %3254 = vmatpush1.msra.mxu0 %v852
      %3255 = vmatprep.subr.mxu0 %v837
      %3256 = vmatpush1.msra.mxu0 %v836
      %3257 = vmatprep.subr.mxu0 %v821
      %3258 = vmatpush1.msra.mxu0 %v820
      %3259 = vmatprep.subr.mxu0 %v805
      %3260 = vmatpush1.msra.mxu0 %v804
      %3261 = vmatprep.subr.mxu0 %v789
      %3262 = vmatpush1.msra.mxu0 %v788
      %3263 = vmatprep.subr.mxu0 %v773
      %3264 = vmatpush1.msra.mxu0 %v772
      %3265 = vmatprep.subr.mxu0 %v757
      %3266 = vmatpush1.msra.mxu0 %v756
      %3267 = vmatprep.subr.mxu0 %v741
      %3268 = vmatpush1.msra.mxu0 %v740
      %3269 = vmatprep.subr.mxu0 0.0
      %3270 = vmatpush2.msra.mxu0 0.0
      %3271 = vmatprep.subr.mxu0 0.0
      %3272 = vmatpush2.msra.mxu0 0.0
      %3273 = vmatprep.subr.mxu0 0.0
      %3274 = vmatpush2.msra.mxu0 0.0
      %3275 = vmatprep.subr.mxu0 0.0
      %3276 = vmatpush2.msra.mxu0 0.0
      %3277 = vmatprep.subr.mxu0 0.0
      %3278 = vmatpush2.msra.mxu0 0.0
      %3279 = vmatprep.subr.mxu0 0.0
      %3280 = vmatpush2.msra.mxu0 0.0
      %3281 = vmatprep.subr.mxu0 0.0
      %3282 = vmatpush2.msra.mxu0 0.0
      %3283 = vmatprep.subr.mxu0 0.0
      %3284 = vmatpush2.msra.mxu0 0.0
      %3285 = vmatprep.subr.mxu0 0.0
      %3286 = vmatpush2.msra.mxu0 0.0
      %3287 = vmatprep.subr.mxu0 0.0
      %3288 = vmatpush2.msra.mxu0 0.0
      %3289 = vmatprep.subr.mxu0 0.0
      %3290 = vmatpush2.msra.mxu0 0.0
      %3291 = vmatprep.subr.mxu0 0.0
      %3292 = vmatpush2.msra.mxu0 0.0
      %3293 = vmatprep.subr.mxu0 0.0
      %3294 = vmatpush2.msra.mxu0 0.0
      %3295 = vmatprep.subr.mxu0 0.0
      %3296 = vmatpush2.msra.mxu0 0.0
      %3297 = vmatprep.subr.mxu0 0.0
      %3298 = vmatpush2.msra.mxu0 0.0
      %3299 = vmatprep.subr.mxu0 0.0
      %3300 = vmatpush2.msra.mxu0 0.0
      %3301 = vmatprep.mubr.f32.mxu0 0.0
      %3302 = vmatmul.mubr.f32.gmra.mxu0 %v3128
      %v3303 = vpop.f32.mrf.mxu0
      %v3304 = vadd.f32 %v2528, %v3303
      %v3305 = vpop.f32.mrf.mxu0
      %v3306 = vadd.f32 %v2530, %v3305
      %3307 = vmatprep.mubr.f32.mxu0 0.0
      %3308 = vmatmul.mubr.f32.gmra.mxu0 %v3131
      %v3309 = vpop.f32.mrf.mxu0
      %v3310 = vadd.f32 %v2534, %v3309
      %v3311 = vpop.f32.mrf.mxu0
      %v3312 = vadd.f32 %v2536, %v3311
      %3313 = vmatprep.mubr.f32.mxu0 0.0
      %3314 = vmatmul.mubr.f32.gmra.mxu0 %v3134
      %v3315 = vpop.f32.mrf.mxu0
      %v3316 = vadd.f32 %v2540, %v3315
      %v3317 = vpop.f32.mrf.mxu0
      %v3318 = vadd.f32 %v2542, %v3317
      %3319 = vmatprep.mubr.f32.mxu0 0.0
      %3320 = vmatmul.mubr.f32.gmra.mxu0 %v3137
      %v3321 = vpop.f32.mrf.mxu0
      %v3322 = vadd.f32 %v2546, %v3321
      %v3323 = vpop.f32.mrf.mxu0
      %v3324 = vadd.f32 %v2548, %v3323
      %3325 = vmatprep.mubr.f32.mxu0 0.0
      %3326 = vmatmul.mubr.f32.gmra.mxu0 %v3140
      %v3327 = vpop.f32.mrf.mxu0
      %v3328 = vadd.f32 %v2552, %v3327
      %v3329 = vpop.f32.mrf.mxu0
      %v3330 = vadd.f32 %v2554, %v3329
      %3331 = vdwg.mxu0
      %3332 = vmatprep.subr.mxu0 0.0
      %3333 = vmatpush1.msra.mxu0 0.0
      %3334 = vmatprep.subr.mxu0 0.0
      %3335 = vmatpush1.msra.mxu0 0.0
      %3336 = vmatprep.subr.mxu0 0.0
      %3337 = vmatpush1.msra.mxu0 0.0
      %3338 = vmatprep.subr.mxu0 0.0
      %3339 = vmatpush1.msra.mxu0 0.0
      %3340 = vmatprep.subr.mxu0 0.0
      %3341 = vmatpush1.msra.mxu0 0.0
      %3342 = vmatprep.subr.mxu0 0.0
      %3343 = vmatpush1.msra.mxu0 0.0
      %3344 = vmatprep.subr.mxu0 0.0
      %3345 = vmatpush1.msra.mxu0 0.0
      %3346 = vmatprep.subr.mxu0 0.0
      %3347 = vmatpush1.msra.mxu0 0.0
      %3348 = vmatprep.subr.mxu0 %v855
      %3349 = vmatpush1.msra.mxu0 %v854
      %3350 = vmatprep.subr.mxu0 %v839
      %3351 = vmatpush1.msra.mxu0 %v838
      %3352 = vmatprep.subr.mxu0 %v823
      %3353 = vmatpush1.msra.mxu0 %v822
      %3354 = vmatprep.subr.mxu0 %v807
      %3355 = vmatpush1.msra.mxu0 %v806
      %3356 = vmatprep.subr.mxu0 %v791
      %3357 = vmatpush1.msra.mxu0 %v790
      %3358 = vmatprep.subr.mxu0 %v775
      %3359 = vmatpush1.msra.mxu0 %v774
      %3360 = vmatprep.subr.mxu0 %v759
      %3361 = vmatpush1.msra.mxu0 %v758
      %3362 = vmatprep.subr.mxu0 %v743
      %3363 = vmatpush1.msra.mxu0 %v742
      %3364 = vmatprep.subr.mxu0 0.0
      %3365 = vmatpush2.msra.mxu0 0.0
      %3366 = vmatprep.subr.mxu0 0.0
      %3367 = vmatpush2.msra.mxu0 0.0
      %3368 = vmatprep.subr.mxu0 0.0
      %3369 = vmatpush2.msra.mxu0 0.0
      %3370 = vmatprep.subr.mxu0 0.0
      %3371 = vmatpush2.msra.mxu0 0.0
      %3372 = vmatprep.subr.mxu0 0.0
      %3373 = vmatpush2.msra.mxu0 0.0
      %3374 = vmatprep.subr.mxu0 0.0
      %3375 = vmatpush2.msra.mxu0 0.0
      %3376 = vmatprep.subr.mxu0 0.0
      %3377 = vmatpush2.msra.mxu0 0.0
      %3378 = vmatprep.subr.mxu0 0.0
      %3379 = vmatpush2.msra.mxu0 0.0
      %3380 = vmatprep.subr.mxu0 0.0
      %3381 = vmatpush2.msra.mxu0 0.0
      %3382 = vmatprep.subr.mxu0 0.0
      %3383 = vmatpush2.msra.mxu0 0.0
      %3384 = vmatprep.subr.mxu0 0.0
      %3385 = vmatpush2.msra.mxu0 0.0
      %3386 = vmatprep.subr.mxu0 0.0
      %3387 = vmatpush2.msra.mxu0 0.0
      %3388 = vmatprep.subr.mxu0 0.0
      %3389 = vmatpush2.msra.mxu0 0.0
      %3390 = vmatprep.subr.mxu0 0.0
      %3391 = vmatpush2.msra.mxu0 0.0
      %3392 = vmatprep.subr.mxu0 0.0
      %3393 = vmatpush2.msra.mxu0 0.0
      %3394 = vmatprep.subr.mxu0 0.0
      %3395 = vmatpush2.msra.mxu0 0.0
      %3396 = vmatprep.mubr.f32.mxu0 0.0
      %3397 = vmatmul.mubr.f32.gmra.mxu0 %v3128
      %v3398 = vpop.f32.mrf.mxu0
      %v3399 = vadd.f32 %v2623, %v3398
      %v3400 = vpop.f32.mrf.mxu0
      %v3401 = vadd.f32 %v2625, %v3400
      %3402 = vmatprep.mubr.f32.mxu0 0.0
      %3403 = vmatmul.mubr.f32.gmra.mxu0 %v3131
      %v3404 = vpop.f32.mrf.mxu0
      %v3405 = vadd.f32 %v2629, %v3404
      %v3406 = vpop.f32.mrf.mxu0
      %v3407 = vadd.f32 %v2631, %v3406
      %3408 = vmatprep.mubr.f32.mxu0 0.0
      %3409 = vmatmul.mubr.f32.gmra.mxu0 %v3134
      %v3410 = vpop.f32.mrf.mxu0
      %v3411 = vadd.f32 %v2635, %v3410
      %v3412 = vpop.f32.mrf.mxu0
      %v3413 = vadd.f32 %v2637, %v3412
      %3414 = vmatprep.mubr.f32.mxu0 0.0
      %3415 = vmatmul.mubr.f32.gmra.mxu0 %v3137
      %v3416 = vpop.f32.mrf.mxu0
      %v3417 = vadd.f32 %v2641, %v3416
      %v3418 = vpop.f32.mrf.mxu0
      %v3419 = vadd.f32 %v2643, %v3418
      %3420 = vmatprep.mubr.f32.mxu0 0.0
      %3421 = vmatmul.mubr.f32.gmra.mxu0 %v3140
      %v3422 = vpop.f32.mrf.mxu0
      %v3423 = vadd.f32 %v2647, %v3422
      %v3424 = vpop.f32.mrf.mxu0
      %v3425 = vadd.f32 %v2649, %v3424
      %3426 = vdwg.mxu0
      %3427 = vmatprep.subr.mxu0 0.0
      %3428 = vmatpush1.msra.mxu0 0.0
      %3429 = vmatprep.subr.mxu0 0.0
      %3430 = vmatpush1.msra.mxu0 0.0
      %3431 = vmatprep.subr.mxu0 0.0
      %3432 = vmatpush1.msra.mxu0 0.0
      %3433 = vmatprep.subr.mxu0 0.0
      %3434 = vmatpush1.msra.mxu0 0.0
      %3435 = vmatprep.subr.mxu0 0.0
      %3436 = vmatpush1.msra.mxu0 0.0
      %3437 = vmatprep.subr.mxu0 0.0
      %3438 = vmatpush1.msra.mxu0 0.0
      %3439 = vmatprep.subr.mxu0 0.0
      %3440 = vmatpush1.msra.mxu0 0.0
      %3441 = vmatprep.subr.mxu0 0.0
      %3442 = vmatpush1.msra.mxu0 0.0
      %3443 = vmatprep.subr.mxu0 %v857
      %3444 = vmatpush1.msra.mxu0 %v856
      %3445 = vmatprep.subr.mxu0 %v841
      %3446 = vmatpush1.msra.mxu0 %v840
      %3447 = vmatprep.subr.mxu0 %v825
      %3448 = vmatpush1.msra.mxu0 %v824
      %3449 = vmatprep.subr.mxu0 %v809
      %3450 = vmatpush1.msra.mxu0 %v808
      %3451 = vmatprep.subr.mxu0 %v793
      %3452 = vmatpush1.msra.mxu0 %v792
      %3453 = vmatprep.subr.mxu0 %v777
      %3454 = vmatpush1.msra.mxu0 %v776
      %3455 = vmatprep.subr.mxu0 %v761
      %3456 = vmatpush1.msra.mxu0 %v760
      %3457 = vmatprep.subr.mxu0 %v745
      %3458 = vmatpush1.msra.mxu0 %v744
      %3459 = vmatprep.subr.mxu0 0.0
      %3460 = vmatpush2.msra.mxu0 0.0
      %3461 = vmatprep.subr.mxu0 0.0
      %3462 = vmatpush2.msra.mxu0 0.0
      %3463 = vmatprep.subr.mxu0 0.0
      %3464 = vmatpush2.msra.mxu0 0.0
      %3465 = vmatprep.subr.mxu0 0.0
      %3466 = vmatpush2.msra.mxu0 0.0
      %3467 = vmatprep.subr.mxu0 0.0
      %3468 = vmatpush2.msra.mxu0 0.0
      %3469 = vmatprep.subr.mxu0 0.0
      %3470 = vmatpush2.msra.mxu0 0.0
      %3471 = vmatprep.subr.mxu0 0.0
      %3472 = vmatpush2.msra.mxu0 0.0
      %3473 = vmatprep.subr.mxu0 0.0
      %3474 = vmatpush2.msra.mxu0 0.0
      %3475 = vmatprep.subr.mxu0 0.0
      %3476 = vmatpush2.msra.mxu0 0.0
      %3477 = vmatprep.subr.mxu0 0.0
      %3478 = vmatpush2.msra.mxu0 0.0
      %3479 = vmatprep.subr.mxu0 0.0
      %3480 = vmatpush2.msra.mxu0 0.0
      %3481 = vmatprep.subr.mxu0 0.0
      %3482 = vmatpush2.msra.mxu0 0.0
      %3483 = vmatprep.subr.mxu0 0.0
      %3484 = vmatpush2.msra.mxu0 0.0
      %3485 = vmatprep.subr.mxu0 0.0
      %3486 = vmatpush2.msra.mxu0 0.0
      %3487 = vmatprep.subr.mxu0 0.0
      %3488 = vmatpush2.msra.mxu0 0.0
      %3489 = vmatprep.subr.mxu0 0.0
      %3490 = vmatpush2.msra.mxu0 0.0
      %3491 = vmatprep.mubr.f32.mxu0 0.0
      %3492 = vmatmul.mubr.f32.gmra.mxu0 %v3128
      %v3493 = vpop.f32.mrf.mxu0
      %v3494 = vadd.f32 %v2718, %v3493
      %v3495 = vpop.f32.mrf.mxu0
      %v3496 = vadd.f32 %v2720, %v3495
      %3497 = vmatprep.mubr.f32.mxu0 0.0
      %3498 = vmatmul.mubr.f32.gmra.mxu0 %v3131
      %v3499 = vpop.f32.mrf.mxu0
      %v3500 = vadd.f32 %v2724, %v3499
      %v3501 = vpop.f32.mrf.mxu0
      %v3502 = vadd.f32 %v2726, %v3501
      %3503 = vmatprep.mubr.f32.mxu0 0.0
      %3504 = vmatmul.mubr.f32.gmra.mxu0 %v3134
      %v3505 = vpop.f32.mrf.mxu0
      %v3506 = vadd.f32 %v2730, %v3505
      %v3507 = vpop.f32.mrf.mxu0
      %v3508 = vadd.f32 %v2732, %v3507
      %3509 = vmatprep.mubr.f32.mxu0 0.0
      %3510 = vmatmul.mubr.f32.gmra.mxu0 %v3137
      %v3511 = vpop.f32.mrf.mxu0
      %v3512 = vadd.f32 %v2736, %v3511
      %v3513 = vpop.f32.mrf.mxu0
      %v3514 = vadd.f32 %v2738, %v3513
      %3515 = vmatprep.mubr.f32.mxu0 0.0
      %3516 = vmatmul.mubr.f32.gmra.mxu0 %v3140
      %v3517 = vpop.f32.mrf.mxu0
      %v3518 = vadd.f32 %v2742, %v3517
      %v3519 = vpop.f32.mrf.mxu0
      %v3520 = vadd.f32 %v2744, %v3519
      %3521 = vdwg.mxu0
      %3522 = vmatprep.subr.mxu0 0.0
      %3523 = vmatpush1.msra.mxu0 0.0
      %3524 = vmatprep.subr.mxu0 0.0
      %3525 = vmatpush1.msra.mxu0 0.0
      %3526 = vmatprep.subr.mxu0 0.0
      %3527 = vmatpush1.msra.mxu0 0.0
      %3528 = vmatprep.subr.mxu0 0.0
      %3529 = vmatpush1.msra.mxu0 0.0
      %3530 = vmatprep.subr.mxu0 0.0
      %3531 = vmatpush1.msra.mxu0 0.0
      %3532 = vmatprep.subr.mxu0 0.0
      %3533 = vmatpush1.msra.mxu0 0.0
      %3534 = vmatprep.subr.mxu0 0.0
      %3535 = vmatpush1.msra.mxu0 0.0
      %3536 = vmatprep.subr.mxu0 0.0
      %3537 = vmatpush1.msra.mxu0 0.0
      %3538 = vmatprep.subr.mxu0 %v859
      %3539 = vmatpush1.msra.mxu0 %v858
      %3540 = vmatprep.subr.mxu0 %v843
      %3541 = vmatpush1.msra.mxu0 %v842
      %3542 = vmatprep.subr.mxu0 %v827
      %3543 = vmatpush1.msra.mxu0 %v826
      %3544 = vmatprep.subr.mxu0 %v811
      %3545 = vmatpush1.msra.mxu0 %v810
      %3546 = vmatprep.subr.mxu0 %v795
      %3547 = vmatpush1.msra.mxu0 %v794
      %3548 = vmatprep.subr.mxu0 %v779
      %3549 = vmatpush1.msra.mxu0 %v778
      %3550 = vmatprep.subr.mxu0 %v763
      %3551 = vmatpush1.msra.mxu0 %v762
      %3552 = vmatprep.subr.mxu0 %v747
      %3553 = vmatpush1.msra.mxu0 %v746
      %3554 = vmatprep.subr.mxu0 0.0
      %3555 = vmatpush2.msra.mxu0 0.0
      %3556 = vmatprep.subr.mxu0 0.0
      %3557 = vmatpush2.msra.mxu0 0.0
      %3558 = vmatprep.subr.mxu0 0.0
      %3559 = vmatpush2.msra.mxu0 0.0
      %3560 = vmatprep.subr.mxu0 0.0
      %3561 = vmatpush2.msra.mxu0 0.0
      %3562 = vmatprep.subr.mxu0 0.0
      %3563 = vmatpush2.msra.mxu0 0.0
      %3564 = vmatprep.subr.mxu0 0.0
      %3565 = vmatpush2.msra.mxu0 0.0
      %3566 = vmatprep.subr.mxu0 0.0
      %3567 = vmatpush2.msra.mxu0 0.0
      %3568 = vmatprep.subr.mxu0 0.0
      %3569 = vmatpush2.msra.mxu0 0.0
      %3570 = vmatprep.subr.mxu0 0.0
      %3571 = vmatpush2.msra.mxu0 0.0
      %3572 = vmatprep.subr.mxu0 0.0
      %3573 = vmatpush2.msra.mxu0 0.0
      %3574 = vmatprep.subr.mxu0 0.0
      %3575 = vmatpush2.msra.mxu0 0.0
      %3576 = vmatprep.subr.mxu0 0.0
      %3577 = vmatpush2.msra.mxu0 0.0
      %3578 = vmatprep.subr.mxu0 0.0
      %3579 = vmatpush2.msra.mxu0 0.0
      %3580 = vmatprep.subr.mxu0 0.0
      %3581 = vmatpush2.msra.mxu0 0.0
      %3582 = vmatprep.subr.mxu0 0.0
      %3583 = vmatpush2.msra.mxu0 0.0
      %3584 = vmatprep.subr.mxu0 0.0
      %3585 = vmatpush2.msra.mxu0 0.0
      %3586 = vmatprep.mubr.f32.mxu0 0.0
      %3587 = vmatmul.mubr.f32.gmra.mxu0 %v3128
      %v3588 = vpop.f32.mrf.mxu0
      %v3589 = vadd.f32 %v2813, %v3588
      %v3590 = vpop.f32.mrf.mxu0
      %v3591 = vadd.f32 %v2815, %v3590
      %3592 = vmatprep.mubr.f32.mxu0 0.0
      %3593 = vmatmul.mubr.f32.gmra.mxu0 %v3131
      %v3594 = vpop.f32.mrf.mxu0
      %v3595 = vadd.f32 %v2819, %v3594
      %v3596 = vpop.f32.mrf.mxu0
      %v3597 = vadd.f32 %v2821, %v3596
      %3598 = vmatprep.mubr.f32.mxu0 0.0
      %3599 = vmatmul.mubr.f32.gmra.mxu0 %v3134
      %v3600 = vpop.f32.mrf.mxu0
      %v3601 = vadd.f32 %v2825, %v3600
      %v3602 = vpop.f32.mrf.mxu0
      %v3603 = vadd.f32 %v2827, %v3602
      %3604 = vmatprep.mubr.f32.mxu0 0.0
      %3605 = vmatmul.mubr.f32.gmra.mxu0 %v3137
      %v3606 = vpop.f32.mrf.mxu0
      %v3607 = vadd.f32 %v2831, %v3606
      %v3608 = vpop.f32.mrf.mxu0
      %v3609 = vadd.f32 %v2833, %v3608
      %3610 = vmatprep.mubr.f32.mxu0 0.0
      %3611 = vmatmul.mubr.f32.gmra.mxu0 %v3140
      %v3612 = vpop.f32.mrf.mxu0
      %v3613 = vadd.f32 %v2837, %v3612
      %v3614 = vpop.f32.mrf.mxu0
      %v3615 = vadd.f32 %v2839, %v3614
      %3616 = vdwg.mxu0
      %3617 = vmatprep.subr.mxu0 0.0
      %3618 = vmatpush1.msra.mxu0 0.0
      %3619 = vmatprep.subr.mxu0 0.0
      %3620 = vmatpush1.msra.mxu0 0.0
      %3621 = vmatprep.subr.mxu0 0.0
      %3622 = vmatpush1.msra.mxu0 0.0
      %3623 = vmatprep.subr.mxu0 0.0
      %3624 = vmatpush1.msra.mxu0 0.0
      %3625 = vmatprep.subr.mxu0 0.0
      %3626 = vmatpush1.msra.mxu0 0.0
      %3627 = vmatprep.subr.mxu0 0.0
      %3628 = vmatpush1.msra.mxu0 0.0
      %3629 = vmatprep.subr.mxu0 0.0
      %3630 = vmatpush1.msra.mxu0 0.0
      %3631 = vmatprep.subr.mxu0 0.0
      %3632 = vmatpush1.msra.mxu0 0.0
      %3633 = vmatprep.subr.mxu0 %v861
      %3634 = vmatpush1.msra.mxu0 %v860
      %3635 = vmatprep.subr.mxu0 %v845
      %3636 = vmatpush1.msra.mxu0 %v844
      %3637 = vmatprep.subr.mxu0 %v829
      %3638 = vmatpush1.msra.mxu0 %v828
      %3639 = vmatprep.subr.mxu0 %v813
      %3640 = vmatpush1.msra.mxu0 %v812
      %3641 = vmatprep.subr.mxu0 %v797
      %3642 = vmatpush1.msra.mxu0 %v796
      %3643 = vmatprep.subr.mxu0 %v781
      %3644 = vmatpush1.msra.mxu0 %v780
      %3645 = vmatprep.subr.mxu0 %v765
      %3646 = vmatpush1.msra.mxu0 %v764
      %3647 = vmatprep.subr.mxu0 %v749
      %3648 = vmatpush1.msra.mxu0 %v748
      %3649 = vmatprep.subr.mxu0 0.0
      %3650 = vmatpush2.msra.mxu0 0.0
      %3651 = vmatprep.subr.mxu0 0.0
      %3652 = vmatpush2.msra.mxu0 0.0
      %3653 = vmatprep.subr.mxu0 0.0
      %3654 = vmatpush2.msra.mxu0 0.0
      %3655 = vmatprep.subr.mxu0 0.0
      %3656 = vmatpush2.msra.mxu0 0.0
      %3657 = vmatprep.subr.mxu0 0.0
      %3658 = vmatpush2.msra.mxu0 0.0
      %3659 = vmatprep.subr.mxu0 0.0
      %3660 = vmatpush2.msra.mxu0 0.0
      %3661 = vmatprep.subr.mxu0 0.0
      %3662 = vmatpush2.msra.mxu0 0.0
      %3663 = vmatprep.subr.mxu0 0.0
      %3664 = vmatpush2.msra.mxu0 0.0
      %3665 = vmatprep.subr.mxu0 0.0
      %3666 = vmatpush2.msra.mxu0 0.0
      %3667 = vmatprep.subr.mxu0 0.0
      %3668 = vmatpush2.msra.mxu0 0.0
      %3669 = vmatprep.subr.mxu0 0.0
      %3670 = vmatpush2.msra.mxu0 0.0
      %3671 = vmatprep.subr.mxu0 0.0
      %3672 = vmatpush2.msra.mxu0 0.0
      %3673 = vmatprep.subr.mxu0 0.0
      %3674 = vmatpush2.msra.mxu0 0.0
      %3675 = vmatprep.subr.mxu0 0.0
      %3676 = vmatpush2.msra.mxu0 0.0
      %3677 = vmatprep.subr.mxu0 0.0
      %3678 = vmatpush2.msra.mxu0 0.0
      %3679 = vmatprep.subr.mxu0 0.0
      %3680 = vmatpush2.msra.mxu0 0.0
      %3681 = vmatprep.mubr.f32.mxu0 0.0
      %3682 = vmatmul.mubr.f32.gmra.mxu0 %v3128
      %v3683 = vpop.f32.mrf.mxu0
      %v3684 = vadd.f32 %v2908, %v3683
      %v3685 = vpop.f32.mrf.mxu0
      %v3686 = vadd.f32 %v2910, %v3685
      %3687 = vmatprep.mubr.f32.mxu0 0.0
      %3688 = vmatmul.mubr.f32.gmra.mxu0 %v3131
      %v3689 = vpop.f32.mrf.mxu0
      %v3690 = vadd.f32 %v2914, %v3689
      %v3691 = vpop.f32.mrf.mxu0
      %v3692 = vadd.f32 %v2916, %v3691
      %3693 = vmatprep.mubr.f32.mxu0 0.0
      %3694 = vmatmul.mubr.f32.gmra.mxu0 %v3134
      %v3695 = vpop.f32.mrf.mxu0
      %v3696 = vadd.f32 %v2920, %v3695
      %v3697 = vpop.f32.mrf.mxu0
      %v3698 = vadd.f32 %v2922, %v3697
      %3699 = vmatprep.mubr.f32.mxu0 0.0
      %3700 = vmatmul.mubr.f32.gmra.mxu0 %v3137
      %v3701 = vpop.f32.mrf.mxu0
      %v3702 = vadd.f32 %v2926, %v3701
      %v3703 = vpop.f32.mrf.mxu0
      %v3704 = vadd.f32 %v2928, %v3703
      %3705 = vmatprep.mubr.f32.mxu0 0.0
      %3706 = vmatmul.mubr.f32.gmra.mxu0 %v3140
      %v3707 = vpop.f32.mrf.mxu0
      %v3708 = vadd.f32 %v2932, %v3707
      %v3709 = vpop.f32.mrf.mxu0
      %v3710 = vadd.f32 %v2934, %v3709
      %3711 = vdwg.mxu0
      %3712 = vmatprep.subr.mxu0 0.0
      %3713 = vmatpush1.msra.mxu0 0.0
      %3714 = vmatprep.subr.mxu0 0.0
      %3715 = vmatpush1.msra.mxu0 0.0
      %3716 = vmatprep.subr.mxu0 0.0
      %3717 = vmatpush1.msra.mxu0 0.0
      %3718 = vmatprep.subr.mxu0 0.0
      %3719 = vmatpush1.msra.mxu0 0.0
      %3720 = vmatprep.subr.mxu0 0.0
      %3721 = vmatpush1.msra.mxu0 0.0
      %3722 = vmatprep.subr.mxu0 0.0
      %3723 = vmatpush1.msra.mxu0 0.0
      %3724 = vmatprep.subr.mxu0 0.0
      %3725 = vmatpush1.msra.mxu0 0.0
      %3726 = vmatprep.subr.mxu0 0.0
      %3727 = vmatpush1.msra.mxu0 0.0
      %3728 = vmatprep.subr.mxu0 %v863
      %3729 = vmatpush1.msra.mxu0 %v862
      %3730 = vmatprep.subr.mxu0 %v847
      %3731 = vmatpush1.msra.mxu0 %v846
      %3732 = vmatprep.subr.mxu0 %v831
      %3733 = vmatpush1.msra.mxu0 %v830
      %3734 = vmatprep.subr.mxu0 %v815
      %3735 = vmatpush1.msra.mxu0 %v814
      %3736 = vmatprep.subr.mxu0 %v799
      %3737 = vmatpush1.msra.mxu0 %v798
      %3738 = vmatprep.subr.mxu0 %v783
      %3739 = vmatpush1.msra.mxu0 %v782
      %3740 = vmatprep.subr.mxu0 %v767
      %3741 = vmatpush1.msra.mxu0 %v766
      %3742 = vmatprep.subr.mxu0 %v751
      %3743 = vmatpush1.msra.mxu0 %v750
      %3744 = vmatprep.subr.mxu0 0.0
      %3745 = vmatpush2.msra.mxu0 0.0
      %3746 = vmatprep.subr.mxu0 0.0
      %3747 = vmatpush2.msra.mxu0 0.0
      %3748 = vmatprep.subr.mxu0 0.0
      %3749 = vmatpush2.msra.mxu0 0.0
      %3750 = vmatprep.subr.mxu0 0.0
      %3751 = vmatpush2.msra.mxu0 0.0
      %3752 = vmatprep.subr.mxu0 0.0
      %3753 = vmatpush2.msra.mxu0 0.0
      %3754 = vmatprep.subr.mxu0 0.0
      %3755 = vmatpush2.msra.mxu0 0.0
      %3756 = vmatprep.subr.mxu0 0.0
      %3757 = vmatpush2.msra.mxu0 0.0
      %3758 = vmatprep.subr.mxu0 0.0
      %3759 = vmatpush2.msra.mxu0 0.0
      %3760 = vmatprep.subr.mxu0 0.0
      %3761 = vmatpush2.msra.mxu0 0.0
      %3762 = vmatprep.subr.mxu0 0.0
      %3763 = vmatpush2.msra.mxu0 0.0
      %3764 = vmatprep.subr.mxu0 0.0
      %3765 = vmatpush2.msra.mxu0 0.0
      %3766 = vmatprep.subr.mxu0 0.0
      %3767 = vmatpush2.msra.mxu0 0.0
      %3768 = vmatprep.subr.mxu0 0.0
      %3769 = vmatpush2.msra.mxu0 0.0
      %3770 = vmatprep.subr.mxu0 0.0
      %3771 = vmatpush2.msra.mxu0 0.0
      %3772 = vmatprep.subr.mxu0 0.0
      %3773 = vmatpush2.msra.mxu0 0.0
      %3774 = vmatprep.subr.mxu0 0.0
      %3775 = vmatpush2.msra.mxu0 0.0
      %3776 = vmatprep.mubr.f32.mxu0 0.0
      %3777 = vmatmul.mubr.f32.gmra.mxu0 %v3128
      %v3778 = vpop.f32.mrf.mxu0
      %v3779 = vadd.f32 %v3003, %v3778
      %v3780 = vpop.f32.mrf.mxu0
      %v3781 = vadd.f32 %v3005, %v3780
      %3782 = vmatprep.mubr.f32.mxu0 0.0
      %3783 = vmatmul.mubr.f32.gmra.mxu0 %v3131
      %v3784 = vpop.f32.mrf.mxu0
      %v3785 = vadd.f32 %v3009, %v3784
      %v3786 = vpop.f32.mrf.mxu0
      %v3787 = vadd.f32 %v3011, %v3786
      %3788 = vmatprep.mubr.f32.mxu0 0.0
      %3789 = vmatmul.mubr.f32.gmra.mxu0 %v3134
      %v3790 = vpop.f32.mrf.mxu0
      %v3791 = vadd.f32 %v3015, %v3790
      %v3792 = vpop.f32.mrf.mxu0
      %v3793 = vadd.f32 %v3017, %v3792
      %3794 = vmatprep.mubr.f32.mxu0 0.0
      %3795 = vmatmul.mubr.f32.gmra.mxu0 %v3137
      %v3796 = vpop.f32.mrf.mxu0
      %v3797 = vadd.f32 %v3021, %v3796
      %v3798 = vpop.f32.mrf.mxu0
      %v3799 = vadd.f32 %v3023, %v3798
      %3800 = vmatprep.mubr.f32.mxu0 0.0
      %3801 = vmatmul.mubr.f32.gmra.mxu0 %v3140
      %v3802 = vpop.f32.mrf.mxu0
      %v3803 = vadd.f32 %v3027, %v3802
      %v3804 = vpop.f32.mrf.mxu0
      %v3805 = vadd.f32 %v3029, %v3804
      %3806 = vdwg.mxu0
      %3807 = vmatprep.subr.mxu0 0.0
      %3808 = vmatpush1.msra.mxu0 0.0
      %3809 = vmatprep.subr.mxu0 0.0
      %3810 = vmatpush1.msra.mxu0 0.0
      %3811 = vmatprep.subr.mxu0 0.0
      %3812 = vmatpush1.msra.mxu0 0.0
      %3813 = vmatprep.subr.mxu0 0.0
      %3814 = vmatpush1.msra.mxu0 0.0
      %3815 = vmatprep.subr.mxu0 0.0
      %3816 = vmatpush1.msra.mxu0 0.0
      %3817 = vmatprep.subr.mxu0 0.0
      %3818 = vmatpush1.msra.mxu0 0.0
      %3819 = vmatprep.subr.mxu0 0.0
      %3820 = vmatpush1.msra.mxu0 0.0
      %3821 = vmatprep.subr.mxu0 0.0
      %3822 = vmatpush1.msra.mxu0 0.0
      %3823 = vmatprep.subr.mxu0 %v865
      %3824 = vmatpush1.msra.mxu0 %v864
      %3825 = vmatprep.subr.mxu0 %v849
      %3826 = vmatpush1.msra.mxu0 %v848
      %3827 = vmatprep.subr.mxu0 %v833
      %3828 = vmatpush1.msra.mxu0 %v832
      %3829 = vmatprep.subr.mxu0 %v817
      %3830 = vmatpush1.msra.mxu0 %v816
      %3831 = vmatprep.subr.mxu0 %v801
      %3832 = vmatpush1.msra.mxu0 %v800
      %3833 = vmatprep.subr.mxu0 %v785
      %3834 = vmatpush1.msra.mxu0 %v784
      %3835 = vmatprep.subr.mxu0 %v769
      %3836 = vmatpush1.msra.mxu0 %v768
      %3837 = vmatprep.subr.mxu0 %v753
      %3838 = vmatpush1.msra.mxu0 %v752
      %3839 = vmatprep.subr.mxu0 0.0
      %3840 = vmatpush2.msra.mxu0 0.0
      %3841 = vmatprep.subr.mxu0 0.0
      %3842 = vmatpush2.msra.mxu0 0.0
      %3843 = vmatprep.subr.mxu0 0.0
      %3844 = vmatpush2.msra.mxu0 0.0
      %3845 = vmatprep.subr.mxu0 0.0
      %3846 = vmatpush2.msra.mxu0 0.0
      %3847 = vmatprep.subr.mxu0 0.0
      %3848 = vmatpush2.msra.mxu0 0.0
      %3849 = vmatprep.subr.mxu0 0.0
      %3850 = vmatpush2.msra.mxu0 0.0
      %3851 = vmatprep.subr.mxu0 0.0
      %3852 = vmatpush2.msra.mxu0 0.0
      %3853 = vmatprep.subr.mxu0 0.0
      %3854 = vmatpush2.msra.mxu0 0.0
      %3855 = vmatprep.subr.mxu0 0.0
      %3856 = vmatpush2.msra.mxu0 0.0
      %3857 = vmatprep.subr.mxu0 0.0
      %3858 = vmatpush2.msra.mxu0 0.0
      %3859 = vmatprep.subr.mxu0 0.0
      %3860 = vmatpush2.msra.mxu0 0.0
      %3861 = vmatprep.subr.mxu0 0.0
      %3862 = vmatpush2.msra.mxu0 0.0
      %3863 = vmatprep.subr.mxu0 0.0
      %3864 = vmatpush2.msra.mxu0 0.0
      %3865 = vmatprep.subr.mxu0 0.0
      %3866 = vmatpush2.msra.mxu0 0.0
      %3867 = vmatprep.subr.mxu0 0.0
      %3868 = vmatpush2.msra.mxu0 0.0
      %3869 = vmatprep.subr.mxu0 0.0
      %3870 = vmatpush2.msra.mxu0 0.0
      %3871 = vmatprep.mubr.f32.mxu0 0.0
      %3872 = vmatmul.mubr.f32.gmra.mxu0 %v3128
      %v3873 = vpop.f32.mrf.mxu0
      %v3874 = vadd.f32 %v3098, %v3873
      %v3875 = vpop.f32.mrf.mxu0
      %v3876 = vadd.f32 %v3100, %v3875
      %3877 = vmatprep.mubr.f32.mxu0 0.0
      %3878 = vmatmul.mubr.f32.gmra.mxu0 %v3131
      %v3879 = vpop.f32.mrf.mxu0
      %v3880 = vadd.f32 %v3104, %v3879
      %v3881 = vpop.f32.mrf.mxu0
      %v3882 = vadd.f32 %v3106, %v3881
      %3883 = vmatprep.mubr.f32.mxu0 0.0
      %3884 = vmatmul.mubr.f32.gmra.mxu0 %v3134
      %v3885 = vpop.f32.mrf.mxu0
      %v3886 = vadd.f32 %v3110, %v3885
      %v3887 = vpop.f32.mrf.mxu0
      %v3888 = vadd.f32 %v3112, %v3887
      %3889 = vmatprep.mubr.f32.mxu0 0.0
      %3890 = vmatmul.mubr.f32.gmra.mxu0 %v3137
      %v3891 = vpop.f32.mrf.mxu0
      %v3892 = vadd.f32 %v3116, %v3891
      %v3893 = vpop.f32.mrf.mxu0
      %v3894 = vadd.f32 %v3118, %v3893
      %3895 = vmatprep.mubr.f32.mxu0 0.0
      %3896 = vmatmul.mubr.f32.gmra.mxu0 %v3140
      %v3897 = vpop.f32.mrf.mxu0
      %v3898 = vadd.f32 %v3122, %v3897
      %v3899 = vpop.f32.mrf.mxu0
      %v3900 = vadd.f32 %v3124, %v3899
      %3901 = vdwg.mxu0
      %v3902 = vmax.f32 %v3209, 0.0
      %v3903 = vmax.f32 %v3211, 0.0
      %v3904 = vmax.f32 %v3304, 0.0
      %v3905 = vmax.f32 %v3306, 0.0
      %v3906 = vmax.f32 %v3399, 0.0
      %v3907 = vmax.f32 %v3401, 0.0
      %v3908 = vmax.f32 %v3494, 0.0
      %v3909 = vmax.f32 %v3496, 0.0
      %v3910 = vmax.f32 %v3589, 0.0
      %v3911 = vmax.f32 %v3591, 0.0
      %v3912 = vmax.f32 %v3684, 0.0
      %v3913 = vmax.f32 %v3686, 0.0
      %v3914 = vmax.f32 %v3779, 0.0
      %v3915 = vmax.f32 %v3781, 0.0
      %v3916 = vmax.f32 %v3874, 0.0
      %v3917 = vmax.f32 %v3876, 0.0
      %v3918 = vmax.f32 %v3215, 0.0
      %v3919 = vmax.f32 %v3217, 0.0
      %v3920 = vmax.f32 %v3310, 0.0
      %v3921 = vmax.f32 %v3312, 0.0
      %v3922 = vmax.f32 %v3405, 0.0
      %v3923 = vmax.f32 %v3407, 0.0
      %v3924 = vmax.f32 %v3500, 0.0
      %v3925 = vmax.f32 %v3502, 0.0
      %v3926 = vmax.f32 %v3595, 0.0
      %v3927 = vmax.f32 %v3597, 0.0
      %v3928 = vmax.f32 %v3690, 0.0
      %v3929 = vmax.f32 %v3692, 0.0
      %v3930 = vmax.f32 %v3785, 0.0
      %v3931 = vmax.f32 %v3787, 0.0
      %v3932 = vmax.f32 %v3880, 0.0
      %v3933 = vmax.f32 %v3882, 0.0
      %v3934 = vmax.f32 %v3221, 0.0
      %v3935 = vmax.f32 %v3223, 0.0
      %v3936 = vmax.f32 %v3316, 0.0
      %v3937 = vmax.f32 %v3318, 0.0
      %v3938 = vmax.f32 %v3411, 0.0
      %v3939 = vmax.f32 %v3413, 0.0
      %v3940 = vmax.f32 %v3506, 0.0
      %v3941 = vmax.f32 %v3508, 0.0
      %v3942 = vmax.f32 %v3601, 0.0
      %v3943 = vmax.f32 %v3603, 0.0
      %v3944 = vmax.f32 %v3696, 0.0
      %v3945 = vmax.f32 %v3698, 0.0
      %v3946 = vmax.f32 %v3791, 0.0
      %v3947 = vmax.f32 %v3793, 0.0
      %v3948 = vmax.f32 %v3886, 0.0
      %v3949 = vmax.f32 %v3888, 0.0
      %v3950 = vmax.f32 %v3227, 0.0
      %v3951 = vmax.f32 %v3229, 0.0
      %v3952 = vmax.f32 %v3322, 0.0
      %v3953 = vmax.f32 %v3324, 0.0
      %v3954 = vmax.f32 %v3417, 0.0
      %v3955 = vmax.f32 %v3419, 0.0
      %v3956 = vmax.f32 %v3512, 0.0
      %v3957 = vmax.f32 %v3514, 0.0
      %v3958 = vmax.f32 %v3607, 0.0
      %v3959 = vmax.f32 %v3609, 0.0
      %v3960 = vmax.f32 %v3702, 0.0
      %v3961 = vmax.f32 %v3704, 0.0
      %v3962 = vmax.f32 %v3797, 0.0
      %v3963 = vmax.f32 %v3799, 0.0
      %v3964 = vmax.f32 %v3892, 0.0
      %v3965 = vmax.f32 %v3894, 0.0
      %v3966 = vmax.f32 %v3233, 0.0
      %v3967 = vmax.f32 %v3235, 0.0
      %v3968 = vmax.f32 %v3328, 0.0
      %v3969 = vmax.f32 %v3330, 0.0
      %v3970 = vmax.f32 %v3423, 0.0
      %v3971 = vmax.f32 %v3425, 0.0
      %v3972 = vmax.f32 %v3518, 0.0
      %v3973 = vmax.f32 %v3520, 0.0
      %v3974 = vmax.f32 %v3613, 0.0
      %v3975 = vmax.f32 %v3615, 0.0
      %v3976 = vmax.f32 %v3708, 0.0
      %v3977 = vmax.f32 %v3710, 0.0
      %v3978 = vmax.f32 %v3803, 0.0
      %v3979 = vmax.f32 %v3805, 0.0
      %v3980 = vmax.f32 %v3898, 0.0
      %v3981 = vmax.f32 %v3900, 0.0
      %v3982 = vld [vmem:[%s5] sm:$0xff]
      %v3983 = vld [vmem:[%s5 + $0x8] sm:$0xff]
      %v3984 = vld [vmem:[%s5 + $0x10] sm:$0x1]
      %vm3985 = vcmask 269312
      %v3987 = vsel %vm3985, %v3982, 0
      %v3990 = vsel %vm3985, %v3983, 0
      %v3993 = vsel %vm3985, %v3984, 0
      %vm3995 = vcmask 1040384
      %v3997 = vsel %vm3995, %v3966, 0
      %v4000 = vsel %vm3995, %v3967, 0
      %v4003 = vsel %vm3995, %v3968, 0
      %v4006 = vsel %vm3995, %v3969, 0
      %v4009 = vsel %vm3995, %v3970, 0
      %v4012 = vsel %vm3995, %v3971, 0
      %v4015 = vsel %vm3995, %v3972, 0
      %v4018 = vsel %vm3995, %v3973, 0
      %v4021 = vsel %vm3995, %v3974, 0
      %v4024 = vsel %vm3995, %v3975, 0
      %v4027 = vsel %vm3995, %v3976, 0
      %v4030 = vsel %vm3995, %v3977, 0
      %v4033 = vsel %vm3995, %v3978, 0
      %v4036 = vsel %vm3995, %v3979, 0
      %v4039 = vsel %vm3995, %v3980, 0
      %v4042 = vsel %vm3995, %v3981, 0
      %4044 = vmatprep.subr.mxu0 0.0
      %4045 = vmatpush1.msra.mxu0 0.0
      %4046 = vmatprep.subr.mxu0 0.0
      %4047 = vmatpush1.msra.mxu0 0.0
      %4048 = vmatprep.subr.mxu0 0.0
      %4049 = vmatpush1.msra.mxu0 0.0
      %4050 = vmatprep.subr.mxu0 0.0
      %4051 = vmatpush1.msra.mxu0 0.0
      %4052 = vmatprep.subr.mxu0 0.0
      %4053 = vmatpush1.msra.mxu0 0.0
      %4054 = vmatprep.subr.mxu0 0.0
      %4055 = vmatpush1.msra.mxu0 0.0
      %4056 = vmatprep.subr.mxu0 0.0
      %4057 = vmatpush1.msra.mxu0 0.0
      %4058 = vmatprep.subr.mxu0 0.0
      %4059 = vmatpush1.msra.mxu0 0.0
      %4060 = vmatprep.subr.mxu0 0.0
      %4061 = vmatpush1.msra.mxu0 0.0
      %4062 = vmatprep.subr.mxu0 0.0
      %4063 = vmatpush1.msra.mxu0 0.0
      %4064 = vmatprep.subr.mxu0 0.0
      %4065 = vmatpush1.msra.mxu0 0.0
      %4066 = vmatprep.subr.mxu0 %v4000
      %4067 = vmatpush1.msra.mxu0 %v3997
      %4068 = vmatprep.subr.mxu0 %v3951
      %4069 = vmatpush1.msra.mxu0 %v3950
      %4070 = vmatprep.subr.mxu0 %v3935
      %4071 = vmatpush1.msra.mxu0 %v3934
      %4072 = vmatprep.subr.mxu0 %v3919
      %4073 = vmatpush1.msra.mxu0 %v3918
      %4074 = vmatprep.subr.mxu0 %v3903
      %4075 = vmatpush1.msra.mxu0 %v3902
      %4076 = vmatprep.subr.mxu0 0.0
      %4077 = vmatpush2.msra.mxu0 0.0
      %4078 = vmatprep.subr.mxu0 0.0
      %4079 = vmatpush2.msra.mxu0 0.0
      %4080 = vmatprep.subr.mxu0 0.0
      %4081 = vmatpush2.msra.mxu0 0.0
      %4082 = vmatprep.subr.mxu0 0.0
      %4083 = vmatpush2.msra.mxu0 0.0
      %4084 = vmatprep.subr.mxu0 0.0
      %4085 = vmatpush2.msra.mxu0 0.0
      %4086 = vmatprep.subr.mxu0 0.0
      %4087 = vmatpush2.msra.mxu0 0.0
      %4088 = vmatprep.subr.mxu0 0.0
      %4089 = vmatpush2.msra.mxu0 0.0
      %4090 = vmatprep.subr.mxu0 0.0
      %4091 = vmatpush2.msra.mxu0 0.0
      %4092 = vmatprep.subr.mxu0 0.0
      %4093 = vmatpush2.msra.mxu0 0.0
      %4094 = vmatprep.subr.mxu0 0.0
      %4095 = vmatpush2.msra.mxu0 0.0
      %4096 = vmatprep.subr.mxu0 0.0
      %4097 = vmatpush2.msra.mxu0 0.0
      %4098 = vmatprep.subr.mxu0 0.0
      %4099 = vmatpush2.msra.mxu0 0.0
      %4100 = vmatprep.subr.mxu0 0.0
      %4101 = vmatpush2.msra.mxu0 0.0
      %4102 = vmatprep.subr.mxu0 0.0
      %4103 = vmatpush2.msra.mxu0 0.0
      %4104 = vmatprep.subr.mxu0 0.0
      %4105 = vmatpush2.msra.mxu0 0.0
      %4106 = vmatprep.subr.mxu0 0.0
      %4107 = vmatpush2.msra.mxu0 0.0
      %4108 = vmatprep.mubr.f32.mxu0 0.0
      %4109 = vmatmul.mubr.f32.gmra.mxu0 %v3987
      %v4110 = vpop.f32.mrf.mxu0
      %v4111 = vadd.f32 0.0, %v4110
      %v4112 = vpop.f32.mrf.mxu0
      %v4113 = vadd.f32 0.0, %v4112
      %4114 = vmatprep.mubr.f32.mxu0 0.0
      %4115 = vmatmul.mubr.f32.gmra.mxu0 %v3990
      %v4116 = vpop.f32.mrf.mxu0
      %v4117 = vadd.f32 0.0, %v4116
      %v4118 = vpop.f32.mrf.mxu0
      %v4119 = vadd.f32 0.0, %v4118
      %4120 = vmatprep.mubr.f32.mxu0 0.0
      %4121 = vmatmul.mubr.f32.gmra.mxu0 %v3993
      %v4122 = vpop.f32.mrf.mxu0
      %v4123 = vadd.f32 0.0, %v4122
      %v4124 = vpop.f32.mrf.mxu0
      %v4125 = vadd.f32 0.0, %v4124
      %4126 = vdwg.mxu0
      %4127 = vmatprep.subr.mxu0 0.0
      %4128 = vmatpush1.msra.mxu0 0.0
      %4129 = vmatprep.subr.mxu0 0.0
      %4130 = vmatpush1.msra.mxu0 0.0
      %4131 = vmatprep.subr.mxu0 0.0
      %4132 = vmatpush1.msra.mxu0 0.0
      %4133 = vmatprep.subr.mxu0 0.0
      %4134 = vmatpush1.msra.mxu0 0.0
      %4135 = vmatprep.subr.mxu0 0.0
      %4136 = vmatpush1.msra.mxu0 0.0
      %4137 = vmatprep.subr.mxu0 0.0
      %4138 = vmatpush1.msra.mxu0 0.0
      %4139 = vmatprep.subr.mxu0 0.0
      %4140 = vmatpush1.msra.mxu0 0.0
      %4141 = vmatprep.subr.mxu0 0.0
      %4142 = vmatpush1.msra.mxu0 0.0
      %4143 = vmatprep.subr.mxu0 0.0
      %4144 = vmatpush1.msra.mxu0 0.0
      %4145 = vmatprep.subr.mxu0 0.0
      %4146 = vmatpush1.msra.mxu0 0.0
      %4147 = vmatprep.subr.mxu0 0.0
      %4148 = vmatpush1.msra.mxu0 0.0
      %4149 = vmatprep.subr.mxu0 %v4006
      %4150 = vmatpush1.msra.mxu0 %v4003
      %4151 = vmatprep.subr.mxu0 %v3953
      %4152 = vmatpush1.msra.mxu0 %v3952
      %4153 = vmatprep.subr.mxu0 %v3937
      %4154 = vmatpush1.msra.mxu0 %v3936
      %4155 = vmatprep.subr.mxu0 %v3921
      %4156 = vmatpush1.msra.mxu0 %v3920
      %4157 = vmatprep.subr.mxu0 %v3905
      %4158 = vmatpush1.msra.mxu0 %v3904
      %4159 = vmatprep.subr.mxu0 0.0
      %4160 = vmatpush2.msra.mxu0 0.0
      %4161 = vmatprep.subr.mxu0 0.0
      %4162 = vmatpush2.msra.mxu0 0.0
      %4163 = vmatprep.subr.mxu0 0.0
      %4164 = vmatpush2.msra.mxu0 0.0
      %4165 = vmatprep.subr.mxu0 0.0
      %4166 = vmatpush2.msra.mxu0 0.0
      %4167 = vmatprep.subr.mxu0 0.0
      %4168 = vmatpush2.msra.mxu0 0.0
      %4169 = vmatprep.subr.mxu0 0.0
      %4170 = vmatpush2.msra.mxu0 0.0
      %4171 = vmatprep.subr.mxu0 0.0
      %4172 = vmatpush2.msra.mxu0 0.0
      %4173 = vmatprep.subr.mxu0 0.0
      %4174 = vmatpush2.msra.mxu0 0.0
      %4175 = vmatprep.subr.mxu0 0.0
      %4176 = vmatpush2.msra.mxu0 0.0
      %4177 = vmatprep.subr.mxu0 0.0
      %4178 = vmatpush2.msra.mxu0 0.0
      %4179 = vmatprep.subr.mxu0 0.0
      %4180 = vmatpush2.msra.mxu0 0.0
      %4181 = vmatprep.subr.mxu0 0.0
      %4182 = vmatpush2.msra.mxu0 0.0
      %4183 = vmatprep.subr.mxu0 0.0
      %4184 = vmatpush2.msra.mxu0 0.0
      %4185 = vmatprep.subr.mxu0 0.0
      %4186 = vmatpush2.msra.mxu0 0.0
      %4187 = vmatprep.subr.mxu0 0.0
      %4188 = vmatpush2.msra.mxu0 0.0
      %4189 = vmatprep.subr.mxu0 0.0
      %4190 = vmatpush2.msra.mxu0 0.0
      %4191 = vmatprep.mubr.f32.mxu0 0.0
      %4192 = vmatmul.mubr.f32.gmra.mxu0 %v3987
      %v4193 = vpop.f32.mrf.mxu0
      %v4194 = vadd.f32 0.0, %v4193
      %v4195 = vpop.f32.mrf.mxu0
      %v4196 = vadd.f32 0.0, %v4195
      %4197 = vmatprep.mubr.f32.mxu0 0.0
      %4198 = vmatmul.mubr.f32.gmra.mxu0 %v3990
      %v4199 = vpop.f32.mrf.mxu0
      %v4200 = vadd.f32 0.0, %v4199
      %v4201 = vpop.f32.mrf.mxu0
      %v4202 = vadd.f32 0.0, %v4201
      %4203 = vmatprep.mubr.f32.mxu0 0.0
      %4204 = vmatmul.mubr.f32.gmra.mxu0 %v3993
      %v4205 = vpop.f32.mrf.mxu0
      %v4206 = vadd.f32 0.0, %v4205
      %v4207 = vpop.f32.mrf.mxu0
      %v4208 = vadd.f32 0.0, %v4207
      %4209 = vdwg.mxu0
      %4210 = vmatprep.subr.mxu0 0.0
      %4211 = vmatpush1.msra.mxu0 0.0
      %4212 = vmatprep.subr.mxu0 0.0
      %4213 = vmatpush1.msra.mxu0 0.0
      %4214 = vmatprep.subr.mxu0 0.0
      %4215 = vmatpush1.msra.mxu0 0.0
      %4216 = vmatprep.subr.mxu0 0.0
      %4217 = vmatpush1.msra.mxu0 0.0
      %4218 = vmatprep.subr.mxu0 0.0
      %4219 = vmatpush1.msra.mxu0 0.0
      %4220 = vmatprep.subr.mxu0 0.0
      %4221 = vmatpush1.msra.mxu0 0.0
      %4222 = vmatprep.subr.mxu0 0.0
      %4223 = vmatpush1.msra.mxu0 0.0
      %4224 = vmatprep.subr.mxu0 0.0
      %4225 = vmatpush1.msra.mxu0 0.0
      %4226 = vmatprep.subr.mxu0 0.0
      %4227 = vmatpush1.msra.mxu0 0.0
      %4228 = vmatprep.subr.mxu0 0.0
      %4229 = vmatpush1.msra.mxu0 0.0
      %4230 = vmatprep.subr.mxu0 0.0
      %4231 = vmatpush1.msra.mxu0 0.0
      %4232 = vmatprep.subr.mxu0 %v4012
      %4233 = vmatpush1.msra.mxu0 %v4009
      %4234 = vmatprep.subr.mxu0 %v3955
      %4235 = vmatpush1.msra.mxu0 %v3954
      %4236 = vmatprep.subr.mxu0 %v3939
      %4237 = vmatpush1.msra.mxu0 %v3938
      %4238 = vmatprep.subr.mxu0 %v3923
      %4239 = vmatpush1.msra.mxu0 %v3922
      %4240 = vmatprep.subr.mxu0 %v3907
      %4241 = vmatpush1.msra.mxu0 %v3906
      %4242 = vmatprep.subr.mxu0 0.0
      %4243 = vmatpush2.msra.mxu0 0.0
      %4244 = vmatprep.subr.mxu0 0.0
      %4245 = vmatpush2.msra.mxu0 0.0
      %4246 = vmatprep.subr.mxu0 0.0
      %4247 = vmatpush2.msra.mxu0 0.0
      %4248 = vmatprep.subr.mxu0 0.0
      %4249 = vmatpush2.msra.mxu0 0.0
      %4250 = vmatprep.subr.mxu0 0.0
      %4251 = vmatpush2.msra.mxu0 0.0
      %4252 = vmatprep.subr.mxu0 0.0
      %4253 = vmatpush2.msra.mxu0 0.0
      %4254 = vmatprep.subr.mxu0 0.0
      %4255 = vmatpush2.msra.mxu0 0.0
      %4256 = vmatprep.subr.mxu0 0.0
      %4257 = vmatpush2.msra.mxu0 0.0
      %4258 = vmatprep.subr.mxu0 0.0
      %4259 = vmatpush2.msra.mxu0 0.0
      %4260 = vmatprep.subr.mxu0 0.0
      %4261 = vmatpush2.msra.mxu0 0.0
      %4262 = vmatprep.subr.mxu0 0.0
      %4263 = vmatpush2.msra.mxu0 0.0
      %4264 = vmatprep.subr.mxu0 0.0
      %4265 = vmatpush2.msra.mxu0 0.0
      %4266 = vmatprep.subr.mxu0 0.0
      %4267 = vmatpush2.msra.mxu0 0.0
      %4268 = vmatprep.subr.mxu0 0.0
      %4269 = vmatpush2.msra.mxu0 0.0
      %4270 = vmatprep.subr.mxu0 0.0
      %4271 = vmatpush2.msra.mxu0 0.0
      %4272 = vmatprep.subr.mxu0 0.0
      %4273 = vmatpush2.msra.mxu0 0.0
      %4274 = vmatprep.mubr.f32.mxu0 0.0
      %4275 = vmatmul.mubr.f32.gmra.mxu0 %v3987
      %v4276 = vpop.f32.mrf.mxu0
      %v4277 = vadd.f32 0.0, %v4276
      %v4278 = vpop.f32.mrf.mxu0
      %v4279 = vadd.f32 0.0, %v4278
      %4280 = vmatprep.mubr.f32.mxu0 0.0
      %4281 = vmatmul.mubr.f32.gmra.mxu0 %v3990
      %v4282 = vpop.f32.mrf.mxu0
      %v4283 = vadd.f32 0.0, %v4282
      %v4284 = vpop.f32.mrf.mxu0
      %v4285 = vadd.f32 0.0, %v4284
      %4286 = vmatprep.mubr.f32.mxu0 0.0
      %4287 = vmatmul.mubr.f32.gmra.mxu0 %v3993
      %v4288 = vpop.f32.mrf.mxu0
      %v4289 = vadd.f32 0.0, %v4288
      %v4290 = vpop.f32.mrf.mxu0
      %v4291 = vadd.f32 0.0, %v4290
      %4292 = vdwg.mxu0
      %4293 = vmatprep.subr.mxu0 0.0
      %4294 = vmatpush1.msra.mxu0 0.0
      %4295 = vmatprep.subr.mxu0 0.0
      %4296 = vmatpush1.msra.mxu0 0.0
      %4297 = vmatprep.subr.mxu0 0.0
      %4298 = vmatpush1.msra.mxu0 0.0
      %4299 = vmatprep.subr.mxu0 0.0
      %4300 = vmatpush1.msra.mxu0 0.0
      %4301 = vmatprep.subr.mxu0 0.0
      %4302 = vmatpush1.msra.mxu0 0.0
      %4303 = vmatprep.subr.mxu0 0.0
      %4304 = vmatpush1.msra.mxu0 0.0
      %4305 = vmatprep.subr.mxu0 0.0
      %4306 = vmatpush1.msra.mxu0 0.0
      %4307 = vmatprep.subr.mxu0 0.0
      %4308 = vmatpush1.msra.mxu0 0.0
      %4309 = vmatprep.subr.mxu0 0.0
      %4310 = vmatpush1.msra.mxu0 0.0
      %4311 = vmatprep.subr.mxu0 0.0
      %4312 = vmatpush1.msra.mxu0 0.0
      %4313 = vmatprep.subr.mxu0 0.0
      %4314 = vmatpush1.msra.mxu0 0.0
      %4315 = vmatprep.subr.mxu0 %v4018
      %4316 = vmatpush1.msra.mxu0 %v4015
      %4317 = vmatprep.subr.mxu0 %v3957
      %4318 = vmatpush1.msra.mxu0 %v3956
      %4319 = vmatprep.subr.mxu0 %v3941
      %4320 = vmatpush1.msra.mxu0 %v3940
      %4321 = vmatprep.subr.mxu0 %v3925
      %4322 = vmatpush1.msra.mxu0 %v3924
      %4323 = vmatprep.subr.mxu0 %v3909
      %4324 = vmatpush1.msra.mxu0 %v3908
      %4325 = vmatprep.subr.mxu0 0.0
      %4326 = vmatpush2.msra.mxu0 0.0
      %4327 = vmatprep.subr.mxu0 0.0
      %4328 = vmatpush2.msra.mxu0 0.0
      %4329 = vmatprep.subr.mxu0 0.0
      %4330 = vmatpush2.msra.mxu0 0.0
      %4331 = vmatprep.subr.mxu0 0.0
      %4332 = vmatpush2.msra.mxu0 0.0
      %4333 = vmatprep.subr.mxu0 0.0
      %4334 = vmatpush2.msra.mxu0 0.0
      %4335 = vmatprep.subr.mxu0 0.0
      %4336 = vmatpush2.msra.mxu0 0.0
      %4337 = vmatprep.subr.mxu0 0.0
      %4338 = vmatpush2.msra.mxu0 0.0
      %4339 = vmatprep.subr.mxu0 0.0
      %4340 = vmatpush2.msra.mxu0 0.0
      %4341 = vmatprep.subr.mxu0 0.0
      %4342 = vmatpush2.msra.mxu0 0.0
      %4343 = vmatprep.subr.mxu0 0.0
      %4344 = vmatpush2.msra.mxu0 0.0
      %4345 = vmatprep.subr.mxu0 0.0
      %4346 = vmatpush2.msra.mxu0 0.0
      %4347 = vmatprep.subr.mxu0 0.0
      %4348 = vmatpush2.msra.mxu0 0.0
      %4349 = vmatprep.subr.mxu0 0.0
      %4350 = vmatpush2.msra.mxu0 0.0
      %4351 = vmatprep.subr.mxu0 0.0
      %4352 = vmatpush2.msra.mxu0 0.0
      %4353 = vmatprep.subr.mxu0 0.0
      %4354 = vmatpush2.msra.mxu0 0.0
      %4355 = vmatprep.subr.mxu0 0.0
      %4356 = vmatpush2.msra.mxu0 0.0
      %4357 = vmatprep.mubr.f32.mxu0 0.0
      %4358 = vmatmul.mubr.f32.gmra.mxu0 %v3987
      %v4359 = vpop.f32.mrf.mxu0
      %v4360 = vadd.f32 0.0, %v4359
      %v4361 = vpop.f32.mrf.mxu0
      %v4362 = vadd.f32 0.0, %v4361
      %4363 = vmatprep.mubr.f32.mxu0 0.0
      %4364 = vmatmul.mubr.f32.gmra.mxu0 %v3990
      %v4365 = vpop.f32.mrf.mxu0
      %v4366 = vadd.f32 0.0, %v4365
      %v4367 = vpop.f32.mrf.mxu0
      %v4368 = vadd.f32 0.0, %v4367
      %4369 = vmatprep.mubr.f32.mxu0 0.0
      %4370 = vmatmul.mubr.f32.gmra.mxu0 %v3993
      %v4371 = vpop.f32.mrf.mxu0
      %v4372 = vadd.f32 0.0, %v4371
      %v4373 = vpop.f32.mrf.mxu0
      %v4374 = vadd.f32 0.0, %v4373
      %4375 = vdwg.mxu0
      %4376 = vmatprep.subr.mxu0 0.0
      %4377 = vmatpush1.msra.mxu0 0.0
      %4378 = vmatprep.subr.mxu0 0.0
      %4379 = vmatpush1.msra.mxu0 0.0
      %4380 = vmatprep.subr.mxu0 0.0
      %4381 = vmatpush1.msra.mxu0 0.0
      %4382 = vmatprep.subr.mxu0 0.0
      %4383 = vmatpush1.msra.mxu0 0.0
      %4384 = vmatprep.subr.mxu0 0.0
      %4385 = vmatpush1.msra.mxu0 0.0
      %4386 = vmatprep.subr.mxu0 0.0
      %4387 = vmatpush1.msra.mxu0 0.0
      %4388 = vmatprep.subr.mxu0 0.0
      %4389 = vmatpush1.msra.mxu0 0.0
      %4390 = vmatprep.subr.mxu0 0.0
      %4391 = vmatpush1.msra.mxu0 0.0
      %4392 = vmatprep.subr.mxu0 0.0
      %4393 = vmatpush1.msra.mxu0 0.0
      %4394 = vmatprep.subr.mxu0 0.0
      %4395 = vmatpush1.msra.mxu0 0.0
      %4396 = vmatprep.subr.mxu0 0.0
      %4397 = vmatpush1.msra.mxu0 0.0
      %4398 = vmatprep.subr.mxu0 %v4024
      %4399 = vmatpush1.msra.mxu0 %v4021
      %4400 = vmatprep.subr.mxu0 %v3959
      %4401 = vmatpush1.msra.mxu0 %v3958
      %4402 = vmatprep.subr.mxu0 %v3943
      %4403 = vmatpush1.msra.mxu0 %v3942
      %4404 = vmatprep.subr.mxu0 %v3927
      %4405 = vmatpush1.msra.mxu0 %v3926
      %4406 = vmatprep.subr.mxu0 %v3911
      %4407 = vmatpush1.msra.mxu0 %v3910
      %4408 = vmatprep.subr.mxu0 0.0
      %4409 = vmatpush2.msra.mxu0 0.0
      %4410 = vmatprep.subr.mxu0 0.0
      %4411 = vmatpush2.msra.mxu0 0.0
      %4412 = vmatprep.subr.mxu0 0.0
      %4413 = vmatpush2.msra.mxu0 0.0
      %4414 = vmatprep.subr.mxu0 0.0
      %4415 = vmatpush2.msra.mxu0 0.0
      %4416 = vmatprep.subr.mxu0 0.0
      %4417 = vmatpush2.msra.mxu0 0.0
      %4418 = vmatprep.subr.mxu0 0.0
      %4419 = vmatpush2.msra.mxu0 0.0
      %4420 = vmatprep.subr.mxu0 0.0
      %4421 = vmatpush2.msra.mxu0 0.0
      %4422 = vmatprep.subr.mxu0 0.0
      %4423 = vmatpush2.msra.mxu0 0.0
      %4424 = vmatprep.subr.mxu0 0.0
      %4425 = vmatpush2.msra.mxu0 0.0
      %4426 = vmatprep.subr.mxu0 0.0
      %4427 = vmatpush2.msra.mxu0 0.0
      %4428 = vmatprep.subr.mxu0 0.0
      %4429 = vmatpush2.msra.mxu0 0.0
      %4430 = vmatprep.subr.mxu0 0.0
      %4431 = vmatpush2.msra.mxu0 0.0
      %4432 = vmatprep.subr.mxu0 0.0
      %4433 = vmatpush2.msra.mxu0 0.0
      %4434 = vmatprep.subr.mxu0 0.0
      %4435 = vmatpush2.msra.mxu0 0.0
      %4436 = vmatprep.subr.mxu0 0.0
      %4437 = vmatpush2.msra.mxu0 0.0
      %4438 = vmatprep.subr.mxu0 0.0
      %4439 = vmatpush2.msra.mxu0 0.0
      %4440 = vmatprep.mubr.f32.mxu0 0.0
      %4441 = vmatmul.mubr.f32.gmra.mxu0 %v3987
      %v4442 = vpop.f32.mrf.mxu0
      %v4443 = vadd.f32 0.0, %v4442
      %v4444 = vpop.f32.mrf.mxu0
      %v4445 = vadd.f32 0.0, %v4444
      %4446 = vmatprep.mubr.f32.mxu0 0.0
      %4447 = vmatmul.mubr.f32.gmra.mxu0 %v3990
      %v4448 = vpop.f32.mrf.mxu0
      %v4449 = vadd.f32 0.0, %v4448
      %v4450 = vpop.f32.mrf.mxu0
      %v4451 = vadd.f32 0.0, %v4450
      %4452 = vmatprep.mubr.f32.mxu0 0.0
      %4453 = vmatmul.mubr.f32.gmra.mxu0 %v3993
      %v4454 = vpop.f32.mrf.mxu0
      %v4455 = vadd.f32 0.0, %v4454
      %v4456 = vpop.f32.mrf.mxu0
      %v4457 = vadd.f32 0.0, %v4456
      %4458 = vdwg.mxu0
      %4459 = vmatprep.subr.mxu0 0.0
      %4460 = vmatpush1.msra.mxu0 0.0
      %4461 = vmatprep.subr.mxu0 0.0
      %4462 = vmatpush1.msra.mxu0 0.0
      %4463 = vmatprep.subr.mxu0 0.0
      %4464 = vmatpush1.msra.mxu0 0.0
      %4465 = vmatprep.subr.mxu0 0.0
      %4466 = vmatpush1.msra.mxu0 0.0
      %4467 = vmatprep.subr.mxu0 0.0
      %4468 = vmatpush1.msra.mxu0 0.0
      %4469 = vmatprep.subr.mxu0 0.0
      %4470 = vmatpush1.msra.mxu0 0.0
      %4471 = vmatprep.subr.mxu0 0.0
      %4472 = vmatpush1.msra.mxu0 0.0
      %4473 = vmatprep.subr.mxu0 0.0
      %4474 = vmatpush1.msra.mxu0 0.0
      %4475 = vmatprep.subr.mxu0 0.0
      %4476 = vmatpush1.msra.mxu0 0.0
      %4477 = vmatprep.subr.mxu0 0.0
      %4478 = vmatpush1.msra.mxu0 0.0
      %4479 = vmatprep.subr.mxu0 0.0
      %4480 = vmatpush1.msra.mxu0 0.0
      %4481 = vmatprep.subr.mxu0 %v4030
      %4482 = vmatpush1.msra.mxu0 %v4027
      %4483 = vmatprep.subr.mxu0 %v3961
      %4484 = vmatpush1.msra.mxu0 %v3960
      %4485 = vmatprep.subr.mxu0 %v3945
      %4486 = vmatpush1.msra.mxu0 %v3944
      %4487 = vmatprep.subr.mxu0 %v3929
      %4488 = vmatpush1.msra.mxu0 %v3928
      %4489 = vmatprep.subr.mxu0 %v3913
      %4490 = vmatpush1.msra.mxu0 %v3912
      %4491 = vmatprep.subr.mxu0 0.0
      %4492 = vmatpush2.msra.mxu0 0.0
      %4493 = vmatprep.subr.mxu0 0.0
      %4494 = vmatpush2.msra.mxu0 0.0
      %4495 = vmatprep.subr.mxu0 0.0
      %4496 = vmatpush2.msra.mxu0 0.0
      %4497 = vmatprep.subr.mxu0 0.0
      %4498 = vmatpush2.msra.mxu0 0.0
      %4499 = vmatprep.subr.mxu0 0.0
      %4500 = vmatpush2.msra.mxu0 0.0
      %4501 = vmatprep.subr.mxu0 0.0
      %4502 = vmatpush2.msra.mxu0 0.0
      %4503 = vmatprep.subr.mxu0 0.0
      %4504 = vmatpush2.msra.mxu0 0.0
      %4505 = vmatprep.subr.mxu0 0.0
      %4506 = vmatpush2.msra.mxu0 0.0
      %4507 = vmatprep.subr.mxu0 0.0
      %4508 = vmatpush2.msra.mxu0 0.0
      %4509 = vmatprep.subr.mxu0 0.0
      %4510 = vmatpush2.msra.mxu0 0.0
      %4511 = vmatprep.subr.mxu0 0.0
      %4512 = vmatpush2.msra.mxu0 0.0
      %4513 = vmatprep.subr.mxu0 0.0
      %4514 = vmatpush2.msra.mxu0 0.0
      %4515 = vmatprep.subr.mxu0 0.0
      %4516 = vmatpush2.msra.mxu0 0.0
      %4517 = vmatprep.subr.mxu0 0.0
      %4518 = vmatpush2.msra.mxu0 0.0
      %4519 = vmatprep.subr.mxu0 0.0
      %4520 = vmatpush2.msra.mxu0 0.0
      %4521 = vmatprep.subr.mxu0 0.0
      %4522 = vmatpush2.msra.mxu0 0.0
      %4523 = vmatprep.mubr.f32.mxu0 0.0
      %4524 = vmatmul.mubr.f32.gmra.mxu0 %v3987
      %v4525 = vpop.f32.mrf.mxu0
      %v4526 = vadd.f32 0.0, %v4525
      %v4527 = vpop.f32.mrf.mxu0
      %v4528 = vadd.f32 0.0, %v4527
      %4529 = vmatprep.mubr.f32.mxu0 0.0
      %4530 = vmatmul.mubr.f32.gmra.mxu0 %v3990
      %v4531 = vpop.f32.mrf.mxu0
      %v4532 = vadd.f32 0.0, %v4531
      %v4533 = vpop.f32.mrf.mxu0
      %v4534 = vadd.f32 0.0, %v4533
      %4535 = vmatprep.mubr.f32.mxu0 0.0
      %4536 = vmatmul.mubr.f32.gmra.mxu0 %v3993
      %v4537 = vpop.f32.mrf.mxu0
      %v4538 = vadd.f32 0.0, %v4537
      %v4539 = vpop.f32.mrf.mxu0
      %v4540 = vadd.f32 0.0, %v4539
      %4541 = vdwg.mxu0
      %4542 = vmatprep.subr.mxu0 0.0
      %4543 = vmatpush1.msra.mxu0 0.0
      %4544 = vmatprep.subr.mxu0 0.0
      %4545 = vmatpush1.msra.mxu0 0.0
      %4546 = vmatprep.subr.mxu0 0.0
      %4547 = vmatpush1.msra.mxu0 0.0
      %4548 = vmatprep.subr.mxu0 0.0
      %4549 = vmatpush1.msra.mxu0 0.0
      %4550 = vmatprep.subr.mxu0 0.0
      %4551 = vmatpush1.msra.mxu0 0.0
      %4552 = vmatprep.subr.mxu0 0.0
      %4553 = vmatpush1.msra.mxu0 0.0
      %4554 = vmatprep.subr.mxu0 0.0
      %4555 = vmatpush1.msra.mxu0 0.0
      %4556 = vmatprep.subr.mxu0 0.0
      %4557 = vmatpush1.msra.mxu0 0.0
      %4558 = vmatprep.subr.mxu0 0.0
      %4559 = vmatpush1.msra.mxu0 0.0
      %4560 = vmatprep.subr.mxu0 0.0
      %4561 = vmatpush1.msra.mxu0 0.0
      %4562 = vmatprep.subr.mxu0 0.0
      %4563 = vmatpush1.msra.mxu0 0.0
      %4564 = vmatprep.subr.mxu0 %v4036
      %4565 = vmatpush1.msra.mxu0 %v4033
      %4566 = vmatprep.subr.mxu0 %v3963
      %4567 = vmatpush1.msra.mxu0 %v3962
      %4568 = vmatprep.subr.mxu0 %v3947
      %4569 = vmatpush1.msra.mxu0 %v3946
      %4570 = vmatprep.subr.mxu0 %v3931
      %4571 = vmatpush1.msra.mxu0 %v3930
      %4572 = vmatprep.subr.mxu0 %v3915
      %4573 = vmatpush1.msra.mxu0 %v3914
      %4574 = vmatprep.subr.mxu0 0.0
      %4575 = vmatpush2.msra.mxu0 0.0
      %4576 = vmatprep.subr.mxu0 0.0
      %4577 = vmatpush2.msra.mxu0 0.0
      %4578 = vmatprep.subr.mxu0 0.0
      %4579 = vmatpush2.msra.mxu0 0.0
      %4580 = vmatprep.subr.mxu0 0.0
      %4581 = vmatpush2.msra.mxu0 0.0
      %4582 = vmatprep.subr.mxu0 0.0
      %4583 = vmatpush2.msra.mxu0 0.0
      %4584 = vmatprep.subr.mxu0 0.0
      %4585 = vmatpush2.msra.mxu0 0.0
      %4586 = vmatprep.subr.mxu0 0.0
      %4587 = vmatpush2.msra.mxu0 0.0
      %4588 = vmatprep.subr.mxu0 0.0
      %4589 = vmatpush2.msra.mxu0 0.0
      %4590 = vmatprep.subr.mxu0 0.0
      %4591 = vmatpush2.msra.mxu0 0.0
      %4592 = vmatprep.subr.mxu0 0.0
      %4593 = vmatpush2.msra.mxu0 0.0
      %4594 = vmatprep.subr.mxu0 0.0
      %4595 = vmatpush2.msra.mxu0 0.0
      %4596 = vmatprep.subr.mxu0 0.0
      %4597 = vmatpush2.msra.mxu0 0.0
      %4598 = vmatprep.subr.mxu0 0.0
      %4599 = vmatpush2.msra.mxu0 0.0
      %4600 = vmatprep.subr.mxu0 0.0
      %4601 = vmatpush2.msra.mxu0 0.0
      %4602 = vmatprep.subr.mxu0 0.0
      %4603 = vmatpush2.msra.mxu0 0.0
      %4604 = vmatprep.subr.mxu0 0.0
      %4605 = vmatpush2.msra.mxu0 0.0
      %4606 = vmatprep.mubr.f32.mxu0 0.0
      %4607 = vmatmul.mubr.f32.gmra.mxu0 %v3987
      %v4608 = vpop.f32.mrf.mxu0
      %v4609 = vadd.f32 0.0, %v4608
      %v4610 = vpop.f32.mrf.mxu0
      %v4611 = vadd.f32 0.0, %v4610
      %4612 = vmatprep.mubr.f32.mxu0 0.0
      %4613 = vmatmul.mubr.f32.gmra.mxu0 %v3990
      %v4614 = vpop.f32.mrf.mxu0
      %v4615 = vadd.f32 0.0, %v4614
      %v4616 = vpop.f32.mrf.mxu0
      %v4617 = vadd.f32 0.0, %v4616
      %4618 = vmatprep.mubr.f32.mxu0 0.0
      %4619 = vmatmul.mubr.f32.gmra.mxu0 %v3993
      %v4620 = vpop.f32.mrf.mxu0
      %v4621 = vadd.f32 0.0, %v4620
      %v4622 = vpop.f32.mrf.mxu0
      %v4623 = vadd.f32 0.0, %v4622
      %4624 = vdwg.mxu0
      %4625 = vmatprep.subr.mxu0 0.0
      %4626 = vmatpush1.msra.mxu0 0.0
      %4627 = vmatprep.subr.mxu0 0.0
      %4628 = vmatpush1.msra.mxu0 0.0
      %4629 = vmatprep.subr.mxu0 0.0
      %4630 = vmatpush1.msra.mxu0 0.0
      %4631 = vmatprep.subr.mxu0 0.0
      %4632 = vmatpush1.msra.mxu0 0.0
      %4633 = vmatprep.subr.mxu0 0.0
      %4634 = vmatpush1.msra.mxu0 0.0
      %4635 = vmatprep.subr.mxu0 0.0
      %4636 = vmatpush1.msra.mxu0 0.0
      %4637 = vmatprep.subr.mxu0 0.0
      %4638 = vmatpush1.msra.mxu0 0.0
      %4639 = vmatprep.subr.mxu0 0.0
      %4640 = vmatpush1.msra.mxu0 0.0
      %4641 = vmatprep.subr.mxu0 0.0
      %4642 = vmatpush1.msra.mxu0 0.0
      %4643 = vmatprep.subr.mxu0 0.0
      %4644 = vmatpush1.msra.mxu0 0.0
      %4645 = vmatprep.subr.mxu0 0.0
      %4646 = vmatpush1.msra.mxu0 0.0
      %4647 = vmatprep.subr.mxu0 %v4042
      %4648 = vmatpush1.msra.mxu0 %v4039
      %4649 = vmatprep.subr.mxu0 %v3965
      %4650 = vmatpush1.msra.mxu0 %v3964
      %4651 = vmatprep.subr.mxu0 %v3949
      %4652 = vmatpush1.msra.mxu0 %v3948
      %4653 = vmatprep.subr.mxu0 %v3933
      %4654 = vmatpush1.msra.mxu0 %v3932
      %4655 = vmatprep.subr.mxu0 %v3917
      %4656 = vmatpush1.msra.mxu0 %v3916
      %4657 = vmatprep.subr.mxu0 0.0
      %4658 = vmatpush2.msra.mxu0 0.0
      %4659 = vmatprep.subr.mxu0 0.0
      %4660 = vmatpush2.msra.mxu0 0.0
      %4661 = vmatprep.subr.mxu0 0.0
      %4662 = vmatpush2.msra.mxu0 0.0
      %4663 = vmatprep.subr.mxu0 0.0
      %4664 = vmatpush2.msra.mxu0 0.0
      %4665 = vmatprep.subr.mxu0 0.0
      %4666 = vmatpush2.msra.mxu0 0.0
      %4667 = vmatprep.subr.mxu0 0.0
      %4668 = vmatpush2.msra.mxu0 0.0
      %4669 = vmatprep.subr.mxu0 0.0
      %4670 = vmatpush2.msra.mxu0 0.0
      %4671 = vmatprep.subr.mxu0 0.0
      %4672 = vmatpush2.msra.mxu0 0.0
      %4673 = vmatprep.subr.mxu0 0.0
      %4674 = vmatpush2.msra.mxu0 0.0
      %4675 = vmatprep.subr.mxu0 0.0
      %4676 = vmatpush2.msra.mxu0 0.0
      %4677 = vmatprep.subr.mxu0 0.0
      %4678 = vmatpush2.msra.mxu0 0.0
      %4679 = vmatprep.subr.mxu0 0.0
      %4680 = vmatpush2.msra.mxu0 0.0
      %4681 = vmatprep.subr.mxu0 0.0
      %4682 = vmatpush2.msra.mxu0 0.0
      %4683 = vmatprep.subr.mxu0 0.0
      %4684 = vmatpush2.msra.mxu0 0.0
      %4685 = vmatprep.subr.mxu0 0.0
      %4686 = vmatpush2.msra.mxu0 0.0
      %4687 = vmatprep.subr.mxu0 0.0
      %4688 = vmatpush2.msra.mxu0 0.0
      %4689 = vmatprep.mubr.f32.mxu0 0.0
      %4690 = vmatmul.mubr.f32.gmra.mxu0 %v3987
      %v4691 = vpop.f32.mrf.mxu0
      %v4692 = vadd.f32 0.0, %v4691
      %v4693 = vpop.f32.mrf.mxu0
      %v4694 = vadd.f32 0.0, %v4693
      %4695 = vmatprep.mubr.f32.mxu0 0.0
      %4696 = vmatmul.mubr.f32.gmra.mxu0 %v3990
      %v4697 = vpop.f32.mrf.mxu0
      %v4698 = vadd.f32 0.0, %v4697
      %v4699 = vpop.f32.mrf.mxu0
      %v4700 = vadd.f32 0.0, %v4699
      %4701 = vmatprep.mubr.f32.mxu0 0.0
      %4702 = vmatmul.mubr.f32.gmra.mxu0 %v3993
      %v4703 = vpop.f32.mrf.mxu0
      %v4704 = vadd.f32 0.0, %v4703
      %v4705 = vpop.f32.mrf.mxu0
      %v4706 = vadd.f32 0.0, %v4705
      %4707 = vdwg.mxu0
      %v4708 = vmax.f32 %v4111, 0.0
      %v4709 = vmax.f32 %v4113, 0.0
      %v4710 = vmax.f32 %v4194, 0.0
      %v4711 = vmax.f32 %v4196, 0.0
      %v4712 = vmax.f32 %v4277, 0.0
      %v4713 = vmax.f32 %v4279, 0.0
      %v4714 = vmax.f32 %v4360, 0.0
      %v4715 = vmax.f32 %v4362, 0.0
      %v4716 = vmax.f32 %v4443, 0.0
      %v4717 = vmax.f32 %v4445, 0.0
      %v4718 = vmax.f32 %v4526, 0.0
      %v4719 = vmax.f32 %v4528, 0.0
      %v4720 = vmax.f32 %v4609, 0.0
      %v4721 = vmax.f32 %v4611, 0.0
      %v4722 = vmax.f32 %v4692, 0.0
      %v4723 = vmax.f32 %v4694, 0.0
      %v4724 = vmax.f32 %v4117, 0.0
      %v4725 = vmax.f32 %v4119, 0.0
      %v4726 = vmax.f32 %v4200, 0.0
      %v4727 = vmax.f32 %v4202, 0.0
      %v4728 = vmax.f32 %v4283, 0.0
      %v4729 = vmax.f32 %v4285, 0.0
      %v4730 = vmax.f32 %v4366, 0.0
      %v4731 = vmax.f32 %v4368, 0.0
      %v4732 = vmax.f32 %v4449, 0.0
      %v4733 = vmax.f32 %v4451, 0.0
      %v4734 = vmax.f32 %v4532, 0.0
      %v4735 = vmax.f32 %v4534, 0.0
      %v4736 = vmax.f32 %v4615, 0.0
      %v4737 = vmax.f32 %v4617, 0.0
      %v4738 = vmax.f32 %v4698, 0.0
      %v4739 = vmax.f32 %v4700, 0.0
      %v4740 = vmax.f32 %v4123, 0.0
      %v4741 = vmax.f32 %v4125, 0.0
      %v4742 = vmax.f32 %v4206, 0.0
      %v4743 = vmax.f32 %v4208, 0.0
      %v4744 = vmax.f32 %v4289, 0.0
      %v4745 = vmax.f32 %v4291, 0.0
      %v4746 = vmax.f32 %v4372, 0.0
      %v4747 = vmax.f32 %v4374, 0.0
      %v4748 = vmax.f32 %v4455, 0.0
      %v4749 = vmax.f32 %v4457, 0.0
      %v4750 = vmax.f32 %v4538, 0.0
      %v4751 = vmax.f32 %v4540, 0.0
      %v4752 = vmax.f32 %v4621, 0.0
      %v4753 = vmax.f32 %v4623, 0.0
      %v4754 = vmax.f32 %v4704, 0.0
      %v4755 = vmax.f32 %v4706, 0.0
      %v4756 = vld [vmem:[#allocation2] sm:$0xff]
      %v4757 = vld [vmem:[#allocation2 + $0x8] sm:$0xff]
      %v4758 = vld [vmem:[#allocation2 + $0x10] sm:$0xff]
      %v4759 = vld [vmem:[#allocation2 + $0x18] sm:$0xff]
      %v4760 = vld [vmem:[#allocation2 + $0x20] sm:$0xff]
      %v4761 = vld [vmem:[#allocation2 + $0x28] sm:$0xff]
      %v4762 = vld [vmem:[#allocation2 + $0x30] sm:$0xff]
      %v4763 = vld [vmem:[#allocation2 + $0x38] sm:$0xff]
      %4764 = vmatprep.subr.mxu0 0.0
      %4765 = vmatpush1.xpose.msra.mxu0 0.0
      %4766 = vmatprep.subr.mxu0 0.0
      %4767 = vmatpush1.xpose.msra.mxu0 0.0
      %4768 = vmatprep.subr.mxu0 0.0
      %4769 = vmatpush1.xpose.msra.mxu0 0.0
      %4770 = vmatprep.subr.mxu0 0.0
      %4771 = vmatpush1.xpose.msra.mxu0 0.0
      %4772 = vmatprep.subr.mxu0 0.0
      %4773 = vmatpush1.xpose.msra.mxu0 0.0
      %4774 = vmatprep.subr.mxu0 0.0
      %4775 = vmatpush1.xpose.msra.mxu0 0.0
      %4776 = vmatprep.subr.mxu0 0.0
      %4777 = vmatpush1.xpose.msra.mxu0 0.0
      %4778 = vmatprep.subr.mxu0 0.0
      %4779 = vmatpush1.xpose.msra.mxu0 0.0
      %4780 = vmatprep.subr.mxu0 0.0
      %4781 = vmatpush1.xpose.msra.mxu0 0.0
      %4782 = vmatprep.subr.mxu0 0.0
      %4783 = vmatpush1.xpose.msra.mxu0 0.0
      %4784 = vmatprep.subr.mxu0 0.0
      %4785 = vmatpush1.xpose.msra.mxu0 0.0
      %4786 = vmatprep.subr.mxu0 0.0
      %4787 = vmatpush1.xpose.msra.mxu0 0.0
      %4788 = vmatprep.subr.mxu0 0.0
      %4789 = vmatpush1.xpose.msra.mxu0 0.0
      %4790 = vmatprep.subr.mxu0 %v4741
      %4791 = vmatpush1.xpose.msra.mxu0 %v4740
      %4792 = vmatprep.subr.mxu0 %v4725
      %4793 = vmatpush1.xpose.msra.mxu0 %v4724
      %4794 = vmatprep.subr.mxu0 %v4709
      %4795 = vmatpush1.xpose.msra.mxu0 %v4708
      %4796 = vmatprep.subr.mxu0 0.0
      %4797 = vmatpush2.xpose.msra.mxu0 0.0
      %4798 = vmatprep.subr.mxu0 0.0
      %4799 = vmatpush2.xpose.msra.mxu0 0.0
      %4800 = vmatprep.subr.mxu0 0.0
      %4801 = vmatpush2.xpose.msra.mxu0 0.0
      %4802 = vmatprep.subr.mxu0 0.0
      %4803 = vmatpush2.xpose.msra.mxu0 0.0
      %4804 = vmatprep.subr.mxu0 0.0
      %4805 = vmatpush2.xpose.msra.mxu0 0.0
      %4806 = vmatprep.subr.mxu0 0.0
      %4807 = vmatpush2.xpose.msra.mxu0 0.0
      %4808 = vmatprep.subr.mxu0 0.0
      %4809 = vmatpush2.xpose.msra.mxu0 0.0
      %4810 = vmatprep.subr.mxu0 0.0
      %4811 = vmatpush2.xpose.msra.mxu0 0.0
      %4812 = vmatprep.subr.mxu0 0.0
      %4813 = vmatpush2.xpose.msra.mxu0 0.0
      %4814 = vmatprep.subr.mxu0 0.0
      %4815 = vmatpush2.xpose.msra.mxu0 0.0
      %4816 = vmatprep.subr.mxu0 0.0
      %4817 = vmatpush2.xpose.msra.mxu0 0.0
      %4818 = vmatprep.subr.mxu0 0.0
      %4819 = vmatpush2.xpose.msra.mxu0 0.0
      %4820 = vmatprep.subr.mxu0 0.0
      %4821 = vmatpush2.xpose.msra.mxu0 0.0
      %4822 = vmatprep.subr.mxu0 0.0
      %4823 = vmatpush2.xpose.msra.mxu0 0.0
      %4824 = vmatprep.subr.mxu0 0.0
      %4825 = vmatpush2.xpose.msra.mxu0 0.0
      %4826 = vmatprep.subr.mxu0 0.0
      %4827 = vmatpush2.xpose.msra.mxu0 0.0
      %4828 = vmatprep.mubr.f32.mxu0 %v1189
      %4829 = vmatmul.mubr.f32.gmra.mxu0 %v1188
      %v4830 = vpop.f32.mrf.mxu0
      %v4831 = vadd.f32 0.0, %v4830
      %v4832 = vpop.f32.mrf.mxu0
      %4833 = vmatprep.mubr.f32.mxu0 %v1205
      %4834 = vmatmul.mubr.f32.gmra.mxu0 %v1204
      %v4835 = vpop.f32.mrf.mxu0
      %v4836 = vadd.f32 0.0, %v4835
      %v4837 = vpop.f32.mrf.mxu0
      %4838 = vmatprep.mubr.f32.mxu0 %v1221
      %4839 = vmatmul.mubr.f32.gmra.mxu0 %v1220
      %v4840 = vpop.f32.mrf.mxu0
      %v4841 = vadd.f32 0.0, %v4840
      %v4842 = vpop.f32.mrf.mxu0
      %4843 = vmatprep.mubr.f32.mxu0 %v1237
      %4844 = vmatmul.mubr.f32.gmra.mxu0 %v1236
      %v4845 = vpop.f32.mrf.mxu0
      %v4846 = vadd.f32 0.0, %v4845
      %v4847 = vpop.f32.mrf.mxu0
      %4848 = vmatprep.mubr.f32.mxu0 %v1253
      %4849 = vmatmul.mubr.f32.gmra.mxu0 %v1252
      %v4850 = vpop.f32.mrf.mxu0
      %v4851 = vadd.f32 0.0, %v4850
      %v4852 = vpop.f32.mrf.mxu0
      %4853 = vmatprep.mubr.f32.mxu0 %v1269
      %4854 = vmatmul.mubr.f32.gmra.mxu0 %v1268
      %v4855 = vpop.f32.mrf.mxu0
      %v4856 = vadd.f32 0.0, %v4855
      %v4857 = vpop.f32.mrf.mxu0
      %4858 = vmatprep.mubr.f32.mxu0 %v1285
      %4859 = vmatmul.mubr.f32.gmra.mxu0 %v1284
      %v4860 = vpop.f32.mrf.mxu0
      %v4861 = vadd.f32 0.0, %v4860
      %v4862 = vpop.f32.mrf.mxu0
      %4863 = vmatprep.mubr.f32.mxu0 %v1301
      %4864 = vmatmul.mubr.f32.gmra.mxu0 %v1300
      %v4865 = vpop.f32.mrf.mxu0
      %v4866 = vadd.f32 0.0, %v4865
      %v4867 = vpop.f32.mrf.mxu0
      %4868 = vdwg.mxu0
      %4869 = vmatprep.subr.mxu0 0.0
      %4870 = vmatpush1.xpose.msra.mxu0 0.0
      %4871 = vmatprep.subr.mxu0 0.0
      %4872 = vmatpush1.xpose.msra.mxu0 0.0
      %4873 = vmatprep.subr.mxu0 0.0
      %4874 = vmatpush1.xpose.msra.mxu0 0.0
      %4875 = vmatprep.subr.mxu0 0.0
      %4876 = vmatpush1.xpose.msra.mxu0 0.0
      %4877 = vmatprep.subr.mxu0 0.0
      %4878 = vmatpush1.xpose.msra.mxu0 0.0
      %4879 = vmatprep.subr.mxu0 0.0
      %4880 = vmatpush1.xpose.msra.mxu0 0.0
      %4881 = vmatprep.subr.mxu0 0.0
      %4882 = vmatpush1.xpose.msra.mxu0 0.0
      %4883 = vmatprep.subr.mxu0 0.0
      %4884 = vmatpush1.xpose.msra.mxu0 0.0
      %4885 = vmatprep.subr.mxu0 0.0
      %4886 = vmatpush1.xpose.msra.mxu0 0.0
      %4887 = vmatprep.subr.mxu0 0.0
      %4888 = vmatpush1.xpose.msra.mxu0 0.0
      %4889 = vmatprep.subr.mxu0 0.0
      %4890 = vmatpush1.xpose.msra.mxu0 0.0
      %4891 = vmatprep.subr.mxu0 0.0
      %4892 = vmatpush1.xpose.msra.mxu0 0.0
      %4893 = vmatprep.subr.mxu0 0.0
      %4894 = vmatpush1.xpose.msra.mxu0 0.0
      %4895 = vmatprep.subr.mxu0 %v4743
      %4896 = vmatpush1.xpose.msra.mxu0 %v4742
      %4897 = vmatprep.subr.mxu0 %v4727
      %4898 = vmatpush1.xpose.msra.mxu0 %v4726
      %4899 = vmatprep.subr.mxu0 %v4711
      %4900 = vmatpush1.xpose.msra.mxu0 %v4710
      %4901 = vmatprep.subr.mxu0 0.0
      %4902 = vmatpush2.xpose.msra.mxu0 0.0
      %4903 = vmatprep.subr.mxu0 0.0
      %4904 = vmatpush2.xpose.msra.mxu0 0.0
      %4905 = vmatprep.subr.mxu0 0.0
      %4906 = vmatpush2.xpose.msra.mxu0 0.0
      %4907 = vmatprep.subr.mxu0 0.0
      %4908 = vmatpush2.xpose.msra.mxu0 0.0
      %4909 = vmatprep.subr.mxu0 0.0
      %4910 = vmatpush2.xpose.msra.mxu0 0.0
      %4911 = vmatprep.subr.mxu0 0.0
      %4912 = vmatpush2.xpose.msra.mxu0 0.0
      %4913 = vmatprep.subr.mxu0 0.0
      %4914 = vmatpush2.xpose.msra.mxu0 0.0
      %4915 = vmatprep.subr.mxu0 0.0
      %4916 = vmatpush2.xpose.msra.mxu0 0.0
      %4917 = vmatprep.subr.mxu0 0.0
      %4918 = vmatpush2.xpose.msra.mxu0 0.0
      %4919 = vmatprep.subr.mxu0 0.0
      %4920 = vmatpush2.xpose.msra.mxu0 0.0
      %4921 = vmatprep.subr.mxu0 0.0
      %4922 = vmatpush2.xpose.msra.mxu0 0.0
      %4923 = vmatprep.subr.mxu0 0.0
      %4924 = vmatpush2.xpose.msra.mxu0 0.0
      %4925 = vmatprep.subr.mxu0 0.0
      %4926 = vmatpush2.xpose.msra.mxu0 0.0
      %4927 = vmatprep.subr.mxu0 0.0
      %4928 = vmatpush2.xpose.msra.mxu0 0.0
      %4929 = vmatprep.subr.mxu0 0.0
      %4930 = vmatpush2.xpose.msra.mxu0 0.0
      %4931 = vmatprep.subr.mxu0 0.0
      %4932 = vmatpush2.xpose.msra.mxu0 0.0
      %4933 = vmatprep.mubr.f32.mxu0 %v1191
      %4934 = vmatmul.mubr.f32.gmra.mxu0 %v1190
      %v4935 = vpop.f32.mrf.mxu0
      %v4936 = vadd.f32 %v4831, %v4935
      %v4937 = vpop.f32.mrf.mxu0
      %4938 = vmatprep.mubr.f32.mxu0 %v1207
      %4939 = vmatmul.mubr.f32.gmra.mxu0 %v1206
      %v4940 = vpop.f32.mrf.mxu0
      %v4941 = vadd.f32 %v4836, %v4940
      %v4942 = vpop.f32.mrf.mxu0
      %4943 = vmatprep.mubr.f32.mxu0 %v1223
      %4944 = vmatmul.mubr.f32.gmra.mxu0 %v1222
      %v4945 = vpop.f32.mrf.mxu0
      %v4946 = vadd.f32 %v4841, %v4945
      %v4947 = vpop.f32.mrf.mxu0
      %4948 = vmatprep.mubr.f32.mxu0 %v1239
      %4949 = vmatmul.mubr.f32.gmra.mxu0 %v1238
      %v4950 = vpop.f32.mrf.mxu0
      %v4951 = vadd.f32 %v4846, %v4950
      %v4952 = vpop.f32.mrf.mxu0
      %4953 = vmatprep.mubr.f32.mxu0 %v1255
      %4954 = vmatmul.mubr.f32.gmra.mxu0 %v1254
      %v4955 = vpop.f32.mrf.mxu0
      %v4956 = vadd.f32 %v4851, %v4955
      %v4957 = vpop.f32.mrf.mxu0
      %4958 = vmatprep.mubr.f32.mxu0 %v1271
      %4959 = vmatmul.mubr.f32.gmra.mxu0 %v1270
      %v4960 = vpop.f32.mrf.mxu0
      %v4961 = vadd.f32 %v4856, %v4960
      %v4962 = vpop.f32.mrf.mxu0
      %4963 = vmatprep.mubr.f32.mxu0 %v1287
      %4964 = vmatmul.mubr.f32.gmra.mxu0 %v1286
      %v4965 = vpop.f32.mrf.mxu0
      %v4966 = vadd.f32 %v4861, %v4965
      %v4967 = vpop.f32.mrf.mxu0
      %4968 = vmatprep.mubr.f32.mxu0 %v1303
      %4969 = vmatmul.mubr.f32.gmra.mxu0 %v1302
      %v4970 = vpop.f32.mrf.mxu0
      %v4971 = vadd.f32 %v4866, %v4970
      %v4972 = vpop.f32.mrf.mxu0
      %4973 = vdwg.mxu0
      %4974 = vmatprep.subr.mxu0 0.0
      %4975 = vmatpush1.xpose.msra.mxu0 0.0
      %4976 = vmatprep.subr.mxu0 0.0
      %4977 = vmatpush1.xpose.msra.mxu0 0.0
      %4978 = vmatprep.subr.mxu0 0.0
      %4979 = vmatpush1.xpose.msra.mxu0 0.0
      %4980 = vmatprep.subr.mxu0 0.0
      %4981 = vmatpush1.xpose.msra.mxu0 0.0
      %4982 = vmatprep.subr.mxu0 0.0
      %4983 = vmatpush1.xpose.msra.mxu0 0.0
      %4984 = vmatprep.subr.mxu0 0.0
      %4985 = vmatpush1.xpose.msra.mxu0 0.0
      %4986 = vmatprep.subr.mxu0 0.0
      %4987 = vmatpush1.xpose.msra.mxu0 0.0
      %4988 = vmatprep.subr.mxu0 0.0
      %4989 = vmatpush1.xpose.msra.mxu0 0.0
      %4990 = vmatprep.subr.mxu0 0.0
      %4991 = vmatpush1.xpose.msra.mxu0 0.0
      %4992 = vmatprep.subr.mxu0 0.0
      %4993 = vmatpush1.xpose.msra.mxu0 0.0
      %4994 = vmatprep.subr.mxu0 0.0
      %4995 = vmatpush1.xpose.msra.mxu0 0.0
      %4996 = vmatprep.subr.mxu0 0.0
      %4997 = vmatpush1.xpose.msra.mxu0 0.0
      %4998 = vmatprep.subr.mxu0 0.0
      %4999 = vmatpush1.xpose.msra.mxu0 0.0
      %5000 = vmatprep.subr.mxu0 %v4745
      %5001 = vmatpush1.xpose.msra.mxu0 %v4744
      %5002 = vmatprep.subr.mxu0 %v4729
      %5003 = vmatpush1.xpose.msra.mxu0 %v4728
      %5004 = vmatprep.subr.mxu0 %v4713
      %5005 = vmatpush1.xpose.msra.mxu0 %v4712
      %5006 = vmatprep.subr.mxu0 0.0
      %5007 = vmatpush2.xpose.msra.mxu0 0.0
      %5008 = vmatprep.subr.mxu0 0.0
      %5009 = vmatpush2.xpose.msra.mxu0 0.0
      %5010 = vmatprep.subr.mxu0 0.0
      %5011 = vmatpush2.xpose.msra.mxu0 0.0
      %5012 = vmatprep.subr.mxu0 0.0
      %5013 = vmatpush2.xpose.msra.mxu0 0.0
      %5014 = vmatprep.subr.mxu0 0.0
      %5015 = vmatpush2.xpose.msra.mxu0 0.0
      %5016 = vmatprep.subr.mxu0 0.0
      %5017 = vmatpush2.xpose.msra.mxu0 0.0
      %5018 = vmatprep.subr.mxu0 0.0
      %5019 = vmatpush2.xpose.msra.mxu0 0.0
      %5020 = vmatprep.subr.mxu0 0.0
      %5021 = vmatpush2.xpose.msra.mxu0 0.0
      %5022 = vmatprep.subr.mxu0 0.0
      %5023 = vmatpush2.xpose.msra.mxu0 0.0
      %5024 = vmatprep.subr.mxu0 0.0
      %5025 = vmatpush2.xpose.msra.mxu0 0.0
      %5026 = vmatprep.subr.mxu0 0.0
      %5027 = vmatpush2.xpose.msra.mxu0 0.0
      %5028 = vmatprep.subr.mxu0 0.0
      %5029 = vmatpush2.xpose.msra.mxu0 0.0
      %5030 = vmatprep.subr.mxu0 0.0
      %5031 = vmatpush2.xpose.msra.mxu0 0.0
      %5032 = vmatprep.subr.mxu0 0.0
      %5033 = vmatpush2.xpose.msra.mxu0 0.0
      %5034 = vmatprep.subr.mxu0 0.0
      %5035 = vmatpush2.xpose.msra.mxu0 0.0
      %5036 = vmatprep.subr.mxu0 0.0
      %5037 = vmatpush2.xpose.msra.mxu0 0.0
      %5038 = vmatprep.mubr.f32.mxu0 %v1193
      %5039 = vmatmul.mubr.f32.gmra.mxu0 %v1192
      %v5040 = vpop.f32.mrf.mxu0
      %v5041 = vadd.f32 %v4936, %v5040
      %v5042 = vpop.f32.mrf.mxu0
      %5043 = vmatprep.mubr.f32.mxu0 %v1209
      %5044 = vmatmul.mubr.f32.gmra.mxu0 %v1208
      %v5045 = vpop.f32.mrf.mxu0
      %v5046 = vadd.f32 %v4941, %v5045
      %v5047 = vpop.f32.mrf.mxu0
      %5048 = vmatprep.mubr.f32.mxu0 %v1225
      %5049 = vmatmul.mubr.f32.gmra.mxu0 %v1224
      %v5050 = vpop.f32.mrf.mxu0
      %v5051 = vadd.f32 %v4946, %v5050
      %v5052 = vpop.f32.mrf.mxu0
      %5053 = vmatprep.mubr.f32.mxu0 %v1241
      %5054 = vmatmul.mubr.f32.gmra.mxu0 %v1240
      %v5055 = vpop.f32.mrf.mxu0
      %v5056 = vadd.f32 %v4951, %v5055
      %v5057 = vpop.f32.mrf.mxu0
      %5058 = vmatprep.mubr.f32.mxu0 %v1257
      %5059 = vmatmul.mubr.f32.gmra.mxu0 %v1256
      %v5060 = vpop.f32.mrf.mxu0
      %v5061 = vadd.f32 %v4956, %v5060
      %v5062 = vpop.f32.mrf.mxu0
      %5063 = vmatprep.mubr.f32.mxu0 %v1273
      %5064 = vmatmul.mubr.f32.gmra.mxu0 %v1272
      %v5065 = vpop.f32.mrf.mxu0
      %v5066 = vadd.f32 %v4961, %v5065
      %v5067 = vpop.f32.mrf.mxu0
      %5068 = vmatprep.mubr.f32.mxu0 %v1289
      %5069 = vmatmul.mubr.f32.gmra.mxu0 %v1288
      %v5070 = vpop.f32.mrf.mxu0
      %v5071 = vadd.f32 %v4966, %v5070
      %v5072 = vpop.f32.mrf.mxu0
      %5073 = vmatprep.mubr.f32.mxu0 %v1305
      %5074 = vmatmul.mubr.f32.gmra.mxu0 %v1304
      %v5075 = vpop.f32.mrf.mxu0
      %v5076 = vadd.f32 %v4971, %v5075
      %v5077 = vpop.f32.mrf.mxu0
      %5078 = vdwg.mxu0
      %5079 = vmatprep.subr.mxu0 0.0
      %5080 = vmatpush1.xpose.msra.mxu0 0.0
      %5081 = vmatprep.subr.mxu0 0.0
      %5082 = vmatpush1.xpose.msra.mxu0 0.0
      %5083 = vmatprep.subr.mxu0 0.0
      %5084 = vmatpush1.xpose.msra.mxu0 0.0
      %5085 = vmatprep.subr.mxu0 0.0
      %5086 = vmatpush1.xpose.msra.mxu0 0.0
      %5087 = vmatprep.subr.mxu0 0.0
      %5088 = vmatpush1.xpose.msra.mxu0 0.0
      %5089 = vmatprep.subr.mxu0 0.0
      %5090 = vmatpush1.xpose.msra.mxu0 0.0
      %5091 = vmatprep.subr.mxu0 0.0
      %5092 = vmatpush1.xpose.msra.mxu0 0.0
      %5093 = vmatprep.subr.mxu0 0.0
      %5094 = vmatpush1.xpose.msra.mxu0 0.0
      %5095 = vmatprep.subr.mxu0 0.0
      %5096 = vmatpush1.xpose.msra.mxu0 0.0
      %5097 = vmatprep.subr.mxu0 0.0
      %5098 = vmatpush1.xpose.msra.mxu0 0.0
      %5099 = vmatprep.subr.mxu0 0.0
      %5100 = vmatpush1.xpose.msra.mxu0 0.0
      %5101 = vmatprep.subr.mxu0 0.0
      %5102 = vmatpush1.xpose.msra.mxu0 0.0
      %5103 = vmatprep.subr.mxu0 0.0
      %5104 = vmatpush1.xpose.msra.mxu0 0.0
      %5105 = vmatprep.subr.mxu0 %v4747
      %5106 = vmatpush1.xpose.msra.mxu0 %v4746
      %5107 = vmatprep.subr.mxu0 %v4731
      %5108 = vmatpush1.xpose.msra.mxu0 %v4730
      %5109 = vmatprep.subr.mxu0 %v4715
      %5110 = vmatpush1.xpose.msra.mxu0 %v4714
      %5111 = vmatprep.subr.mxu0 0.0
      %5112 = vmatpush2.xpose.msra.mxu0 0.0
      %5113 = vmatprep.subr.mxu0 0.0
      %5114 = vmatpush2.xpose.msra.mxu0 0.0
      %5115 = vmatprep.subr.mxu0 0.0
      %5116 = vmatpush2.xpose.msra.mxu0 0.0
      %5117 = vmatprep.subr.mxu0 0.0
      %5118 = vmatpush2.xpose.msra.mxu0 0.0
      %5119 = vmatprep.subr.mxu0 0.0
      %5120 = vmatpush2.xpose.msra.mxu0 0.0
      %5121 = vmatprep.subr.mxu0 0.0
      %5122 = vmatpush2.xpose.msra.mxu0 0.0
      %5123 = vmatprep.subr.mxu0 0.0
      %5124 = vmatpush2.xpose.msra.mxu0 0.0
      %5125 = vmatprep.subr.mxu0 0.0
      %5126 = vmatpush2.xpose.msra.mxu0 0.0
      %5127 = vmatprep.subr.mxu0 0.0
      %5128 = vmatpush2.xpose.msra.mxu0 0.0
      %5129 = vmatprep.subr.mxu0 0.0
      %5130 = vmatpush2.xpose.msra.mxu0 0.0
      %5131 = vmatprep.subr.mxu0 0.0
      %5132 = vmatpush2.xpose.msra.mxu0 0.0
      %5133 = vmatprep.subr.mxu0 0.0
      %5134 = vmatpush2.xpose.msra.mxu0 0.0
      %5135 = vmatprep.subr.mxu0 0.0
      %5136 = vmatpush2.xpose.msra.mxu0 0.0
      %5137 = vmatprep.subr.mxu0 0.0
      %5138 = vmatpush2.xpose.msra.mxu0 0.0
      %5139 = vmatprep.subr.mxu0 0.0
      %5140 = vmatpush2.xpose.msra.mxu0 0.0
      %5141 = vmatprep.subr.mxu0 0.0
      %5142 = vmatpush2.xpose.msra.mxu0 0.0
      %5143 = vmatprep.mubr.f32.mxu0 %v1195
      %5144 = vmatmul.mubr.f32.gmra.mxu0 %v1194
      %v5145 = vpop.f32.mrf.mxu0
      %v5146 = vadd.f32 %v5041, %v5145
      %v5147 = vpop.f32.mrf.mxu0
      %5148 = vmatprep.mubr.f32.mxu0 %v1211
      %5149 = vmatmul.mubr.f32.gmra.mxu0 %v1210
      %v5150 = vpop.f32.mrf.mxu0
      %v5151 = vadd.f32 %v5046, %v5150
      %v5152 = vpop.f32.mrf.mxu0
      %5153 = vmatprep.mubr.f32.mxu0 %v1227
      %5154 = vmatmul.mubr.f32.gmra.mxu0 %v1226
      %v5155 = vpop.f32.mrf.mxu0
      %v5156 = vadd.f32 %v5051, %v5155
      %v5157 = vpop.f32.mrf.mxu0
      %5158 = vmatprep.mubr.f32.mxu0 %v1243
      %5159 = vmatmul.mubr.f32.gmra.mxu0 %v1242
      %v5160 = vpop.f32.mrf.mxu0
      %v5161 = vadd.f32 %v5056, %v5160
      %v5162 = vpop.f32.mrf.mxu0
      %5163 = vmatprep.mubr.f32.mxu0 %v1259
      %5164 = vmatmul.mubr.f32.gmra.mxu0 %v1258
      %v5165 = vpop.f32.mrf.mxu0
      %v5166 = vadd.f32 %v5061, %v5165
      %v5167 = vpop.f32.mrf.mxu0
      %5168 = vmatprep.mubr.f32.mxu0 %v1275
      %5169 = vmatmul.mubr.f32.gmra.mxu0 %v1274
      %v5170 = vpop.f32.mrf.mxu0
      %v5171 = vadd.f32 %v5066, %v5170
      %v5172 = vpop.f32.mrf.mxu0
      %5173 = vmatprep.mubr.f32.mxu0 %v1291
      %5174 = vmatmul.mubr.f32.gmra.mxu0 %v1290
      %v5175 = vpop.f32.mrf.mxu0
      %v5176 = vadd.f32 %v5071, %v5175
      %v5177 = vpop.f32.mrf.mxu0
      %5178 = vmatprep.mubr.f32.mxu0 %v1307
      %5179 = vmatmul.mubr.f32.gmra.mxu0 %v1306
      %v5180 = vpop.f32.mrf.mxu0
      %v5181 = vadd.f32 %v5076, %v5180
      %v5182 = vpop.f32.mrf.mxu0
      %5183 = vdwg.mxu0
      %5184 = vmatprep.subr.mxu0 0.0
      %5185 = vmatpush1.xpose.msra.mxu0 0.0
      %5186 = vmatprep.subr.mxu0 0.0
      %5187 = vmatpush1.xpose.msra.mxu0 0.0
      %5188 = vmatprep.subr.mxu0 0.0
      %5189 = vmatpush1.xpose.msra.mxu0 0.0
      %5190 = vmatprep.subr.mxu0 0.0
      %5191 = vmatpush1.xpose.msra.mxu0 0.0
      %5192 = vmatprep.subr.mxu0 0.0
      %5193 = vmatpush1.xpose.msra.mxu0 0.0
      %5194 = vmatprep.subr.mxu0 0.0
      %5195 = vmatpush1.xpose.msra.mxu0 0.0
      %5196 = vmatprep.subr.mxu0 0.0
      %5197 = vmatpush1.xpose.msra.mxu0 0.0
      %5198 = vmatprep.subr.mxu0 0.0
      %5199 = vmatpush1.xpose.msra.mxu0 0.0
      %5200 = vmatprep.subr.mxu0 0.0
      %5201 = vmatpush1.xpose.msra.mxu0 0.0
      %5202 = vmatprep.subr.mxu0 0.0
      %5203 = vmatpush1.xpose.msra.mxu0 0.0
      %5204 = vmatprep.subr.mxu0 0.0
      %5205 = vmatpush1.xpose.msra.mxu0 0.0
      %5206 = vmatprep.subr.mxu0 0.0
      %5207 = vmatpush1.xpose.msra.mxu0 0.0
      %5208 = vmatprep.subr.mxu0 0.0
      %5209 = vmatpush1.xpose.msra.mxu0 0.0
      %5210 = vmatprep.subr.mxu0 %v4749
      %5211 = vmatpush1.xpose.msra.mxu0 %v4748
      %5212 = vmatprep.subr.mxu0 %v4733
      %5213 = vmatpush1.xpose.msra.mxu0 %v4732
      %5214 = vmatprep.subr.mxu0 %v4717
      %5215 = vmatpush1.xpose.msra.mxu0 %v4716
      %5216 = vmatprep.subr.mxu0 0.0
      %5217 = vmatpush2.xpose.msra.mxu0 0.0
      %5218 = vmatprep.subr.mxu0 0.0
      %5219 = vmatpush2.xpose.msra.mxu0 0.0
      %5220 = vmatprep.subr.mxu0 0.0
      %5221 = vmatpush2.xpose.msra.mxu0 0.0
      %5222 = vmatprep.subr.mxu0 0.0
      %5223 = vmatpush2.xpose.msra.mxu0 0.0
      %5224 = vmatprep.subr.mxu0 0.0
      %5225 = vmatpush2.xpose.msra.mxu0 0.0
      %5226 = vmatprep.subr.mxu0 0.0
      %5227 = vmatpush2.xpose.msra.mxu0 0.0
      %5228 = vmatprep.subr.mxu0 0.0
      %5229 = vmatpush2.xpose.msra.mxu0 0.0
      %5230 = vmatprep.subr.mxu0 0.0
      %5231 = vmatpush2.xpose.msra.mxu0 0.0
      %5232 = vmatprep.subr.mxu0 0.0
      %5233 = vmatpush2.xpose.msra.mxu0 0.0
      %5234 = vmatprep.subr.mxu0 0.0
      %5235 = vmatpush2.xpose.msra.mxu0 0.0
      %5236 = vmatprep.subr.mxu0 0.0
      %5237 = vmatpush2.xpose.msra.mxu0 0.0
      %5238 = vmatprep.subr.mxu0 0.0
      %5239 = vmatpush2.xpose.msra.mxu0 0.0
      %5240 = vmatprep.subr.mxu0 0.0
      %5241 = vmatpush2.xpose.msra.mxu0 0.0
      %5242 = vmatprep.subr.mxu0 0.0
      %5243 = vmatpush2.xpose.msra.mxu0 0.0
      %5244 = vmatprep.subr.mxu0 0.0
      %5245 = vmatpush2.xpose.msra.mxu0 0.0
      %5246 = vmatprep.subr.mxu0 0.0
      %5247 = vmatpush2.xpose.msra.mxu0 0.0
      %5248 = vmatprep.mubr.f32.mxu0 %v1197
      %5249 = vmatmul.mubr.f32.gmra.mxu0 %v1196
      %v5250 = vpop.f32.mrf.mxu0
      %v5251 = vadd.f32 %v5146, %v5250
      %v5252 = vpop.f32.mrf.mxu0
      %5253 = vmatprep.mubr.f32.mxu0 %v1213
      %5254 = vmatmul.mubr.f32.gmra.mxu0 %v1212
      %v5255 = vpop.f32.mrf.mxu0
      %v5256 = vadd.f32 %v5151, %v5255
      %v5257 = vpop.f32.mrf.mxu0
      %5258 = vmatprep.mubr.f32.mxu0 %v1229
      %5259 = vmatmul.mubr.f32.gmra.mxu0 %v1228
      %v5260 = vpop.f32.mrf.mxu0
      %v5261 = vadd.f32 %v5156, %v5260
      %v5262 = vpop.f32.mrf.mxu0
      %5263 = vmatprep.mubr.f32.mxu0 %v1245
      %5264 = vmatmul.mubr.f32.gmra.mxu0 %v1244
      %v5265 = vpop.f32.mrf.mxu0
      %v5266 = vadd.f32 %v5161, %v5265
      %v5267 = vpop.f32.mrf.mxu0
      %5268 = vmatprep.mubr.f32.mxu0 %v1261
      %5269 = vmatmul.mubr.f32.gmra.mxu0 %v1260
      %v5270 = vpop.f32.mrf.mxu0
      %v5271 = vadd.f32 %v5166, %v5270
      %v5272 = vpop.f32.mrf.mxu0
      %5273 = vmatprep.mubr.f32.mxu0 %v1277
      %5274 = vmatmul.mubr.f32.gmra.mxu0 %v1276
      %v5275 = vpop.f32.mrf.mxu0
      %v5276 = vadd.f32 %v5171, %v5275
      %v5277 = vpop.f32.mrf.mxu0
      %5278 = vmatprep.mubr.f32.mxu0 %v1293
      %5279 = vmatmul.mubr.f32.gmra.mxu0 %v1292
      %v5280 = vpop.f32.mrf.mxu0
      %v5281 = vadd.f32 %v5176, %v5280
      %v5282 = vpop.f32.mrf.mxu0
      %5283 = vmatprep.mubr.f32.mxu0 %v1309
      %5284 = vmatmul.mubr.f32.gmra.mxu0 %v1308
      %v5285 = vpop.f32.mrf.mxu0
      %v5286 = vadd.f32 %v5181, %v5285
      %v5287 = vpop.f32.mrf.mxu0
      %5288 = vdwg.mxu0
      %5289 = vmatprep.subr.mxu0 0.0
      %5290 = vmatpush1.xpose.msra.mxu0 0.0
      %5291 = vmatprep.subr.mxu0 0.0
      %5292 = vmatpush1.xpose.msra.mxu0 0.0
      %5293 = vmatprep.subr.mxu0 0.0
      %5294 = vmatpush1.xpose.msra.mxu0 0.0
      %5295 = vmatprep.subr.mxu0 0.0
      %5296 = vmatpush1.xpose.msra.mxu0 0.0
      %5297 = vmatprep.subr.mxu0 0.0
      %5298 = vmatpush1.xpose.msra.mxu0 0.0
      %5299 = vmatprep.subr.mxu0 0.0
      %5300 = vmatpush1.xpose.msra.mxu0 0.0
      %5301 = vmatprep.subr.mxu0 0.0
      %5302 = vmatpush1.xpose.msra.mxu0 0.0
      %5303 = vmatprep.subr.mxu0 0.0
      %5304 = vmatpush1.xpose.msra.mxu0 0.0
      %5305 = vmatprep.subr.mxu0 0.0
      %5306 = vmatpush1.xpose.msra.mxu0 0.0
      %5307 = vmatprep.subr.mxu0 0.0
      %5308 = vmatpush1.xpose.msra.mxu0 0.0
      %5309 = vmatprep.subr.mxu0 0.0
      %5310 = vmatpush1.xpose.msra.mxu0 0.0
      %5311 = vmatprep.subr.mxu0 0.0
      %5312 = vmatpush1.xpose.msra.mxu0 0.0
      %5313 = vmatprep.subr.mxu0 0.0
      %5314 = vmatpush1.xpose.msra.mxu0 0.0
      %5315 = vmatprep.subr.mxu0 %v4751
      %5316 = vmatpush1.xpose.msra.mxu0 %v4750
      %5317 = vmatprep.subr.mxu0 %v4735
      %5318 = vmatpush1.xpose.msra.mxu0 %v4734
      %5319 = vmatprep.subr.mxu0 %v4719
      %5320 = vmatpush1.xpose.msra.mxu0 %v4718
      %5321 = vmatprep.subr.mxu0 0.0
      %5322 = vmatpush2.xpose.msra.mxu0 0.0
      %5323 = vmatprep.subr.mxu0 0.0
      %5324 = vmatpush2.xpose.msra.mxu0 0.0
      %5325 = vmatprep.subr.mxu0 0.0
      %5326 = vmatpush2.xpose.msra.mxu0 0.0
      %5327 = vmatprep.subr.mxu0 0.0
      %5328 = vmatpush2.xpose.msra.mxu0 0.0
      %5329 = vmatprep.subr.mxu0 0.0
      %5330 = vmatpush2.xpose.msra.mxu0 0.0
      %5331 = vmatprep.subr.mxu0 0.0
      %5332 = vmatpush2.xpose.msra.mxu0 0.0
      %5333 = vmatprep.subr.mxu0 0.0
      %5334 = vmatpush2.xpose.msra.mxu0 0.0
      %5335 = vmatprep.subr.mxu0 0.0
      %5336 = vmatpush2.xpose.msra.mxu0 0.0
      %5337 = vmatprep.subr.mxu0 0.0
      %5338 = vmatpush2.xpose.msra.mxu0 0.0
      %5339 = vmatprep.subr.mxu0 0.0
      %5340 = vmatpush2.xpose.msra.mxu0 0.0
      %5341 = vmatprep.subr.mxu0 0.0
      %5342 = vmatpush2.xpose.msra.mxu0 0.0
      %5343 = vmatprep.subr.mxu0 0.0
      %5344 = vmatpush2.xpose.msra.mxu0 0.0
      %5345 = vmatprep.subr.mxu0 0.0
      %5346 = vmatpush2.xpose.msra.mxu0 0.0
      %5347 = vmatprep.subr.mxu0 0.0
      %5348 = vmatpush2.xpose.msra.mxu0 0.0
      %5349 = vmatprep.subr.mxu0 0.0
      %5350 = vmatpush2.xpose.msra.mxu0 0.0
      %5351 = vmatprep.subr.mxu0 0.0
      %5352 = vmatpush2.xpose.msra.mxu0 0.0
      %5353 = vmatprep.mubr.f32.mxu0 %v1199
      %5354 = vmatmul.mubr.f32.gmra.mxu0 %v1198
      %v5355 = vpop.f32.mrf.mxu0
      %v5356 = vadd.f32 %v5251, %v5355
      %v5357 = vpop.f32.mrf.mxu0
      %5358 = vmatprep.mubr.f32.mxu0 %v1215
      %5359 = vmatmul.mubr.f32.gmra.mxu0 %v1214
      %v5360 = vpop.f32.mrf.mxu0
      %v5361 = vadd.f32 %v5256, %v5360
      %v5362 = vpop.f32.mrf.mxu0
      %5363 = vmatprep.mubr.f32.mxu0 %v1231
      %5364 = vmatmul.mubr.f32.gmra.mxu0 %v1230
      %v5365 = vpop.f32.mrf.mxu0
      %v5366 = vadd.f32 %v5261, %v5365
      %v5367 = vpop.f32.mrf.mxu0
      %5368 = vmatprep.mubr.f32.mxu0 %v1247
      %5369 = vmatmul.mubr.f32.gmra.mxu0 %v1246
      %v5370 = vpop.f32.mrf.mxu0
      %v5371 = vadd.f32 %v5266, %v5370
      %v5372 = vpop.f32.mrf.mxu0
      %5373 = vmatprep.mubr.f32.mxu0 %v1263
      %5374 = vmatmul.mubr.f32.gmra.mxu0 %v1262
      %v5375 = vpop.f32.mrf.mxu0
      %v5376 = vadd.f32 %v5271, %v5375
      %v5377 = vpop.f32.mrf.mxu0
      %5378 = vmatprep.mubr.f32.mxu0 %v1279
      %5379 = vmatmul.mubr.f32.gmra.mxu0 %v1278
      %v5380 = vpop.f32.mrf.mxu0
      %v5381 = vadd.f32 %v5276, %v5380
      %v5382 = vpop.f32.mrf.mxu0
      %5383 = vmatprep.mubr.f32.mxu0 %v1295
      %5384 = vmatmul.mubr.f32.gmra.mxu0 %v1294
      %v5385 = vpop.f32.mrf.mxu0
      %v5386 = vadd.f32 %v5281, %v5385
      %v5387 = vpop.f32.mrf.mxu0
      %5388 = vmatprep.mubr.f32.mxu0 %v1311
      %5389 = vmatmul.mubr.f32.gmra.mxu0 %v1310
      %v5390 = vpop.f32.mrf.mxu0
      %v5391 = vadd.f32 %v5286, %v5390
      %v5392 = vpop.f32.mrf.mxu0
      %5393 = vdwg.mxu0
      %5394 = vmatprep.subr.mxu0 0.0
      %5395 = vmatpush1.xpose.msra.mxu0 0.0
      %5396 = vmatprep.subr.mxu0 0.0
      %5397 = vmatpush1.xpose.msra.mxu0 0.0
      %5398 = vmatprep.subr.mxu0 0.0
      %5399 = vmatpush1.xpose.msra.mxu0 0.0
      %5400 = vmatprep.subr.mxu0 0.0
      %5401 = vmatpush1.xpose.msra.mxu0 0.0
      %5402 = vmatprep.subr.mxu0 0.0
      %5403 = vmatpush1.xpose.msra.mxu0 0.0
      %5404 = vmatprep.subr.mxu0 0.0
      %5405 = vmatpush1.xpose.msra.mxu0 0.0
      %5406 = vmatprep.subr.mxu0 0.0
      %5407 = vmatpush1.xpose.msra.mxu0 0.0
      %5408 = vmatprep.subr.mxu0 0.0
      %5409 = vmatpush1.xpose.msra.mxu0 0.0
      %5410 = vmatprep.subr.mxu0 0.0
      %5411 = vmatpush1.xpose.msra.mxu0 0.0
      %5412 = vmatprep.subr.mxu0 0.0
      %5413 = vmatpush1.xpose.msra.mxu0 0.0
      %5414 = vmatprep.subr.mxu0 0.0
      %5415 = vmatpush1.xpose.msra.mxu0 0.0
      %5416 = vmatprep.subr.mxu0 0.0
      %5417 = vmatpush1.xpose.msra.mxu0 0.0
      %5418 = vmatprep.subr.mxu0 0.0
      %5419 = vmatpush1.xpose.msra.mxu0 0.0
      %5420 = vmatprep.subr.mxu0 %v4753
      %5421 = vmatpush1.xpose.msra.mxu0 %v4752
      %5422 = vmatprep.subr.mxu0 %v4737
      %5423 = vmatpush1.xpose.msra.mxu0 %v4736
      %5424 = vmatprep.subr.mxu0 %v4721
      %5425 = vmatpush1.xpose.msra.mxu0 %v4720
      %5426 = vmatprep.subr.mxu0 0.0
      %5427 = vmatpush2.xpose.msra.mxu0 0.0
      %5428 = vmatprep.subr.mxu0 0.0
      %5429 = vmatpush2.xpose.msra.mxu0 0.0
      %5430 = vmatprep.subr.mxu0 0.0
      %5431 = vmatpush2.xpose.msra.mxu0 0.0
      %5432 = vmatprep.subr.mxu0 0.0
      %5433 = vmatpush2.xpose.msra.mxu0 0.0
      %5434 = vmatprep.subr.mxu0 0.0
      %5435 = vmatpush2.xpose.msra.mxu0 0.0
      %5436 = vmatprep.subr.mxu0 0.0
      %5437 = vmatpush2.xpose.msra.mxu0 0.0
      %5438 = vmatprep.subr.mxu0 0.0
      %5439 = vmatpush2.xpose.msra.mxu0 0.0
      %5440 = vmatprep.subr.mxu0 0.0
      %5441 = vmatpush2.xpose.msra.mxu0 0.0
      %5442 = vmatprep.subr.mxu0 0.0
      %5443 = vmatpush2.xpose.msra.mxu0 0.0
      %5444 = vmatprep.subr.mxu0 0.0
      %5445 = vmatpush2.xpose.msra.mxu0 0.0
      %5446 = vmatprep.subr.mxu0 0.0
      %5447 = vmatpush2.xpose.msra.mxu0 0.0
      %5448 = vmatprep.subr.mxu0 0.0
      %5449 = vmatpush2.xpose.msra.mxu0 0.0
      %5450 = vmatprep.subr.mxu0 0.0
      %5451 = vmatpush2.xpose.msra.mxu0 0.0
      %5452 = vmatprep.subr.mxu0 0.0
      %5453 = vmatpush2.xpose.msra.mxu0 0.0
      %5454 = vmatprep.subr.mxu0 0.0
      %5455 = vmatpush2.xpose.msra.mxu0 0.0
      %5456 = vmatprep.subr.mxu0 0.0
      %5457 = vmatpush2.xpose.msra.mxu0 0.0
      %5458 = vmatprep.mubr.f32.mxu0 %v1201
      %5459 = vmatmul.mubr.f32.gmra.mxu0 %v1200
      %v5460 = vpop.f32.mrf.mxu0
      %v5461 = vadd.f32 %v5356, %v5460
      %v5462 = vpop.f32.mrf.mxu0
      %5463 = vmatprep.mubr.f32.mxu0 %v1217
      %5464 = vmatmul.mubr.f32.gmra.mxu0 %v1216
      %v5465 = vpop.f32.mrf.mxu0
      %v5466 = vadd.f32 %v5361, %v5465
      %v5467 = vpop.f32.mrf.mxu0
      %5468 = vmatprep.mubr.f32.mxu0 %v1233
      %5469 = vmatmul.mubr.f32.gmra.mxu0 %v1232
      %v5470 = vpop.f32.mrf.mxu0
      %v5471 = vadd.f32 %v5366, %v5470
      %v5472 = vpop.f32.mrf.mxu0
      %5473 = vmatprep.mubr.f32.mxu0 %v1249
      %5474 = vmatmul.mubr.f32.gmra.mxu0 %v1248
      %v5475 = vpop.f32.mrf.mxu0
      %v5476 = vadd.f32 %v5371, %v5475
      %v5477 = vpop.f32.mrf.mxu0
      %5478 = vmatprep.mubr.f32.mxu0 %v1265
      %5479 = vmatmul.mubr.f32.gmra.mxu0 %v1264
      %v5480 = vpop.f32.mrf.mxu0
      %v5481 = vadd.f32 %v5376, %v5480
      %v5482 = vpop.f32.mrf.mxu0
      %5483 = vmatprep.mubr.f32.mxu0 %v1281
      %5484 = vmatmul.mubr.f32.gmra.mxu0 %v1280
      %v5485 = vpop.f32.mrf.mxu0
      %v5486 = vadd.f32 %v5381, %v5485
      %v5487 = vpop.f32.mrf.mxu0
      %5488 = vmatprep.mubr.f32.mxu0 %v1297
      %5489 = vmatmul.mubr.f32.gmra.mxu0 %v1296
      %v5490 = vpop.f32.mrf.mxu0
      %v5491 = vadd.f32 %v5386, %v5490
      %v5492 = vpop.f32.mrf.mxu0
      %5493 = vmatprep.mubr.f32.mxu0 %v1313
      %5494 = vmatmul.mubr.f32.gmra.mxu0 %v1312
      %v5495 = vpop.f32.mrf.mxu0
      %v5496 = vadd.f32 %v5391, %v5495
      %v5497 = vpop.f32.mrf.mxu0
      %5498 = vdwg.mxu0
      %5499 = vmatprep.subr.mxu0 0.0
      %5500 = vmatpush1.xpose.msra.mxu0 0.0
      %5501 = vmatprep.subr.mxu0 0.0
      %5502 = vmatpush1.xpose.msra.mxu0 0.0
      %5503 = vmatprep.subr.mxu0 0.0
      %5504 = vmatpush1.xpose.msra.mxu0 0.0
      %5505 = vmatprep.subr.mxu0 0.0
      %5506 = vmatpush1.xpose.msra.mxu0 0.0
      %5507 = vmatprep.subr.mxu0 0.0
      %5508 = vmatpush1.xpose.msra.mxu0 0.0
      %5509 = vmatprep.subr.mxu0 0.0
      %5510 = vmatpush1.xpose.msra.mxu0 0.0
      %5511 = vmatprep.subr.mxu0 0.0
      %5512 = vmatpush1.xpose.msra.mxu0 0.0
      %5513 = vmatprep.subr.mxu0 0.0
      %5514 = vmatpush1.xpose.msra.mxu0 0.0
      %5515 = vmatprep.subr.mxu0 0.0
      %5516 = vmatpush1.xpose.msra.mxu0 0.0
      %5517 = vmatprep.subr.mxu0 0.0
      %5518 = vmatpush1.xpose.msra.mxu0 0.0
      %5519 = vmatprep.subr.mxu0 0.0
      %5520 = vmatpush1.xpose.msra.mxu0 0.0
      %5521 = vmatprep.subr.mxu0 0.0
      %5522 = vmatpush1.xpose.msra.mxu0 0.0
      %5523 = vmatprep.subr.mxu0 0.0
      %5524 = vmatpush1.xpose.msra.mxu0 0.0
      %5525 = vmatprep.subr.mxu0 %v4755
      %5526 = vmatpush1.xpose.msra.mxu0 %v4754
      %5527 = vmatprep.subr.mxu0 %v4739
      %5528 = vmatpush1.xpose.msra.mxu0 %v4738
      %5529 = vmatprep.subr.mxu0 %v4723
      %5530 = vmatpush1.xpose.msra.mxu0 %v4722
      %5531 = vmatprep.subr.mxu0 0.0
      %5532 = vmatpush2.xpose.msra.mxu0 0.0
      %5533 = vmatprep.subr.mxu0 0.0
      %5534 = vmatpush2.xpose.msra.mxu0 0.0
      %5535 = vmatprep.subr.mxu0 0.0
      %5536 = vmatpush2.xpose.msra.mxu0 0.0
      %5537 = vmatprep.subr.mxu0 0.0
      %5538 = vmatpush2.xpose.msra.mxu0 0.0
      %5539 = vmatprep.subr.mxu0 0.0
      %5540 = vmatpush2.xpose.msra.mxu0 0.0
      %5541 = vmatprep.subr.mxu0 0.0
      %5542 = vmatpush2.xpose.msra.mxu0 0.0
      %5543 = vmatprep.subr.mxu0 0.0
      %5544 = vmatpush2.xpose.msra.mxu0 0.0
      %5545 = vmatprep.subr.mxu0 0.0
      %5546 = vmatpush2.xpose.msra.mxu0 0.0
      %5547 = vmatprep.subr.mxu0 0.0
      %5548 = vmatpush2.xpose.msra.mxu0 0.0
      %5549 = vmatprep.subr.mxu0 0.0
      %5550 = vmatpush2.xpose.msra.mxu0 0.0
      %5551 = vmatprep.subr.mxu0 0.0
      %5552 = vmatpush2.xpose.msra.mxu0 0.0
      %5553 = vmatprep.subr.mxu0 0.0
      %5554 = vmatpush2.xpose.msra.mxu0 0.0
      %5555 = vmatprep.subr.mxu0 0.0
      %5556 = vmatpush2.xpose.msra.mxu0 0.0
      %5557 = vmatprep.subr.mxu0 0.0
      %5558 = vmatpush2.xpose.msra.mxu0 0.0
      %5559 = vmatprep.subr.mxu0 0.0
      %5560 = vmatpush2.xpose.msra.mxu0 0.0
      %5561 = vmatprep.subr.mxu0 0.0
      %5562 = vmatpush2.xpose.msra.mxu0 0.0
      %5563 = vmatprep.mubr.f32.mxu0 %v1203
      %5564 = vmatmul.mubr.f32.gmra.mxu0 %v1202
      %v5565 = vpop.f32.mrf.mxu0
      %v5566 = vadd.f32 %v5461, %v5565
      %v5567 = vpop.f32.mrf.mxu0
      %5568 = vmatprep.mubr.f32.mxu0 %v1219
      %5569 = vmatmul.mubr.f32.gmra.mxu0 %v1218
      %v5570 = vpop.f32.mrf.mxu0
      %v5571 = vadd.f32 %v5466, %v5570
      %v5572 = vpop.f32.mrf.mxu0
      %5573 = vmatprep.mubr.f32.mxu0 %v1235
      %5574 = vmatmul.mubr.f32.gmra.mxu0 %v1234
      %v5575 = vpop.f32.mrf.mxu0
      %v5576 = vadd.f32 %v5471, %v5575
      %v5577 = vpop.f32.mrf.mxu0
      %5578 = vmatprep.mubr.f32.mxu0 %v1251
      %5579 = vmatmul.mubr.f32.gmra.mxu0 %v1250
      %v5580 = vpop.f32.mrf.mxu0
      %v5581 = vadd.f32 %v5476, %v5580
      %v5582 = vpop.f32.mrf.mxu0
      %5583 = vmatprep.mubr.f32.mxu0 %v1267
      %5584 = vmatmul.mubr.f32.gmra.mxu0 %v1266
      %v5585 = vpop.f32.mrf.mxu0
      %v5586 = vadd.f32 %v5481, %v5585
      %v5587 = vpop.f32.mrf.mxu0
      %5588 = vmatprep.mubr.f32.mxu0 %v1283
      %5589 = vmatmul.mubr.f32.gmra.mxu0 %v1282
      %v5590 = vpop.f32.mrf.mxu0
      %v5591 = vadd.f32 %v5486, %v5590
      %v5592 = vpop.f32.mrf.mxu0
      %5593 = vmatprep.mubr.f32.mxu0 %v1299
      %5594 = vmatmul.mubr.f32.gmra.mxu0 %v1298
      %v5595 = vpop.f32.mrf.mxu0
      %v5596 = vadd.f32 %v5491, %v5595
      %v5597 = vpop.f32.mrf.mxu0
      %5598 = vmatprep.mubr.f32.mxu0 %v1315
      %5599 = vmatmul.mubr.f32.gmra.mxu0 %v1314
      %v5600 = vpop.f32.mrf.mxu0
      %v5601 = vadd.f32 %v5496, %v5600
      %v5602 = vpop.f32.mrf.mxu0
      %5603 = vdwg.mxu0
      %v5604 = vadd.f32 %v4756, %v5566
      %v5605 = vadd.f32 %v4757, %v5571
      %v5606 = vadd.f32 %v4758, %v5576
      %v5607 = vadd.f32 %v4759, %v5581
      %v5608 = vadd.f32 %v4760, %v5586
      %v5609 = vadd.f32 %v4761, %v5591
      %v5610 = vadd.f32 %v4762, %v5596
      %v5611 = vadd.f32 %v4763, %v5601
      %vm5612 = vcmask 138240
      %5613 = vst.msk [vmem:[#allocation2] sm:$0xff] %vm5612, %v5604
      %5614 = vst.msk [vmem:[#allocation2 + $0x8] sm:$0xff] %vm5612, %v5605
      %5615 = vst.msk [vmem:[#allocation2 + $0x10] sm:$0xff] %vm5612, %v5606
      %5616 = vst.msk [vmem:[#allocation2 + $0x18] sm:$0xff] %vm5612, %v5607
      %5617 = vst.msk [vmem:[#allocation2 + $0x20] sm:$0xff] %vm5612, %v5608
      %5618 = vst.msk [vmem:[#allocation2 + $0x28] sm:$0xff] %vm5612, %v5609
      %5619 = vst.msk [vmem:[#allocation2 + $0x30] sm:$0xff] %vm5612, %v5610
      %5620 = vst.msk [vmem:[#allocation2 + $0x38] sm:$0xff] %vm5612, %v5611
      %p5621 = scmp.eq.s32.totalorder %s21, 1
      // Predicated region
      $region65: #{_lambda_.1} parent=59 // pred_check
        %p5622 = pneg %p5621
      $region66: #{_lambda_.1} parent=59 // pred_check_branch
        %5624 = sbr.rel (%p5622) target = $region68
      $region67: #{_lambda_.1} parent=59 // pred_region
        %v5625 = vld [vmem:[#allocation2] sm:$0xff]
        %v5626 = vld [vmem:[#allocation2 + $0x8] sm:$0xff]
        %v5627 = vld [vmem:[#allocation2 + $0x10] sm:$0xff]
        %v5628 = vld [vmem:[#allocation2 + $0x18] sm:$0xff]
        %v5629 = vld [vmem:[#allocation2 + $0x20] sm:$0xff]
        %v5630 = vld [vmem:[#allocation2 + $0x28] sm:$0xff]
        %v5631 = vld [vmem:[#allocation2 + $0x30] sm:$0xff]
        %v5632 = vld [vmem:[#allocation2 + $0x38] sm:$0xff]
        %v5633 = vmax.f32 %v5625, 1.0
        %v5634 = vmax.f32 %v5626, 1.0
        %v5635 = vmax.f32 %v5627, 1.0
        %v5636 = vmax.f32 %v5628, 1.0
        %v5637 = vmax.f32 %v5629, 1.0
        %v5638 = vmax.f32 %v5630, 1.0
        %v5639 = vmax.f32 %v5631, 1.0
        %v5640 = vmax.f32 %v5632, 1.0
        %5642 = vset.pattern.permute.xlu0 16
        %5643 = vperm.xlu0 %5642, %v5633
        %v5644 = vpop.permute.xlu0 %5643
        %5647 = vset.pattern.permute.xlu0 16
        %5648 = vperm.xlu0 %5647, %v5634
        %v5649 = vpop.permute.xlu0 %5648
        %5652 = vset.pattern.permute.xlu0 16
        %5653 = vperm.xlu0 %5652, %v5635
        %v5654 = vpop.permute.xlu0 %5653
        %5657 = vset.pattern.permute.xlu0 16
        %5658 = vperm.xlu0 %5657, %v5636
        %v5659 = vpop.permute.xlu0 %5658
        %5662 = vset.pattern.permute.xlu0 16
        %5663 = vperm.xlu0 %5662, %v5637
        %v5664 = vpop.permute.xlu0 %5663
        %5667 = vset.pattern.permute.xlu0 16
        %5668 = vperm.xlu0 %5667, %v5638
        %v5669 = vpop.permute.xlu0 %5668
        %5672 = vset.pattern.permute.xlu0 16
        %5673 = vperm.xlu0 %5672, %v5639
        %v5674 = vpop.permute.xlu0 %5673
        %5677 = vset.pattern.permute.xlu0 16
        %5678 = vperm.xlu0 %5677, %v5640
        %v5679 = vpop.permute.xlu0 %5678
        %v5681 = vrcp.pop %v5644
        %v5682 = vmul.f32 %v5625, %v5681
        %v5683 = vrcp.pop %v5649
        %v5684 = vmul.f32 %v5626, %v5683
        %v5685 = vrcp.pop %v5654
        %v5686 = vmul.f32 %v5627, %v5685
        %v5687 = vrcp.pop %v5659
        %v5688 = vmul.f32 %v5628, %v5687
        %v5689 = vrcp.pop %v5664
        %v5690 = vmul.f32 %v5629, %v5689
        %v5691 = vrcp.pop %v5669
        %v5692 = vmul.f32 %v5630, %v5691
        %v5693 = vrcp.pop %v5674
        %v5694 = vmul.f32 %v5631, %v5693
        %v5695 = vrcp.pop %v5679
        %v5696 = vmul.f32 %v5632, %v5695
        %v5697 = vld [vmem:[%s6] sm:$0xff]
        %v5698 = vld [vmem:[%s6 + $0x8] sm:$0xff]
        %v5699 = vld [vmem:[%s6 + $0x10] sm:$0xff]
        %v5700 = vld [vmem:[%s6 + $0x18] sm:$0xff]
        %v5701 = vld [vmem:[%s6 + $0x20] sm:$0xff]
        %v5702 = vld [vmem:[%s6 + $0x28] sm:$0xff]
        %v5703 = vld [vmem:[%s6 + $0x30] sm:$0xff]
        %v5704 = vld [vmem:[%s6 + $0x38] sm:$0xff]
        %v5705 = vld [vmem:[%s7] sm:$0xff]
        %v5706 = vld [vmem:[%s7 + $0x8] sm:$0xff]
        %vm5707 = vcmask 130048
        %v5709 = vsel %vm5707, %v5682, 0
        %v5712 = vsel %vm5707, %v5684, 0
        %v5715 = vsel %vm5707, %v5686, 0
        %v5718 = vsel %vm5707, %v5688, 0
        %v5721 = vsel %vm5707, %v5690, 0
        %v5724 = vsel %vm5707, %v5692, 0
        %v5727 = vsel %vm5707, %v5694, 0
        %v5730 = vsel %vm5707, %v5696, 0
        %5732 = vmatprep.subr.mxu0 0.0
        %5733 = vmatpush1.msra.mxu0 0.0
        %5734 = vmatprep.subr.mxu0 0.0
        %5735 = vmatpush1.msra.mxu0 0.0
        %5736 = vmatprep.subr.mxu0 0.0
        %5737 = vmatpush1.msra.mxu0 0.0
        %5738 = vmatprep.subr.mxu0 0.0
        %5739 = vmatpush1.msra.mxu0 0.0
        %5740 = vmatprep.subr.mxu0 0.0
        %5741 = vmatpush1.msra.mxu0 0.0
        %5742 = vmatprep.subr.mxu0 0.0
        %5743 = vmatpush1.msra.mxu0 0.0
        %5744 = vmatprep.subr.mxu0 0.0
        %5745 = vmatpush1.msra.mxu0 0.0
        %5746 = vmatprep.subr.mxu0 0.0
        %5747 = vmatpush1.msra.mxu0 0.0
        %5748 = vmatprep.subr.mxu0 0.0
        %5749 = vmatpush1.msra.mxu0 0.0
        %5750 = vmatprep.subr.mxu0 0.0
        %5751 = vmatpush1.msra.mxu0 0.0
        %5752 = vmatprep.subr.mxu0 0.0
        %5753 = vmatpush1.msra.mxu0 0.0
        %5754 = vmatprep.subr.mxu0 0.0
        %5755 = vmatpush1.msra.mxu0 0.0
        %5756 = vmatprep.subr.mxu0 0.0
        %5757 = vmatpush1.msra.mxu0 0.0
        %5758 = vmatprep.subr.mxu0 0.0
        %5759 = vmatpush1.msra.mxu0 0.0
        %5760 = vmatprep.subr.mxu0 0.0
        %5761 = vmatpush1.msra.mxu0 %v5706
        %5762 = vmatprep.subr.mxu0 0.0
        %5763 = vmatpush1.msra.mxu0 %v5705
        %5764 = vmatprep.subr.mxu0 0.0
        %5765 = vmatpush2.msra.mxu0 0.0
        %5766 = vmatprep.subr.mxu0 0.0
        %5767 = vmatpush2.msra.mxu0 0.0
        %5768 = vmatprep.subr.mxu0 0.0
        %5769 = vmatpush2.msra.mxu0 0.0
        %5770 = vmatprep.subr.mxu0 0.0
        %5771 = vmatpush2.msra.mxu0 0.0
        %5772 = vmatprep.subr.mxu0 0.0
        %5773 = vmatpush2.msra.mxu0 0.0
        %5774 = vmatprep.subr.mxu0 0.0
        %5775 = vmatpush2.msra.mxu0 0.0
        %5776 = vmatprep.subr.mxu0 0.0
        %5777 = vmatpush2.msra.mxu0 0.0
        %5778 = vmatprep.subr.mxu0 0.0
        %5779 = vmatpush2.msra.mxu0 0.0
        %5780 = vmatprep.subr.mxu0 0.0
        %5781 = vmatpush2.msra.mxu0 0.0
        %5782 = vmatprep.subr.mxu0 0.0
        %5783 = vmatpush2.msra.mxu0 0.0
        %5784 = vmatprep.subr.mxu0 0.0
        %5785 = vmatpush2.msra.mxu0 0.0
        %5786 = vmatprep.subr.mxu0 0.0
        %5787 = vmatpush2.msra.mxu0 0.0
        %5788 = vmatprep.subr.mxu0 0.0
        %5789 = vmatpush2.msra.mxu0 0.0
        %5790 = vmatprep.subr.mxu0 0.0
        %5791 = vmatpush2.msra.mxu0 0.0
        %5792 = vmatprep.subr.mxu0 0.0
        %5793 = vmatpush2.msra.mxu0 0.0
        %5794 = vmatprep.subr.mxu0 0.0
        %5795 = vmatpush2.msra.mxu0 0.0
        %5796 = vmatprep.mubr.f32.mxu0 0.0
        %5797 = vmatmul.mubr.f32.gmra.mxu0 %v5709
        %v5798 = vpop.f32.mrf.mxu0
        %v5799 = vadd.f32 0.0, %v5798
        %v5800 = vpop.f32.mrf.mxu0
        %5801 = vmatprep.mubr.f32.mxu0 0.0
        %5802 = vmatmul.mubr.f32.gmra.mxu0 %v5712
        %v5803 = vpop.f32.mrf.mxu0
        %v5804 = vadd.f32 0.0, %v5803
        %v5805 = vpop.f32.mrf.mxu0
        %5806 = vmatprep.mubr.f32.mxu0 0.0
        %5807 = vmatmul.mubr.f32.gmra.mxu0 %v5715
        %v5808 = vpop.f32.mrf.mxu0
        %v5809 = vadd.f32 0.0, %v5808
        %v5810 = vpop.f32.mrf.mxu0
        %5811 = vmatprep.mubr.f32.mxu0 0.0
        %5812 = vmatmul.mubr.f32.gmra.mxu0 %v5718
        %v5813 = vpop.f32.mrf.mxu0
        %v5814 = vadd.f32 0.0, %v5813
        %v5815 = vpop.f32.mrf.mxu0
        %5816 = vmatprep.mubr.f32.mxu0 0.0
        %5817 = vmatmul.mubr.f32.gmra.mxu0 %v5721
        %v5818 = vpop.f32.mrf.mxu0
        %v5819 = vadd.f32 0.0, %v5818
        %v5820 = vpop.f32.mrf.mxu0
        %5821 = vmatprep.mubr.f32.mxu0 0.0
        %5822 = vmatmul.mubr.f32.gmra.mxu0 %v5724
        %v5823 = vpop.f32.mrf.mxu0
        %v5824 = vadd.f32 0.0, %v5823
        %v5825 = vpop.f32.mrf.mxu0
        %5826 = vmatprep.mubr.f32.mxu0 0.0
        %5827 = vmatmul.mubr.f32.gmra.mxu0 %v5727
        %v5828 = vpop.f32.mrf.mxu0
        %v5829 = vadd.f32 0.0, %v5828
        %v5830 = vpop.f32.mrf.mxu0
        %5831 = vmatprep.mubr.f32.mxu0 0.0
        %5832 = vmatmul.mubr.f32.gmra.mxu0 %v5730
        %v5833 = vpop.f32.mrf.mxu0
        %v5834 = vadd.f32 0.0, %v5833
        %v5835 = vpop.f32.mrf.mxu0
        %5836 = vdwg.mxu0
        %v5837 = vadd.f32 %v5697, %v5799
        %v5838 = vadd.f32 %v5698, %v5804
        %v5839 = vadd.f32 %v5699, %v5809
        %v5840 = vadd.f32 %v5700, %v5814
        %v5841 = vadd.f32 %v5701, %v5819
        %v5842 = vadd.f32 %v5702, %v5824
        %v5843 = vadd.f32 %v5703, %v5829
        %v5844 = vadd.f32 %v5704, %v5834
        %v5845 = vmax.f32 %v5837, 0.0
        %v5846 = vmax.f32 %v5838, 0.0
        %v5847 = vmax.f32 %v5839, 0.0
        %v5848 = vmax.f32 %v5840, 0.0
        %v5849 = vmax.f32 %v5841, 0.0
        %v5850 = vmax.f32 %v5842, 0.0
        %v5851 = vmax.f32 %v5843, 0.0
        %v5852 = vmax.f32 %v5844, 0.0
        %v5853 = vld [vmem:[%s8] sm:$0xff]
        %v5854 = vld [vmem:[%s8 + $0x8] sm:$0xff]
        %v5855 = vld [vmem:[%s8 + $0x10] sm:$0xff]
        %v5856 = vld [vmem:[%s8 + $0x18] sm:$0xff]
        %v5857 = vld [vmem:[%s9] sm:$0x1]
        %v5859 = vlaneseq
        %v5860 = vshrl.u32 %v5859, 7
        %v5861 = vsub.s32 0, %v5860
        %v5862 = vrot.slane %v5857, %v5861
        %vm5864 = vcmask 261120
        %v5866 = vsel %vm5864, %v5845, 0
        %v5869 = vsel %vm5864, %v5846, 0
        %v5872 = vsel %vm5864, %v5847, 0
        %v5875 = vsel %vm5864, %v5848, 0
        %v5878 = vsel %vm5864, %v5849, 0
        %v5881 = vsel %vm5864, %v5850, 0
        %v5884 = vsel %vm5864, %v5851, 0
        %v5887 = vsel %vm5864, %v5852, 0
        %5889 = vmatprep.subr.mxu0 0.0
        %5890 = vmatpush1.msra.mxu0 0.0
        %5891 = vmatprep.subr.mxu0 0.0
        %5892 = vmatpush1.msra.mxu0 0.0
        %5893 = vmatprep.subr.mxu0 0.0
        %5894 = vmatpush1.msra.mxu0 0.0
        %5895 = vmatprep.subr.mxu0 0.0
        %5896 = vmatpush1.msra.mxu0 0.0
        %5897 = vmatprep.subr.mxu0 0.0
        %5898 = vmatpush1.msra.mxu0 0.0
        %5899 = vmatprep.subr.mxu0 0.0
        %5900 = vmatpush1.msra.mxu0 0.0
        %5901 = vmatprep.subr.mxu0 0.0
        %5902 = vmatpush1.msra.mxu0 0.0
        %5903 = vmatprep.subr.mxu0 0.0
        %5904 = vmatpush1.msra.mxu0 0.0
        %5905 = vmatprep.subr.mxu0 0.0
        %5906 = vmatpush1.msra.mxu0 0.0
        %5907 = vmatprep.subr.mxu0 0.0
        %5908 = vmatpush1.msra.mxu0 0.0
        %5909 = vmatprep.subr.mxu0 0.0
        %5910 = vmatpush1.msra.mxu0 0.0
        %5911 = vmatprep.subr.mxu0 0.0
        %5912 = vmatpush1.msra.mxu0 0.0
        %5913 = vmatprep.subr.mxu0 0.0
        %5914 = vmatpush1.msra.mxu0 %v5856
        %5915 = vmatprep.subr.mxu0 0.0
        %5916 = vmatpush1.msra.mxu0 %v5855
        %5917 = vmatprep.subr.mxu0 0.0
        %5918 = vmatpush1.msra.mxu0 %v5854
        %5919 = vmatprep.subr.mxu0 0.0
        %5920 = vmatpush1.msra.mxu0 %v5853
        %5921 = vmatprep.subr.mxu0 0.0
        %5922 = vmatpush2.msra.mxu0 0.0
        %5923 = vmatprep.subr.mxu0 0.0
        %5924 = vmatpush2.msra.mxu0 0.0
        %5925 = vmatprep.subr.mxu0 0.0
        %5926 = vmatpush2.msra.mxu0 0.0
        %5927 = vmatprep.subr.mxu0 0.0
        %5928 = vmatpush2.msra.mxu0 0.0
        %5929 = vmatprep.subr.mxu0 0.0
        %5930 = vmatpush2.msra.mxu0 0.0
        %5931 = vmatprep.subr.mxu0 0.0
        %5932 = vmatpush2.msra.mxu0 0.0
        %5933 = vmatprep.subr.mxu0 0.0
        %5934 = vmatpush2.msra.mxu0 0.0
        %5935 = vmatprep.subr.mxu0 0.0
        %5936 = vmatpush2.msra.mxu0 0.0
        %5937 = vmatprep.subr.mxu0 0.0
        %5938 = vmatpush2.msra.mxu0 0.0
        %5939 = vmatprep.subr.mxu0 0.0
        %5940 = vmatpush2.msra.mxu0 0.0
        %5941 = vmatprep.subr.mxu0 0.0
        %5942 = vmatpush2.msra.mxu0 0.0
        %5943 = vmatprep.subr.mxu0 0.0
        %5944 = vmatpush2.msra.mxu0 0.0
        %5945 = vmatprep.subr.mxu0 0.0
        %5946 = vmatpush2.msra.mxu0 0.0
        %5947 = vmatprep.subr.mxu0 0.0
        %5948 = vmatpush2.msra.mxu0 0.0
        %5949 = vmatprep.subr.mxu0 0.0
        %5950 = vmatpush2.msra.mxu0 0.0
        %5951 = vmatprep.subr.mxu0 0.0
        %5952 = vmatpush2.msra.mxu0 0.0
        %5953 = vmatprep.mubr.f32.mxu0 0.0
        %5954 = vmatmul.mubr.f32.gmra.mxu0 %v5866
        %v5955 = vpop.f32.mrf.mxu0
        %v5956 = vadd.f32 %v5862, %v5955
        %v5957 = vpop.f32.mrf.mxu0
        %5958 = vmatprep.mubr.f32.mxu0 0.0
        %5959 = vmatmul.mubr.f32.gmra.mxu0 %v5869
        %v5960 = vpop.f32.mrf.mxu0
        %v5961 = vadd.f32 %v5862, %v5960
        %v5962 = vpop.f32.mrf.mxu0
        %5963 = vmatprep.mubr.f32.mxu0 0.0
        %5964 = vmatmul.mubr.f32.gmra.mxu0 %v5872
        %v5965 = vpop.f32.mrf.mxu0
        %v5966 = vadd.f32 %v5862, %v5965
        %v5967 = vpop.f32.mrf.mxu0
        %5968 = vmatprep.mubr.f32.mxu0 0.0
        %5969 = vmatmul.mubr.f32.gmra.mxu0 %v5875
        %v5970 = vpop.f32.mrf.mxu0
        %v5971 = vadd.f32 %v5862, %v5970
        %v5972 = vpop.f32.mrf.mxu0
        %5973 = vmatprep.mubr.f32.mxu0 0.0
        %5974 = vmatmul.mubr.f32.gmra.mxu0 %v5878
        %v5975 = vpop.f32.mrf.mxu0
        %v5976 = vadd.f32 %v5862, %v5975
        %v5977 = vpop.f32.mrf.mxu0
        %5978 = vmatprep.mubr.f32.mxu0 0.0
        %5979 = vmatmul.mubr.f32.gmra.mxu0 %v5881
        %v5980 = vpop.f32.mrf.mxu0
        %v5981 = vadd.f32 %v5862, %v5980
        %v5982 = vpop.f32.mrf.mxu0
        %5983 = vmatprep.mubr.f32.mxu0 0.0
        %5984 = vmatmul.mubr.f32.gmra.mxu0 %v5884
        %v5985 = vpop.f32.mrf.mxu0
        %v5986 = vadd.f32 %v5862, %v5985
        %v5987 = vpop.f32.mrf.mxu0
        %5988 = vmatprep.mubr.f32.mxu0 0.0
        %5989 = vmatmul.mubr.f32.gmra.mxu0 %v5887
        %v5990 = vpop.f32.mrf.mxu0
        %v5991 = vadd.f32 %v5862, %v5990
        %v5992 = vpop.f32.mrf.mxu0
        %5993 = vdwg.mxu0
        %5994 = vst.msk [vmem:[%s10] sm:$0xff] %vm1582, %v5956
        %5995 = vst.msk [vmem:[%s10 + $0x8] sm:$0xff] %vm1582, %v5961
        %5996 = vst.msk [vmem:[%s10 + $0x10] sm:$0xff] %vm1582, %v5966
        %5997 = vst.msk [vmem:[%s10 + $0x18] sm:$0xff] %vm1582, %v5971
        %5998 = vst.msk [vmem:[%s10 + $0x20] sm:$0xff] %vm1582, %v5976
        %5999 = vst.msk [vmem:[%s10 + $0x28] sm:$0xff] %vm1582, %v5981
        %6000 = vst.msk [vmem:[%s10 + $0x30] sm:$0xff] %vm1582, %v5986
        %6001 = vst.msk [vmem:[%s10 + $0x38] sm:$0xff] %vm1582, %v5991
      $region68: #{_lambda_.1} parent=59 // pred_fallthru
        _
      // Predicated region
      $region69: #{_lambda_.1} parent=59 // pred_check
        %p6002 = pneg %p259
      $region70: #{_lambda_.1} parent=59 // pred_check_branch
        %6004 = sbr.rel (%p6002) target = $region72
      $region71: #{_lambda_.1} parent=59 // pred_region
        _
      $region72: #{_lambda_.1} parent=59 // pred_fallthru
        _
      // Predicated region
      $region73: #{_lambda_.1} parent=59 // pred_check
        %p6005 = pneg %p259
      $region74: #{_lambda_.1} parent=59 // pred_check_branch
        %6007 = sbr.rel (%p6005) target = $region76
      $region75: #{_lambda_.1} parent=59 // pred_region
        _
      $region76: #{_lambda_.1} parent=59 // pred_fallthru
        _
    $region60: #{_lambda_.1} parent=5 // pred_fallthru
      _
    %p6008 = scmp.le.s32.totalorder 2, %s16
    // Predicated region
    $region77: #{_lambda_.1} parent=5 // pred_check
      %p6009 = pneg %p6008
    $region78: #{_lambda_.1} parent=5 // pred_check_branch
      %6011 = sbr.rel (%p6009) target = $region80
    $region79: #{_lambda_.1} parent=5 // pred_region
      %s6012 = ssub.s32 %s16, 2
    $region80: #{_lambda_.1} parent=5 // pred_fallthru
      _
  $region6: #{_lambda_.1} parent=0 // loop_footer
    %s20 = sadd.s32 1, %s16
  $region7: #{_lambda_.1} parent=0 // loop_footer_branch
    %15 = sbr.rel target = $region3
  $region8: #{_lambda_.1} parent=0 // loop_exit
    _

</llo_original>
